<compile_context>
chip_gen: v6e
topology: v6e:2x2x1
jax: 0.10.0
libtpu: 0.0.40
codegen_flags: <defaults>
</compile_context>

<pallas_src>
import functools

import jax
import jax.numpy as jnp
from jax.experimental import pallas as pl
from jax.experimental.pallas import tpu as pltpu


# ----------------------------------------------------------------------------
# Helpers
# ----------------------------------------------------------------------------
def _round_up(x, m):
    return (x + m - 1) // m * m


def _choose_tile(m, cap=1024):
    """Pick a lane tile and padded extent for the pixel axis."""
    if m <= cap:
        mp = _round_up(m, 128)
        return mp, mp
    mp = _round_up(m, cap)
    return cap, mp


# ----------------------------------------------------------------------------
# Generic fused matmul kernel (conv-as-matmul with epilogues)
# ----------------------------------------------------------------------------
def _mm_kernel(w_ref, x_ref, b_ref, *rest, act, has_pre, has_add, has_mul):
    """Y = act(W @ (X [+pre]) + b) [+ add] [* mul].

    W:(N,K) bf16   X,pre:(K,T) bf16   b:(N,1) f32   add,mul,Y:(N,T) f32
    Channels on sublanes, pixels on lanes -> lane-dense stores.
    """
    o_ref = rest[-1]
    extra = list(rest[:-1])

    xv = x_ref[...]
    if has_pre:
        xv = xv + extra.pop(0)[...]
    acc = jnp.dot(w_ref[...], xv, preferred_element_type=jnp.float32)
    acc = acc + b_ref[...]
    if act == "relu":
        acc = jnp.maximum(acc, 0.0)
    elif act == "sigmoid":
        acc = jax.nn.sigmoid(acc)
    if has_add:
        acc = acc + extra.pop(0)[...]
    if has_mul:
        acc = acc * extra.pop(0)[...]
    o_ref[...] = acc


def matmul_t(w, x, b, act=None, pre=None, post_add=None, post_mul=None, cap=1024):
    """Transposed-layout matmul with fused epilogues, tiled over the pixel axis.

    w: (N, K), x: (K, M) -> out: (N, M) f32.  pre: (K, M); post_*: (N, M).
    """
    N, K = w.shape
    _, M = x.shape
    tile, Mp = _choose_tile(M, cap)

    def pad_m(a):
        return a if Mp == M else jnp.pad(a, ((0, 0), (0, Mp - M)))

    args = [w.astype(jnp.bfloat16), pad_m(x).astype(jnp.bfloat16),
            b.reshape(N, 1).astype(jnp.float32)]
    in_specs = [
        pl.BlockSpec((N, K), lambda i: (0, 0)),
        pl.BlockSpec((K, tile), lambda i: (0, i)),
        pl.BlockSpec((N, 1), lambda i: (0, 0)),
    ]
    has_pre = pre is not None
    if has_pre:
        args.append(pad_m(pre).astype(jnp.bfloat16))
        in_specs.append(pl.BlockSpec((K, tile), lambda i: (0, i)))
    has_add = post_add is not None
    if has_add:
        args.append(pad_m(post_add).astype(jnp.float32))
        in_specs.append(pl.BlockSpec((N, tile), lambda i: (0, i)))
    has_mul = post_mul is not None
    if has_mul:
        args.append(pad_m(post_mul).astype(jnp.float32))
        in_specs.append(pl.BlockSpec((N, tile), lambda i: (0, i)))

    out = pl.pallas_call(
        functools.partial(_mm_kernel, act=act, has_pre=has_pre,
                          has_add=has_add, has_mul=has_mul),
        out_shape=jax.ShapeDtypeStruct((N, Mp), jnp.float32),
        grid=(Mp // tile,),
        in_specs=in_specs,
        out_specs=pl.BlockSpec((N, tile), lambda i: (0, i)),
        compiler_params=pltpu.CompilerParams(dimension_semantics=("parallel",)),
    )(*args)
    return out if Mp == M else out[:, :M]


# ----------------------------------------------------------------------------
# ESA head: conv1 (1x1) + conv_f (1x1) fused in one two-output kernel
# ----------------------------------------------------------------------------
def _esa_head_kernel(x_ref, w1_ref, b1_ref, wf_ref, bf_ref, c1_ref, cf_ref):
    c1 = jnp.dot(w1_ref[...], x_ref[...],
                 preferred_element_type=jnp.float32) + b1_ref[...]
    c1_ref[...] = c1
    cf_ref[...] = jnp.dot(wf_ref[...], c1.astype(jnp.bfloat16),
                          preferred_element_type=jnp.float32) + bf_ref[...]


def esa_head(xc, w1, b1, wf, bf, cap=1024):
    """c1_ = conv1(x); cf = conv_f(c1_) — both 1x1, one kernel, two outputs."""
    C, B, H, W = xc.shape
    f = w1.shape[0]
    M = B * H * W
    tile, Mp = _choose_tile(M, cap)
    x2d = xc.reshape(C, M)
    xp = x2d if Mp == M else jnp.pad(x2d, ((0, 0), (0, Mp - M)))
    c1, cf = pl.pallas_call(
        _esa_head_kernel,
        out_shape=(jax.ShapeDtypeStruct((f, Mp), jnp.float32),
                   jax.ShapeDtypeStruct((f, Mp), jnp.float32)),
        grid=(Mp // tile,),
        in_specs=[
            pl.BlockSpec((C, tile), lambda i: (0, i)),
            pl.BlockSpec((f, C), lambda i: (0, 0)),
            pl.BlockSpec((f, 1), lambda i: (0, 0)),
            pl.BlockSpec((f, f), lambda i: (0, 0)),
            pl.BlockSpec((f, 1), lambda i: (0, 0)),
        ],
        out_specs=(pl.BlockSpec((f, tile), lambda i: (0, i)),
                   pl.BlockSpec((f, tile), lambda i: (0, i))),
        compiler_params=pltpu.CompilerParams(dimension_semantics=("parallel",)),
    )(xp.astype(jnp.bfloat16),
      w1.reshape(f, C).astype(jnp.bfloat16), b1.reshape(f, 1).astype(jnp.float32),
      wf.reshape(f, f).astype(jnp.bfloat16), bf.reshape(f, 1).astype(jnp.float32))
    if Mp != M:
        c1, cf = c1[:, :M], cf[:, :M]
    return c1.reshape(f, B, H, W), cf.reshape(f, B, H, W)


# ----------------------------------------------------------------------------
# Concat-free fusion conv: Y = Wa @ Xa + Wb @ Xb + b + add
# ----------------------------------------------------------------------------
def _fusion_kernel(wa_ref, xa_ref, wb_ref, xb_ref, b_ref, add_ref, o_ref):
    acc = jnp.dot(wa_ref[...], xa_ref[...], preferred_element_type=jnp.float32)
    acc = acc + jnp.dot(wb_ref[...], xb_ref[...], preferred_element_type=jnp.float32)
    o_ref[...] = acc + b_ref[...] + add_ref[...]


def fusion_t(wa, xa, wb, xb, b, add, cap=1024):
    N, Ka = wa.shape
    Kb = wb.shape[1]
    _, M = xa.shape
    tile, Mp = _choose_tile(M, cap)

    def pad_m(a):
        return a if Mp == M else jnp.pad(a, ((0, 0), (0, Mp - M)))

    out = pl.pallas_call(
        _fusion_kernel,
        out_shape=jax.ShapeDtypeStruct((N, Mp), jnp.float32),
        grid=(Mp // tile,),
        in_specs=[
            pl.BlockSpec((N, Ka), lambda i: (0, 0)),
            pl.BlockSpec((Ka, tile), lambda i: (0, i)),
            pl.BlockSpec((N, Kb), lambda i: (0, 0)),
            pl.BlockSpec((Kb, tile), lambda i: (0, i)),
            pl.BlockSpec((N, 1), lambda i: (0, 0)),
            pl.BlockSpec((N, tile), lambda i: (0, i)),
        ],
        out_specs=pl.BlockSpec((N, tile), lambda i: (0, i)),
        compiler_params=pltpu.CompilerParams(dimension_semantics=("parallel",)),
    )(wa.astype(jnp.bfloat16), pad_m(xa).astype(jnp.bfloat16),
      wb.astype(jnp.bfloat16), pad_m(xb).astype(jnp.bfloat16),
      b.reshape(N, 1).astype(jnp.float32), pad_m(add).astype(jnp.float32))
    return out if Mp == M else out[:, :M]


# ----------------------------------------------------------------------------
# Column-max kernel (max pool reduction)
# ----------------------------------------------------------------------------
def _colmax_kernel(x_ref, o_ref):
    o_ref[...] = jnp.max(x_ref[...], axis=0, keepdims=True)


def pallas_colmax(x2d):
    """Max over axis 0 of (R, P) -> (1, P).  Pooled pixels sit on the lane axis."""
    R, P = x2d.shape
    tile, Pp = _choose_tile(P)
    xp = x2d if Pp == P else jnp.pad(x2d, ((0, 0), (0, Pp - P)))
    out = pl.pallas_call(
        _colmax_kernel,
        out_shape=jax.ShapeDtypeStruct((1, Pp), jnp.float32),
        grid=(Pp // tile,),
        in_specs=[pl.BlockSpec((R, tile), lambda i: (0, i))],
        out_specs=pl.BlockSpec((1, tile), lambda i: (0, i)),
        compiler_params=pltpu.CompilerParams(dimension_semantics=("parallel",)),
    )(xp.astype(jnp.float32))
    return out if Pp == P else out[:, :P]


# ----------------------------------------------------------------------------
# SANL: emb2 conv + per-pixel LxL attention + output projection + residual,
# all in one kernel (the (L, B*HW) embedded tensor never touches HBM).
# ----------------------------------------------------------------------------
def _sanl_kernel(col_ref, wemb_ref, bemb_ref, wqkv_ref, wo_ref, bo_ref, o_ref):
    """col:(9L,T) bf16 is the im2col of the emb1 output on a lane tile of pixels.

    x = Wemb2 @ col + bemb  (the second embedding conv, fused)
    qkv = Wqkv @ x; q,k L2-normalized over channels; per pixel p:
      out[i,p] = sum_j softmax_j(q[i,p]*k[j,p]) * v[j,p]
    y = Wo @ out + bo + x   (output projection + fused residual)
    """
    x = jnp.dot(wemb_ref[...], col_ref[...], preferred_element_type=jnp.float32)
    x = x + bemb_ref[...]                                    # (L, T) f32
    L = x.shape[0]
    xb = x.astype(jnp.bfloat16)
    qkv = jnp.dot(wqkv_ref[...], xb, preferred_element_type=jnp.float32)  # (3L, T)
    q = qkv[0:L, :]
    k = qkv[L:2 * L, :]
    v = qkv[2 * L:3 * L, :]

    eps2 = 1e-24                                             # == F.normalize eps^2
    qn = q * jax.lax.rsqrt(jnp.maximum(jnp.sum(q * q, axis=0, keepdims=True), eps2))
    kn = k * jax.lax.rsqrt(jnp.maximum(jnp.sum(k * k, axis=0, keepdims=True), eps2))

    # max_j qn[i,p]*kn[j,p] == max(qn*kmax, qn*kmin)  (monotone in kn for fixed sign)
    kmax = jnp.max(kn, axis=0, keepdims=True)                # (1, T)
    kmin = jnp.min(kn, axis=0, keepdims=True)
    m = jnp.maximum(qn * kmax, qn * kmin)                    # (L, T)

    num = jnp.zeros_like(qn)
    den = jnp.zeros_like(qn)
    for j in range(L):                 # static unroll; j-slice is a cheap sublane bcast
        kj = kn[j:j + 1, :]                                  # (1, T)
        vj = v[j:j + 1, :]
        e = jnp.exp(qn * kj - m)                             # (L, T)  (EUP)
        num = num + e * vj
        den = den + e
    attn = num * pl.reciprocal(den, approx=True)             # den >= 1

    y = jnp.dot(wo_ref[...], attn.astype(jnp.bfloat16),
                preferred_element_type=jnp.float32)
    o_ref[...] = y + bo_ref[...] + x                          # +bias, fused residual


def pallas_sanl_emb2_attention(col, wemb, bemb, wq, wk, wv, wo, bo, L, cap=2048):
    """col: (9L, M) im2col of emb1 output; w*: torch Linear weights (L, L)."""
    K, M = col.shape
    tile, Mp = _choose_tile(M, cap)
    colp = col if Mp == M else jnp.pad(col, ((0, 0), (0, Mp - M)))
    wqkv = jnp.concatenate([wq, wk, wv], axis=0).astype(jnp.bfloat16)   # (3L, L)
    out = pl.pallas_call(
        _sanl_kernel,
        out_shape=jax.ShapeDtypeStruct((L, Mp), jnp.float32),
        grid=(Mp // tile,),
        in_specs=[
            pl.BlockSpec((K, tile), lambda i: (0, i)),
            pl.BlockSpec((L, K), lambda i: (0, 0)),
            pl.BlockSpec((L, 1), lambda i: (0, 0)),
            pl.BlockSpec((3 * L, L), lambda i: (0, 0)),
            pl.BlockSpec((L, L), lambda i: (0, 0)),
            pl.BlockSpec((L, 1), lambda i: (0, 0)),
        ],
        out_specs=pl.BlockSpec((L, tile), lambda i: (0, i)),
        compiler_params=pltpu.CompilerParams(dimension_semantics=("parallel",)),
    )(colp.astype(jnp.bfloat16), wemb.astype(jnp.bfloat16),
      bemb.reshape(L, 1).astype(jnp.float32), wqkv,
      wo.astype(jnp.bfloat16), bo.reshape(L, 1).astype(jnp.float32))
    return out if Mp == M else out[:, :M]


# ----------------------------------------------------------------------------
# JAX glue: im2col (channels-first), max-pool windows, bilinear resize
# ----------------------------------------------------------------------------
def _im2col_t(xc, kh, kw, stride, padding):
    """xc: (C, B, H, W) -> col: (C*kh*kw, B*oh*ow), plus (oh, ow)."""
    C, B, H, W = xc.shape
    if padding > 0:
        xc = jnp.pad(xc, ((0, 0), (0, 0), (padding, padding), (padding, padding)))
    Hp, Wp = H + 2 * padding, W + 2 * padding
    oh = (Hp - kh) // stride + 1
    ow = (Wp - kw) // stride + 1
    if kh == 1 and kw == 1 and stride == 1 and padding == 0:
        return xc.reshape(C, B * oh * ow), oh, ow
    patches = []
    for i in range(kh):
        for j in range(kw):
            patches.append(xc[:, :, i:i + stride * oh:stride, j:j + stride * ow:stride])
    col = jnp.stack(patches, axis=1)                    # (C, kh*kw, B, oh, ow)
    return col.reshape(C * kh * kw, B * oh * ow), oh, ow


def conv2d_t(xc, w, b, stride=1, padding=0, act=None,
             add_pre=None, add_post=None, mul_post=None):
    """Channels-first conv via im2col (glue) + fused Pallas matmul.

    xc: (C, B, H, W); w: (out_c, in_c, kh, kw).  Returns (out_c, B, oh, ow).
    add_pre (input-space) is added before the conv; add_post / mul_post
    (output-space) are fused residual-add / gating-multiply epilogues.
    """
    out_c, in_c, kh, kw = w.shape
    B = xc.shape[1]
    col, oh, ow = _im2col_t(xc, kh, kw, stride, padding)
    w_mat = w.reshape(out_c, in_c * kh * kw)
    pre_col = None
    if add_pre is not None:
        pre_col, _, _ = _im2col_t(add_pre, kh, kw, stride, padding)

    def flat(a):
        return None if a is None else a.reshape(out_c, B * oh * ow)

    y = matmul_t(w_mat, col, b, act=act, pre=pre_col,
                 post_add=flat(add_post), post_mul=flat(mul_post))
    return y.reshape(out_c, B, oh, ow)


def max_pool2d_t(xc, kernel, stride):
    """Channels-first max-pool: window extraction in glue, lane-dense Pallas max."""
    C, B, H, W = xc.shape
    oh = (H - kernel) // stride + 1
    ow = (W - kernel) // stride + 1
    patches = []
    for i in range(kernel):
        for j in range(kernel):
            patches.append(xc[:, :, i:i + stride * oh:stride, j:j + stride * ow:stride])
    col = jnp.stack(patches, axis=0).reshape(kernel * kernel, C * B * oh * ow)
    mx = pallas_colmax(col)                                  # (1, C*B*oh*ow)
    return mx.reshape(C, B, oh, ow)


def bilinear_resize(x, out_h, out_w):
    """F.interpolate(mode='bilinear', align_corners=False); spatial = last two axes."""
    H, W = x.shape[2], x.shape[3]

    def src_idx(out_size, in_size):
        scale = in_size / out_size
        s = (jnp.arange(out_size, dtype=jnp.float32) + 0.5) * scale - 0.5
        s = jnp.maximum(s, 0.0)
        i0 = jnp.minimum(jnp.floor(s).astype(jnp.int32), in_size - 1)
        i1 = jnp.minimum(i0 + 1, in_size - 1)
        w1 = s - i0.astype(jnp.float32)
        return i0, i1, 1.0 - w1, w1

    y0, y1, wy0, wy1 = src_idx(out_h, H)
    x0, x1, wx0, wx1 = src_idx(out_w, W)
    top = x[:, :, y0, :]
    bot = x[:, :, y1, :]
    rows = top * wy0[None, None, :, None] + bot * wy1[None, None, :, None]
    left = rows[:, :, :, x0]
    right = rows[:, :, :, x1]
    return left * wx0[None, None, None, :] + right * wx1[None, None, None, :]


# ----------------------------------------------------------------------------
# Module forward passes (channels-first (C, B, H, W) internally)
# ----------------------------------------------------------------------------
def esa_forward(p, xc):
    C, B, H, W = xc.shape
    # conv1 (1x1) and conv_f (1x1) fused in one two-output kernel.
    c1_, cf = esa_head(xc, p["conv1_w"], p["conv1_b"], p["convf_w"], p["convf_b"])
    c1 = conv2d_t(c1_, p["conv2_w"], p["conv2_b"], stride=2, padding=0)    # 3x3 s2
    v_max = max_pool2d_t(c1, 7, 3)
    v_range = conv2d_t(v_max, p["convmax_w"], p["convmax_b"], padding=1, act="relu")
    c3 = conv2d_t(v_range, p["conv3_w"], p["conv3_b"], padding=1, act="relu")
    c3 = conv2d_t(c3, p["conv3__w"], p["conv3__b"], padding=1)
    c3 = bilinear_resize(c3, H, W)
    # Fused: m = sigmoid(conv4(c3 + cf)); return x * m   (single Pallas call)
    return conv2d_t(c3, p["conv4_w"], p["conv4_b"], act="sigmoid",
                    add_pre=cf, mul_post=xc)


def sanl_forward(p, xc):
    xe = conv2d_t(xc, p["emb1_w"], p["emb1_b"], padding=1, act="relu")
    # emb2 (3x3 conv), QKV, attention, output proj and residual fused in one kernel.
    col, oh, ow = _im2col_t(xe, 3, 3, 1, 1)
    L = p["emb2_w"].shape[0]
    B = xe.shape[1]
    wemb = p["emb2_w"].reshape(L, -1)
    out = pallas_sanl_emb2_attention(col, wemb, p["emb2_b"], p["wq"], p["wk"],
                                     p["wv"], p["wo"], p["bo"], L)
    return out.reshape(L, B, oh, ow)


def ssamc_forward(params, x, head):
    xc = jnp.transpose(x, (1, 0, 2, 3))                                    # NCHW -> CBHW
    if head == 0:
        xc = conv2d_t(xc, params["botnek_w"], params["botnek_b"])
    spex = sanl_forward(params["nl"], xc)
    spax = esa_forward(params["esa"], xc)
    C, B, H, W = xc.shape
    M = B * H * W
    fw = params["fusion_w"].reshape(C, 2 * C)
    # Concat-free fusion conv with fused +x residual.
    out = fusion_t(fw[:, :C], spax.reshape(C, M),
                   fw[:, C:], spex.reshape(C, M),
                   params["fusion_b"], xc.reshape(C, M))
    return jnp.transpose(out.reshape(C, B, H, W), (1, 0, 2, 3))            # back to NCHW


# ----------------------------------------------------------------------------
# Deterministic parameter initialization
# ----------------------------------------------------------------------------
def init_params(key, n_feats, head, num):
    f = n_feats // 4
    keys = iter(jax.random.split(key, 40))

    def nrm(shape, scale=0.1):
        return (scale * jax.random.normal(next(keys), shape)).astype(jnp.float32)

    params = {}
    if head == 0:
        params["botnek_w"] = nrm((n_feats, n_feats * num, 1, 1))
        params["botnek_b"] = nrm((n_feats,))
    params["esa"] = {
        "conv1_w": nrm((f, n_feats, 1, 1)), "conv1_b": nrm((f,)),
        "convf_w": nrm((f, f, 1, 1)), "convf_b": nrm((f,)),
        "convmax_w": nrm((f, f, 3, 3)), "convmax_b": nrm((f,)),
        "conv2_w": nrm((f, f, 3, 3)), "conv2_b": nrm((f,)),
        "conv3_w": nrm((f, f, 3, 3)), "conv3_b": nrm((f,)),
        "conv3__w": nrm((f, f, 3, 3)), "conv3__b": nrm((f,)),
        "conv4_w": nrm((n_feats, f, 1, 1)), "conv4_b": nrm((n_feats,)),
    }
    params["nl"] = {
        "emb1_w": nrm((n_feats, n_feats, 3, 3)), "emb1_b": nrm((n_feats,)),
        "emb2_w": nrm((n_feats, n_feats, 3, 3)), "emb2_b": nrm((n_feats,)),
        "wq": nrm((n_feats, n_feats)),
        "wk": nrm((n_feats, n_feats)),
        "wv": nrm((n_feats, n_feats)),
        "wo": nrm((n_feats, n_feats)), "bo": nrm((n_feats,)),
    }
    params["fusion_w"] = nrm((n_feats, n_feats * 2, 1, 1))
    params["fusion_b"] = nrm((n_feats,))
    return params


if __name__ == "__main__":
    n_feats, head, num = 16, 0, 2          # head==0 exercises the botnek 1x1 conv
    B, H, W = 2, 16, 16

    key = jax.random.PRNGKey(0)
    pkey, xkey = jax.random.split(key)
    params = init_params(pkey, n_feats, head, num)
    x = jax.random.normal(xkey, (B, n_feats * num, H, W), dtype=jnp.float32)

    fwd = jax.jit(ssamc_forward, static_argnums=2)
    out = fwd(params, x, head)
    out = jax.block_until_ready(out)
    assert out.shape == (B, n_feats, H, W), out.shape
    assert jnp.all(jnp.isfinite(out))
    print("KERNEL_OK")
</pallas_src>

<mosaic_0001>
module attributes {stable_mosaic.version = 11 : i64} {
  func.func @_mm_kernel(%arg0: i32, %arg1: memref<16x32xbf16, #tpu.memory_space<vmem>>, %arg2: memref<32x512xbf16, #tpu.memory_space<vmem>>, %arg3: memref<16x1xf32, #tpu.memory_space<vmem>>, %arg4: memref<16x512xf32, #tpu.memory_space<vmem>>) attributes {dimension_semantics = [#tpu.dimension_semantics<parallel>], iteration_bounds = array<i64: 1>, scalar_prefetch = 0 : i64, scratch_operands = 0 : i64, tpu.core_type = #tpu.core_type<tc>, window_params = [{pipeline_mode = #tpu.pipeline_mode<synchronous>, transform_indices = @transform_0, window_bounds = array<i64: 16, 32>}, {transform_indices = @transform_1, window_bounds = array<i64: 32, 512>}, {pipeline_mode = #tpu.pipeline_mode<synchronous>, transform_indices = @transform_2, window_bounds = array<i64: 16, 1>}, {transform_indices = @transform_3, window_bounds = array<i64: 16, 512>}]} {
    %c0 = arith.constant 0 : index
    %c0_0 = arith.constant 0 : index
    %0 = vector.load %arg2[%c0, %c0_0] : memref<32x512xbf16, #tpu.memory_space<vmem>>, vector<32x512xbf16>
    %c0_1 = arith.constant 0 : index
    %c0_2 = arith.constant 0 : index
    %1 = vector.load %arg1[%c0_1, %c0_2] : memref<16x32xbf16, #tpu.memory_space<vmem>>, vector<16x32xbf16>
    %cst = arith.constant dense<0.000000e+00> : vector<16x512xf32>
    %2 = tpu.matmul %1, %0, %cst {dimension_numbers = #tpu.dot_dimension_numbers<[1], [0], [0], [1], [0, 0, 1, 1], [], []>} : vector<16x32xbf16>, vector<32x512xbf16>, vector<16x512xf32> -> vector<16x512xf32>
    %c0_3 = arith.constant 0 : index
    %c0_4 = arith.constant 0 : index
    %3 = vector.load %arg3[%c0_3, %c0_4] : memref<16x1xf32, #tpu.memory_space<vmem>>, vector<16x1xf32>
    %4 = vector.broadcast %3 : vector<16x1xf32> to vector<16x512xf32>
    %5 = arith.addf %2, %4 : vector<16x512xf32>
    %c0_5 = arith.constant 0 : index
    %c0_6 = arith.constant 0 : index
    %6 = vector.load %arg4[%c0_5, %c0_6] : memref<16x512xf32, #tpu.memory_space<vmem>>, vector<16x512xf32>
    tpu.vector_store %arg4[%c0_5, %c0_6], %5 {strides = array<i32>} : memref<16x512xf32, #tpu.memory_space<vmem>>, vector<16x512xf32>,
    return
  }
  func.func @transform_0(%arg0: i32) -> (i32, i32) {
    %c0_i32 = arith.constant 0 : i32
    %c0_i32_0 = arith.constant 0 : i32
    %c0_i32_1 = arith.constant 0 : i32
    return %c0_i32, %c0_i32_0 : i32, i32
  }
  func.func @transform_1(%arg0: i32) -> (i32, i32) {
    %c0_i32 = arith.constant 0 : i32
    %c0_i32_0 = arith.constant 0 : i32
    return %c0_i32, %arg0 : i32, i32
  }
  func.func @transform_2(%arg0: i32) -> (i32, i32) {
    %c0_i32 = arith.constant 0 : i32
    %c0_i32_0 = arith.constant 0 : i32
    %c0_i32_1 = arith.constant 0 : i32
    return %c0_i32, %c0_i32_0 : i32, i32
  }
  func.func @transform_3(%arg0: i32) -> (i32, i32) {
    %c0_i32 = arith.constant 0 : i32
    %c0_i32_0 = arith.constant 0 : i32
    return %c0_i32, %arg0 : i32, i32
  }
}

module attributes {stable_mosaic.version = 11 : i64} {
  func.func @_mm_kernel(%arg0: i32, %arg1: memref<16x144xbf16, #tpu.memory_space<vmem>>, %arg2: memref<144x512xbf16, #tpu.memory_space<vmem>>, %arg3: memref<16x1xf32, #tpu.memory_space<vmem>>, %arg4: memref<16x512xf32, #tpu.memory_space<vmem>>) attributes {dimension_semantics = [#tpu.dimension_semantics<parallel>], iteration_bounds = array<i64: 1>, scalar_prefetch = 0 : i64, scratch_operands = 0 : i64, tpu.core_type = #tpu.core_type<tc>, window_params = [{pipeline_mode = #tpu.pipeline_mode<synchronous>, transform_indices = @transform_0, window_bounds = array<i64: 16, 144>}, {transform_indices = @transform_1, window_bounds = array<i64: 144, 512>}, {pipeline_mode = #tpu.pipeline_mode<synchronous>, transform_indices = @transform_2, window_bounds = array<i64: 16, 1>}, {transform_indices = @transform_3, window_bounds = array<i64: 16, 512>}]} {
    %c0 = arith.constant 0 : index
    %c0_0 = arith.constant 0 : index
    %0 = vector.load %arg2[%c0, %c0_0] : memref<144x512xbf16, #tpu.memory_space<vmem>>, vector<144x512xbf16>
    %c0_1 = arith.constant 0 : index
    %c0_2 = arith.constant 0 : index
    %1 = vector.load %arg1[%c0_1, %c0_2] : memref<16x144xbf16, #tpu.memory_space<vmem>>, vector<16x144xbf16>
    %cst = arith.constant dense<0.000000e+00> : vector<16x512xf32>
    %2 = tpu.matmul %1, %0, %cst {dimension_numbers = #tpu.dot_dimension_numbers<[1], [0], [0], [1], [0, 0, 1, 1], [], []>} : vector<16x144xbf16>, vector<144x512xbf16>, vector<16x512xf32> -> vector<16x512xf32>
    %c0_3 = arith.constant 0 : index
    %c0_4 = arith.constant 0 : index
    %3 = vector.load %arg3[%c0_3, %c0_4] : memref<16x1xf32, #tpu.memory_space<vmem>>, vector<16x1xf32>
    %4 = vector.broadcast %3 : vector<16x1xf32> to vector<16x512xf32>
    %5 = arith.addf %2, %4 : vector<16x512xf32>
    %cst_5 = arith.constant 0.000000e+00 : f32
    %6 = vector.broadcast %cst_5 : f32 to vector<16x512xf32>
    %7 = arith.maximumf %5, %6 : vector<16x512xf32>
    %c0_6 = arith.constant 0 : index
    %c0_7 = arith.constant 0 : index
    %8 = vector.load %arg4[%c0_6, %c0_7] : memref<16x512xf32, #tpu.memory_space<vmem>>, vector<16x512xf32>
    tpu.vector_store %arg4[%c0_6, %c0_7], %7 {strides = array<i32>} : memref<16x512xf32, #tpu.memory_space<vmem>>, vector<16x512xf32>,
    return
  }
  func.func @transform_0(%arg0: i32) -> (i32, i32) {
    %c0_i32 = arith.constant 0 : i32
    %c0_i32_0 = arith.constant 0 : i32
    %c0_i32_1 = arith.constant 0 : i32
    return %c0_i32, %c0_i32_0 : i32, i32
  }
  func.func @transform_1(%arg0: i32) -> (i32, i32) {
    %c0_i32 = arith.constant 0 : i32
    %c0_i32_0 = arith.constant 0 : i32
    return %c0_i32, %arg0 : i32, i32
  }
  func.func @transform_2(%arg0: i32) -> (i32, i32) {
    %c0_i32 = arith.constant 0 : i32
    %c0_i32_0 = arith.constant 0 : i32
    %c0_i32_1 = arith.constant 0 : i32
    return %c0_i32, %c0_i32_0 : i32, i32
  }
  func.func @transform_3(%arg0: i32) -> (i32, i32) {
    %c0_i32 = arith.constant 0 : i32
    %c0_i32_0 = arith.constant 0 : i32
    return %c0_i32, %arg0 : i32, i32
  }
}

module attributes {stable_mosaic.version = 11 : i64} {
  func.func @_sanl_kernel(%arg0: i32, %arg1: memref<144x512xbf16, #tpu.memory_space<vmem>>, %arg2: memref<16x144xbf16, #tpu.memory_space<vmem>>, %arg3: memref<16x1xf32, #tpu.memory_space<vmem>>, %arg4: memref<48x16xbf16, #tpu.memory_space<vmem>>, %arg5: memref<16x16xbf16, #tpu.memory_space<vmem>>, %arg6: memref<16x1xf32, #tpu.memory_space<vmem>>, %arg7: memref<16x512xf32, #tpu.memory_space<vmem>>) attributes {dimension_semantics = [#tpu.dimension_semantics<parallel>], iteration_bounds = array<i64: 1>, scalar_prefetch = 0 : i64, scratch_operands = 0 : i64, tpu.core_type = #tpu.core_type<tc>, window_params = [{transform_indices = @transform_0, window_bounds = array<i64: 144, 512>}, {pipeline_mode = #tpu.pipeline_mode<synchronous>, transform_indices = @transform_1, window_bounds = array<i64: 16, 144>}, {pipeline_mode = #tpu.pipeline_mode<synchronous>, transform_indices = @transform_2, window_bounds = array<i64: 16, 1>}, {pipeline_mode = #tpu.pipeline_mode<synchronous>, transform_indices = @transform_3, window_bounds = array<i64: 48, 16>}, {pipeline_mode = #tpu.pipeline_mode<synchronous>, transform_indices = @transform_4, window_bounds = array<i64: 16, 16>}, {pipeline_mode = #tpu.pipeline_mode<synchronous>, transform_indices = @transform_5, window_bounds = array<i64: 16, 1>}, {transform_indices = @transform_6, window_bounds = array<i64: 16, 512>}]} {
    %c0 = arith.constant 0 : index
    %c0_0 = arith.constant 0 : index
    %0 = vector.load %arg2[%c0, %c0_0] : memref<16x144xbf16, #tpu.memory_space<vmem>>, vector<16x144xbf16>
    %c0_1 = arith.constant 0 : index
    %c0_2 = arith.constant 0 : index
    %1 = vector.load %arg1[%c0_1, %c0_2] : memref<144x512xbf16, #tpu.memory_space<vmem>>, vector<144x512xbf16>
    %cst = arith.constant dense<0.000000e+00> : vector<16x512xf32>
    %2 = tpu.matmul %0, %1, %cst {dimension_numbers = #tpu.dot_dimension_numbers<[1], [0], [0], [1], [0, 0, 1, 1], [], []>} : vector<16x144xbf16>, vector<144x512xbf16>, vector<16x512xf32> -> vector<16x512xf32>
    %c0_3 = arith.constant 0 : index
    %c0_4 = arith.constant 0 : index
    %3 = vector.load %arg3[%c0_3, %c0_4] : memref<16x1xf32, #tpu.memory_space<vmem>>, vector<16x1xf32>
    %4 = vector.broadcast %3 : vector<16x1xf32> to vector<16x512xf32>
    %5 = arith.addf %2, %4 : vector<16x512xf32>
    %6 = arith.truncf %5 : vector<16x512xf32> to vector<16x512xbf16>
    %c0_5 = arith.constant 0 : index
    %c0_6 = arith.constant 0 : index
    %7 = vector.load %arg4[%c0_5, %c0_6] : memref<48x16xbf16, #tpu.memory_space<vmem>>, vector<48x16xbf16>
    %cst_7 = arith.constant dense<0.000000e+00> : vector<48x512xf32>
    %8 = tpu.matmul %7, %6, %cst_7 {dimension_numbers = #tpu.dot_dimension_numbers<[1], [0], [0], [1], [0, 0, 1, 1], [], []>} : vector<48x16xbf16>, vector<16x512xbf16>, vector<48x512xf32> -> vector<48x512xf32>
    %9 = vector.extract_strided_slice %8 {offsets = [0, 0], sizes = [16, 512], strides = [1, 1]} : vector<48x512xf32> to vector<16x512xf32>
    %10 = vector.extract_strided_slice %8 {offsets = [16, 0], sizes = [16, 512], strides = [1, 1]} : vector<48x512xf32> to vector<16x512xf32>
    %11 = vector.extract_strided_slice %8 {offsets = [32, 0], sizes = [16, 512], strides = [1, 1]} : vector<48x512xf32> to vector<16x512xf32>
    %12 = arith.mulf %9, %9 : vector<16x512xf32>
    %cst_8 = arith.constant dense<0.000000e+00> : vector<512xf32>
    %13 = vector.multi_reduction <add>, %12, %cst_8 [0] : vector<16x512xf32> to vector<512xf32>
    %14 = vector.shape_cast %13 : vector<512xf32> to vector<1x512xf32>
    %cst_9 = arith.constant 1.000000e-24 : f32
    %15 = vector.broadcast %cst_9 : f32 to vector<1x512xf32>
    %16 = arith.maximumf %14, %15 : vector<1x512xf32>
    %17 = math.rsqrt %16 : vector<1x512xf32>
    %18 = vector.broadcast %17 : vector<1x512xf32> to vector<16x512xf32>
    %19 = arith.mulf %9, %18 : vector<16x512xf32>
    %20 = arith.mulf %10, %10 : vector<16x512xf32>
    %cst_10 = arith.constant dense<0.000000e+00> : vector<512xf32>
    %21 = vector.multi_reduction <add>, %20, %cst_10 [0] : vector<16x512xf32> to vector<512xf32>
    %22 = vector.shape_cast %21 : vector<512xf32> to vector<1x512xf32>
    %cst_11 = arith.constant 1.000000e-24 : f32
    %23 = vector.broadcast %cst_11 : f32 to vector<1x512xf32>
    %24 = arith.maximumf %22, %23 : vector<1x512xf32>
    %25 = math.rsqrt %24 : vector<1x512xf32>
    %26 = vector.broadcast %25 : vector<1x512xf32> to vector<16x512xf32>
    %27 = arith.mulf %10, %26 : vector<16x512xf32>
    %cst_12 = arith.constant dense<0xFF800000> : vector<512xf32>
    %28 = vector.multi_reduction <maximumf>, %27, %cst_12 [0] : vector<16x512xf32> to vector<512xf32>
    %29 = vector.shape_cast %28 : vector<512xf32> to vector<1x512xf32>
    %cst_13 = arith.constant dense<0x7F800000> : vector<512xf32>
    %30 = vector.multi_reduction <minimumf>, %27, %cst_13 [0] : vector<16x512xf32> to vector<512xf32>
    %31 = vector.shape_cast %30 : vector<512xf32> to vector<1x512xf32>
    %32 = vector.broadcast %29 : vector<1x512xf32> to vector<16x512xf32>
    %33 = arith.mulf %19, %32 : vector<16x512xf32>
    %34 = vector.broadcast %31 : vector<1x512xf32> to vector<16x512xf32>
    %35 = arith.mulf %19, %34 : vector<16x512xf32>
    %36 = arith.maximumf %33, %35 : vector<16x512xf32>
    %cst_14 = arith.constant 0.000000e+00 : f32
    %37 = vector.broadcast %cst_14 : f32 to vector<16x512xf32>
    %cst_15 = arith.constant 0.000000e+00 : f32
    %38 = vector.broadcast %cst_15 : f32 to vector<16x512xf32>
    %39 = vector.extract_strided_slice %27 {offsets = [0, 0], sizes = [1, 512], strides = [1, 1]} : vector<16x512xf32> to vector<1x512xf32>
    %40 = vector.extract_strided_slice %11 {offsets = [0, 0], sizes = [1, 512], strides = [1, 1]} : vector<16x512xf32> to vector<1x512xf32>
    %41 = vector.broadcast %39 : vector<1x512xf32> to vector<16x512xf32>
    %42 = arith.mulf %19, %41 : vector<16x512xf32>
    %43 = arith.subf %42, %36 : vector<16x512xf32>
    %44 = math.exp %43 : vector<16x512xf32>
    %45 = vector.broadcast %40 : vector<1x512xf32> to vector<16x512xf32>
    %46 = arith.mulf %44, %45 : vector<16x512xf32>
    %47 = arith.addf %37, %46 : vector<16x512xf32>
    %48 = arith.addf %38, %44 : vector<16x512xf32>
    %49 = vector.extract_strided_slice %27 {offsets = [1, 0], sizes = [1, 512], strides = [1, 1]} : vector<16x512xf32> to vector<1x512xf32>
    %50 = vector.extract_strided_slice %11 {offsets = [1, 0], sizes = [1, 512], strides = [1, 1]} : vector<16x512xf32> to vector<1x512xf32>
    %51 = vector.broadcast %49 : vector<1x512xf32> to vector<16x512xf32>
    %52 = arith.mulf %19, %51 : vector<16x512xf32>
    %53 = arith.subf %52, %36 : vector<16x512xf32>
    %54 = math.exp %53 : vector<16x512xf32>
    %55 = vector.broadcast %50 : vector<1x512xf32> to vector<16x512xf32>
    %56 = arith.mulf %54, %55 : vector<16x512xf32>
    %57 = arith.addf %47, %56 : vector<16x512xf32>
    %58 = arith.addf %48, %54 : vector<16x512xf32>
    %59 = vector.extract_strided_slice %27 {offsets = [2, 0], sizes = [1, 512], strides = [1, 1]} : vector<16x512xf32> to vector<1x512xf32>
    %60 = vector.extract_strided_slice %11 {offsets = [2, 0], sizes = [1, 512], strides = [1, 1]} : vector<16x512xf32> to vector<1x512xf32>
    %61 = vector.broadcast %59 : vector<1x512xf32> to vector<16x512xf32>
    %62 = arith.mulf %19, %61 : vector<16x512xf32>
    %63 = arith.subf %62, %36 : vector<16x512xf32>
    %64 = math.exp %63 : vector<16x512xf32>
    %65 = vector.broadcast %60 : vector<1x512xf32> to vector<16x512xf32>
    %66 = arith.mulf %64, %65 : vector<16x512xf32>
    %67 = arith.addf %57, %66 : vector<16x512xf32>
    %68 = arith.addf %58, %64 : vector<16x512xf32>
    %69 = vector.extract_strided_slice %27 {offsets = [3, 0], sizes = [1, 512], strides = [1, 1]} : vector<16x512xf32> to vector<1x512xf32>
    %70 = vector.extract_strided_slice %11 {offsets = [3, 0], sizes = [1, 512], strides = [1, 1]} : vector<16x512xf32> to vector<1x512xf32>
    %71 = vector.broadcast %69 : vector<1x512xf32> to vector<16x512xf32>
    %72 = arith.mulf %19, %71 : vector<16x512xf32>
    %73 = arith.subf %72, %36 : vector<16x512xf32>
    %74 = math.exp %73 : vector<16x512xf32>
    %75 = vector.broadcast %70 : vector<1x512xf32> to vector<16x512xf32>
    %76 = arith.mulf %74, %75 : vector<16x512xf32>
    %77 = arith.addf %67, %76 : vector<16x512xf32>
    %78 = arith.addf %68, %74 : vector<16x512xf32>
    %79 = vector.extract_strided_slice %27 {offsets = [4, 0], sizes = [1, 512], strides = [1, 1]} : vector<16x512xf32> to vector<1x512xf32>
    %80 = vector.extract_strided_slice %11 {offsets = [4, 0], sizes = [1, 512], strides = [1, 1]} : vector<16x512xf32> to vector<1x512xf32>
    %81 = vector.broadcast %79 : vector<1x512xf32> to vector<16x512xf32>
    %82 = arith.mulf %19, %81 : vector<16x512xf32>
    %83 = arith.subf %82, %36 : vector<16x512xf32>
    %84 = math.exp %83 : vector<16x512xf32>
    %85 = vector.broadcast %80 : vector<1x512xf32> to vector<16x512xf32>
    %86 = arith.mulf %84, %85 : vector<16x512xf32>
    %87 = arith.addf %77, %86 : vector<16x512xf32>
    %88 = arith.addf %78, %84 : vector<16x512xf32>
    %89 = vector.extract_strided_slice %27 {offsets = [5, 0], sizes = [1, 512], strides = [1, 1]} : vector<16x512xf32> to vector<1x512xf32>
    %90 = vector.extract_strided_slice %11 {offsets = [5, 0], sizes = [1, 512], strides = [1, 1]} : vector<16x512xf32> to vector<1x512xf32>
    %91 = vector.broadcast %89 : vector<1x512xf32> to vector<16x512xf32>
    %92 = arith.mulf %19, %91 : vector<16x512xf32>
    %93 = arith.subf %92, %36 : vector<16x512xf32>
    %94 = math.exp %93 : vector<16x512xf32>
    %95 = vector.broadcast %90 : vector<1x512xf32> to vector<16x512xf32>
    %96 = arith.mulf %94, %95 : vector<16x512xf32>
    %97 = arith.addf %87, %96 : vector<16x512xf32>
    %98 = arith.addf %88, %94 : vector<16x512xf32>
    %99 = vector.extract_strided_slice %27 {offsets = [6, 0], sizes = [1, 512], strides = [1, 1]} : vector<16x512xf32> to vector<1x512xf32>
    %100 = vector.extract_strided_slice %11 {offsets = [6, 0], sizes = [1, 512], strides = [1, 1]} : vector<16x512xf32> to vector<1x512xf32>
    %101 = vector.broadcast %99 : vector<1x512xf32> to vector<16x512xf32>
    %102 = arith.mulf %19, %101 : vector<16x512xf32>
    %103 = arith.subf %102, %36 : vector<16x512xf32>
    %104 = math.exp %103 : vector<16x512xf32>
    %105 = vector.broadcast %100 : vector<1x512xf32> to vector<16x512xf32>
    %106 = arith.mulf %104, %105 : vector<16x512xf32>
    %107 = arith.addf %97, %106 : vector<16x512xf32>
    %108 = arith.addf %98, %104 : vector<16x512xf32>
    %109 = vector.extract_strided_slice %27 {offsets = [7, 0], sizes = [1, 512], strides = [1, 1]} : vector<16x512xf32> to vector<1x512xf32>
    %110 = vector.extract_strided_slice %11 {offsets = [7, 0], sizes = [1, 512], strides = [1, 1]} : vector<16x512xf32> to vector<1x512xf32>
    %111 = vector.broadcast %109 : vector<1x512xf32> to vector<16x512xf32>
    %112 = arith.mulf %19, %111 : vector<16x512xf32>
    %113 = arith.subf %112, %36 : vector<16x512xf32>
    %114 = math.exp %113 : vector<16x512xf32>
    %115 = vector.broadcast %110 : vector<1x512xf32> to vector<16x512xf32>
    %116 = arith.mulf %114, %115 : vector<16x512xf32>
    %117 = arith.addf %107, %116 : vector<16x512xf32>
    %118 = arith.addf %108, %114 : vector<16x512xf32>
    %119 = vector.extract_strided_slice %27 {offsets = [8, 0], sizes = [1, 512], strides = [1, 1]} : vector<16x512xf32> to vector<1x512xf32>
    %120 = vector.extract_strided_slice %11 {offsets = [8, 0], sizes = [1, 512], strides = [1, 1]} : vector<16x512xf32> to vector<1x512xf32>
    %121 = vector.broadcast %119 : vector<1x512xf32> to vector<16x512xf32>
    %122 = arith.mulf %19, %121 : vector<16x512xf32>
    %123 = arith.subf %122, %36 : vector<16x512xf32>
    %124 = math.exp %123 : vector<16x512xf32>
    %125 = vector.broadcast %120 : vector<1x512xf32> to vector<16x512xf32>
    %126 = arith.mulf %124, %125 : vector<16x512xf32>
    %127 = arith.addf %117, %126 : vector<16x512xf32>
    %128 = arith.addf %118, %124 : vector<16x512xf32>
    %129 = vector.extract_strided_slice %27 {offsets = [9, 0], sizes = [1, 512], strides = [1, 1]} : vector<16x512xf32> to vector<1x512xf32>
    %130 = vector.extract_strided_slice %11 {offsets = [9, 0], sizes = [1, 512], strides = [1, 1]} : vector<16x512xf32> to vector<1x512xf32>
    %131 = vector.broadcast %129 : vector<1x512xf32> to vector<16x512xf32>
    %132 = arith.mulf %19, %131 : vector<16x512xf32>
    %133 = arith.subf %132, %36 : vector<16x512xf32>
    %134 = math.exp %133 : vector<16x512xf32>
    %135 = vector.broadcast %130 : vector<1x512xf32> to vector<16x512xf32>
    %136 = arith.mulf %134, %135 : vector<16x512xf32>
    %137 = arith.addf %127, %136 : vector<16x512xf32>
    %138 = arith.addf %128, %134 : vector<16x512xf32>
    %139 = vector.extract_strided_slice %27 {offsets = [10, 0], sizes = [1, 512], strides = [1, 1]} : vector<16x512xf32> to vector<1x512xf32>
    %140 = vector.extract_strided_slice %11 {offsets = [10, 0], sizes = [1, 512], strides = [1, 1]} : vector<16x512xf32> to vector<1x512xf32>
    %141 = vector.broadcast %139 : vector<1x512xf32> to vector<16x512xf32>
    %142 = arith.mulf %19, %141 : vector<16x512xf32>
    %143 = arith.subf %142, %36 : vector<16x512xf32>
    %144 = math.exp %143 : vector<16x512xf32>
    %145 = vector.broadcast %140 : vector<1x512xf32> to vector<16x512xf32>
    %146 = arith.mulf %144, %145 : vector<16x512xf32>
    %147 = arith.addf %137, %146 : vector<16x512xf32>
    %148 = arith.addf %138, %144 : vector<16x512xf32>
    %149 = vector.extract_strided_slice %27 {offsets = [11, 0], sizes = [1, 512], strides = [1, 1]} : vector<16x512xf32> to vector<1x512xf32>
    %150 = vector.extract_strided_slice %11 {offsets = [11, 0], sizes = [1, 512], strides = [1, 1]} : vector<16x512xf32> to vector<1x512xf32>
    %151 = vector.broadcast %149 : vector<1x512xf32> to vector<16x512xf32>
    %152 = arith.mulf %19, %151 : vector<16x512xf32>
    %153 = arith.subf %152, %36 : vector<16x512xf32>
    %154 = math.exp %153 : vector<16x512xf32>
    %155 = vector.broadcast %150 : vector<1x512xf32> to vector<16x512xf32>
    %156 = arith.mulf %154, %155 : vector<16x512xf32>
    %157 = arith.addf %147, %156 : vector<16x512xf32>
    %158 = arith.addf %148, %154 : vector<16x512xf32>
    %159 = vector.extract_strided_slice %27 {offsets = [12, 0], sizes = [1, 512], strides = [1, 1]} : vector<16x512xf32> to vector<1x512xf32>
    %160 = vector.extract_strided_slice %11 {offsets = [12, 0], sizes = [1, 512], strides = [1, 1]} : vector<16x512xf32> to vector<1x512xf32>
    %161 = vector.broadcast %159 : vector<1x512xf32> to vector<16x512xf32>
    %162 = arith.mulf %19, %161 : vector<16x512xf32>
    %163 = arith.subf %162, %36 : vector<16x512xf32>
    %164 = math.exp %163 : vector<16x512xf32>
    %165 = vector.broadcast %160 : vector<1x512xf32> to vector<16x512xf32>
    %166 = arith.mulf %164, %165 : vector<16x512xf32>
    %167 = arith.addf %157, %166 : vector<16x512xf32>
    %168 = arith.addf %158, %164 : vector<16x512xf32>
    %169 = vector.extract_strided_slice %27 {offsets = [13, 0], sizes = [1, 512], strides = [1, 1]} : vector<16x512xf32> to vector<1x512xf32>
    %170 = vector.extract_strided_slice %11 {offsets = [13, 0], sizes = [1, 512], strides = [1, 1]} : vector<16x512xf32> to vector<1x512xf32>
    %171 = vector.broadcast %169 : vector<1x512xf32> to vector<16x512xf32>
    %172 = arith.mulf %19, %171 : vector<16x512xf32>
    %173 = arith.subf %172, %36 : vector<16x512xf32>
    %174 = math.exp %173 : vector<16x512xf32>
    %175 = vector.broadcast %170 : vector<1x512xf32> to vector<16x512xf32>
    %176 = arith.mulf %174, %175 : vector<16x512xf32>
    %177 = arith.addf %167, %176 : vector<16x512xf32>
    %178 = arith.addf %168, %174 : vector<16x512xf32>
    %179 = vector.extract_strided_slice %27 {offsets = [14, 0], sizes = [1, 512], strides = [1, 1]} : vector<16x512xf32> to vector<1x512xf32>
    %180 = vector.extract_strided_slice %11 {offsets = [14, 0], sizes = [1, 512], strides = [1, 1]} : vector<16x512xf32> to vector<1x512xf32>
    %181 = vector.broadcast %179 : vector<1x512xf32> to vector<16x512xf32>
    %182 = arith.mulf %19, %181 : vector<16x512xf32>
    %183 = arith.subf %182, %36 : vector<16x512xf32>
    %184 = math.exp %183 : vector<16x512xf32>
    %185 = vector.broadcast %180 : vector<1x512xf32> to vector<16x512xf32>
    %186 = arith.mulf %184, %185 : vector<16x512xf32>
    %187 = arith.addf %177, %186 : vector<16x512xf32>
    %188 = arith.addf %178, %184 : vector<16x512xf32>
    %189 = vector.extract_strided_slice %27 {offsets = [15, 0], sizes = [1, 512], strides = [1, 1]} : vector<16x512xf32> to vector<1x512xf32>
    %190 = vector.extract_strided_slice %11 {offsets = [15, 0], sizes = [1, 512], strides = [1, 1]} : vector<16x512xf32> to vector<1x512xf32>
    %191 = vector.broadcast %189 : vector<1x512xf32> to vector<16x512xf32>
    %192 = arith.mulf %19, %191 : vector<16x512xf32>
    %193 = arith.subf %192, %36 : vector<16x512xf32>
    %194 = math.exp %193 : vector<16x512xf32>
    %195 = vector.broadcast %190 : vector<1x512xf32> to vector<16x512xf32>
    %196 = arith.mulf %194, %195 : vector<16x512xf32>
    %197 = arith.addf %187, %196 : vector<16x512xf32>
    %198 = arith.addf %188, %194 : vector<16x512xf32>
    %199 = tpu.reciprocal %198 {approx = true} : vector<16x512xf32> -> vector<16x512xf32>
    %200 = arith.mulf %197, %199 : vector<16x512xf32>
    %c0_16 = arith.constant 0 : index
    %c0_17 = arith.constant 0 : index
    %201 = vector.load %arg5[%c0_16, %c0_17] : memref<16x16xbf16, #tpu.memory_space<vmem>>, vector<16x16xbf16>
    %202 = arith.truncf %200 : vector<16x512xf32> to vector<16x512xbf16>
    %cst_18 = arith.constant dense<0.000000e+00> : vector<16x512xf32>
    %203 = tpu.matmul %201, %202, %cst_18 {dimension_numbers = #tpu.dot_dimension_numbers<[1], [0], [0], [1], [0, 0, 1, 1], [], []>} : vector<16x16xbf16>, vector<16x512xbf16>, vector<16x512xf32> -> vector<16x512xf32>
    %c0_19 = arith.constant 0 : index
    %c0_20 = arith.constant 0 : index
    %204 = vector.load %arg6[%c0_19, %c0_20] : memref<16x1xf32, #tpu.memory_space<vmem>>, vector<16x1xf32>
    %205 = vector.broadcast %204 : vector<16x1xf32> to vector<16x512xf32>
    %206 = arith.addf %203, %205 : vector<16x512xf32>
    %207 = arith.addf %206, %5 : vector<16x512xf32>
    %c0_21 = arith.constant 0 : index
    %c0_22 = arith.constant 0 : index
    %208 = vector.load %arg7[%c0_21, %c0_22] : memref<16x512xf32, #tpu.memory_space<vmem>>, vector<16x512xf32>
    tpu.vector_store %arg7[%c0_21, %c0_22], %207 {strides = array<i32>} : memref<16x512xf32, #tpu.memory_space<vmem>>, vector<16x512xf32>,
    return
  }
  func.func @transform_0(%arg0: i32) -> (i32, i32) {
    %c0_i32 = arith.constant 0 : i32
    %c0_i32_0 = arith.constant 0 : i32
    return %c0_i32, %arg0 : i32, i32
  }
  func.func @transform_1(%arg0: i32) -> (i32, i32) {
    %c0_i32 = arith.constant 0 : i32
    %c0_i32_0 = arith.constant 0 : i32
    %c0_i32_1 = arith.constant 0 : i32
    return %c0_i32, %c0_i32_0 : i32, i32
  }
  func.func @transform_2(%arg0: i32) -> (i32, i32) {
    %c0_i32 = arith.constant 0 : i32
    %c0_i32_0 = arith.constant 0 : i32
    %c0_i32_1 = arith.constant 0 : i32
    return %c0_i32, %c0_i32_0 : i32, i32
  }
  func.func @transform_3(%arg0: i32) -> (i32, i32) {
    %c0_i32 = arith.constant 0 : i32
    %c0_i32_0 = arith.constant 0 : i32
    %c0_i32_1 = arith.constant 0 : i32
    return %c0_i32, %c0_i32_0 : i32, i32
  }
  func.func @transform_4(%arg0: i32) -> (i32, i32) {
    %c0_i32 = arith.constant 0 : i32
    %c0_i32_0 = arith.constant 0 : i32
    %c0_i32_1 = arith.constant 0 : i32
    return %c0_i32, %c0_i32_0 : i32, i32
  }
  func.func @transform_5(%arg0: i32) -> (i32, i32) {
    %c0_i32 = arith.constant 0 : i32
    %c0_i32_0 = arith.constant 0 : i32
    %c0_i32_1 = arith.constant 0 : i32
    return %c0_i32, %c0_i32_0 : i32, i32
  }
  func.func @transform_6(%arg0: i32) -> (i32, i32) {
    %c0_i32 = arith.constant 0 : i32
    %c0_i32_0 = arith.constant 0 : i32
    return %c0_i32, %arg0 : i32, i32
  }
}

module attributes {stable_mosaic.version = 11 : i64} {
  func.func @_esa_head_kernel(%arg0: i32, %arg1: memref<16x512xbf16, #tpu.memory_space<vmem>>, %arg2: memref<4x16xbf16, #tpu.memory_space<vmem>>, %arg3: memref<4x1xf32, #tpu.memory_space<vmem>>, %arg4: memref<4x4xbf16, #tpu.memory_space<vmem>>, %arg5: memref<4x1xf32, #tpu.memory_space<vmem>>, %arg6: memref<4x512xf32, #tpu.memory_space<vmem>>, %arg7: memref<4x512xf32, #tpu.memory_space<vmem>>) attributes {dimension_semantics = [#tpu.dimension_semantics<parallel>], iteration_bounds = array<i64: 1>, scalar_prefetch = 0 : i64, scratch_operands = 0 : i64, tpu.core_type = #tpu.core_type<tc>, window_params = [{transform_indices = @transform_0, window_bounds = array<i64: 16, 512>}, {pipeline_mode = #tpu.pipeline_mode<synchronous>, transform_indices = @transform_1, window_bounds = array<i64: 4, 16>}, {pipeline_mode = #tpu.pipeline_mode<synchronous>, transform_indices = @transform_2, window_bounds = array<i64: 4, 1>}, {pipeline_mode = #tpu.pipeline_mode<synchronous>, transform_indices = @transform_3, window_bounds = array<i64: 4, 4>}, {pipeline_mode = #tpu.pipeline_mode<synchronous>, transform_indices = @transform_4, window_bounds = array<i64: 4, 1>}, {transform_indices = @transform_5, window_bounds = array<i64: 4, 512>}, {transform_indices = @transform_6, window_bounds = array<i64: 4, 512>}]} {
    %c0 = arith.constant 0 : index
    %c0_0 = arith.constant 0 : index
    %0 = vector.load %arg2[%c0, %c0_0] : memref<4x16xbf16, #tpu.memory_space<vmem>>, vector<4x16xbf16>
    %c0_1 = arith.constant 0 : index
    %c0_2 = arith.constant 0 : index
    %1 = vector.load %arg1[%c0_1, %c0_2] : memref<16x512xbf16, #tpu.memory_space<vmem>>, vector<16x512xbf16>
    %cst = arith.constant dense<0.000000e+00> : vector<4x512xf32>
    %2 = tpu.matmul %0, %1, %cst {dimension_numbers = #tpu.dot_dimension_numbers<[1], [0], [0], [1], [0, 0, 1, 1], [], []>} : vector<4x16xbf16>, vector<16x512xbf16>, vector<4x512xf32> -> vector<4x512xf32>
    %c0_3 = arith.constant 0 : index
    %c0_4 = arith.constant 0 : index
    %3 = vector.load %arg3[%c0_3, %c0_4] : memref<4x1xf32, #tpu.memory_space<vmem>>, vector<4x1xf32>
    %4 = vector.broadcast %3 : vector<4x1xf32> to vector<4x512xf32>
    %5 = arith.addf %2, %4 : vector<4x512xf32>
    %c0_5 = arith.constant 0 : index
    %c0_6 = arith.constant 0 : index
    %6 = vector.load %arg6[%c0_5, %c0_6] : memref<4x512xf32, #tpu.memory_space<vmem>>, vector<4x512xf32>
    tpu.vector_store %arg6[%c0_5, %c0_6], %5 {strides = array<i32>} : memref<4x512xf32, #tpu.memory_space<vmem>>, vector<4x512xf32>,
    %c0_7 = arith.constant 0 : index
    %c0_8 = arith.constant 0 : index
    %7 = vector.load %arg4[%c0_7, %c0_8] : memref<4x4xbf16, #tpu.memory_space<vmem>>, vector<4x4xbf16>
    %8 = arith.truncf %5 : vector<4x512xf32> to vector<4x512xbf16>
    %cst_9 = arith.constant dense<0.000000e+00> : vector<4x512xf32>
    %9 = tpu.matmul %7, %8, %cst_9 {dimension_numbers = #tpu.dot_dimension_numbers<[1], [0], [0], [1], [0, 0, 1, 1], [], []>} : vector<4x4xbf16>, vector<4x512xbf16>, vector<4x512xf32> -> vector<4x512xf32>
    %c0_10 = arith.constant 0 : index
    %c0_11 = arith.constant 0 : index
    %10 = vector.load %arg5[%c0_10, %c0_11] : memref<4x1xf32, #tpu.memory_space<vmem>>, vector<4x1xf32>
    %11 = vector.broadcast %10 : vector<4x1xf32> to vector<4x512xf32>
    %12 = arith.addf %9, %11 : vector<4x512xf32>
    %c0_12 = arith.constant 0 : index
    %c0_13 = arith.constant 0 : index
    %13 = vector.load %arg7[%c0_12, %c0_13] : memref<4x512xf32, #tpu.memory_space<vmem>>, vector<4x512xf32>
    tpu.vector_store %arg7[%c0_12, %c0_13], %12 {strides = array<i32>} : memref<4x512xf32, #tpu.memory_space<vmem>>, vector<4x512xf32>,
    return
  }
  func.func @transform_0(%arg0: i32) -> (i32, i32) {
    %c0_i32 = arith.constant 0 : i32
    %c0_i32_0 = arith.constant 0 : i32
    return %c0_i32, %arg0 : i32, i32
  }
  func.func @transform_1(%arg0: i32) -> (i32, i32) {
    %c0_i32 = arith.constant 0 : i32
    %c0_i32_0 = arith.constant 0 : i32
    %c0_i32_1 = arith.constant 0 : i32
    return %c0_i32, %c0_i32_0 : i32, i32
  }
  func.func @transform_2(%arg0: i32) -> (i32, i32) {
    %c0_i32 = arith.constant 0 : i32
    %c0_i32_0 = arith.constant 0 : i32
    %c0_i32_1 = arith.constant 0 : i32
    return %c0_i32, %c0_i32_0 : i32, i32
  }
  func.func @transform_3(%arg0: i32) -> (i32, i32) {
    %c0_i32 = arith.constant 0 : i32
    %c0_i32_0 = arith.constant 0 : i32
    %c0_i32_1 = arith.constant 0 : i32
    return %c0_i32, %c0_i32_0 : i32, i32
  }
  func.func @transform_4(%arg0: i32) -> (i32, i32) {
    %c0_i32 = arith.constant 0 : i32
    %c0_i32_0 = arith.constant 0 : i32
    %c0_i32_1 = arith.constant 0 : i32
    return %c0_i32, %c0_i32_0 : i32, i32
  }
  func.func @transform_5(%arg0: i32) -> (i32, i32) {
    %c0_i32 = arith.constant 0 : i32
    %c0_i32_0 = arith.constant 0 : i32
    return %c0_i32, %arg0 : i32, i32
  }
  func.func @transform_6(%arg0: i32) -> (i32, i32) {
    %c0_i32 = arith.constant 0 : i32
    %c0_i32_0 = arith.constant 0 : i32
    return %c0_i32, %arg0 : i32, i32
  }
}

module attributes {stable_mosaic.version = 11 : i64} {
  func.func @_mm_kernel(%arg0: i32, %arg1: memref<4x36xbf16, #tpu.memory_space<vmem>>, %arg2: memref<36x128xbf16, #tpu.memory_space<vmem>>, %arg3: memref<4x1xf32, #tpu.memory_space<vmem>>, %arg4: memref<4x128xf32, #tpu.memory_space<vmem>>) attributes {dimension_semantics = [#tpu.dimension_semantics<parallel>], iteration_bounds = array<i64: 1>, scalar_prefetch = 0 : i64, scratch_operands = 0 : i64, tpu.core_type = #tpu.core_type<tc>, window_params = [{pipeline_mode = #tpu.pipeline_mode<synchronous>, transform_indices = @transform_0, window_bounds = array<i64: 4, 36>}, {transform_indices = @transform_1, window_bounds = array<i64: 36, 128>}, {pipeline_mode = #tpu.pipeline_mode<synchronous>, transform_indices = @transform_2, window_bounds = array<i64: 4, 1>}, {transform_indices = @transform_3, window_bounds = array<i64: 4, 128>}]} {
    %c0 = arith.constant 0 : index
    %c0_0 = arith.constant 0 : index
    %0 = vector.load %arg2[%c0, %c0_0] : memref<36x128xbf16, #tpu.memory_space<vmem>>, vector<36x128xbf16>
    %c0_1 = arith.constant 0 : index
    %c0_2 = arith.constant 0 : index
    %1 = vector.load %arg1[%c0_1, %c0_2] : memref<4x36xbf16, #tpu.memory_space<vmem>>, vector<4x36xbf16>
    %cst = arith.constant dense<0.000000e+00> : vector<4x128xf32>
    %2 = tpu.matmul %1, %0, %cst {dimension_numbers = #tpu.dot_dimension_numbers<[1], [0], [0], [1], [0, 0, 1, 1], [], []>} : vector<4x36xbf16>, vector<36x128xbf16>, vector<4x128xf32> -> vector<4x128xf32>
    %c0_3 = arith.constant 0 : index
    %c0_4 = arith.constant 0 : index
    %3 = vector.load %arg3[%c0_3, %c0_4] : memref<4x1xf32, #tpu.memory_space<vmem>>, vector<4x1xf32>
    %4 = vector.broadcast %3 : vector<4x1xf32> to vector<4x128xf32>
    %5 = arith.addf %2, %4 : vector<4x128xf32>
    %c0_5 = arith.constant 0 : index
    %c0_6 = arith.constant 0 : index
    %6 = vector.load %arg4[%c0_5, %c0_6] : memref<4x128xf32, #tpu.memory_space<vmem>>, vector<4x128xf32>
    tpu.vector_store %arg4[%c0_5, %c0_6], %5 {strides = array<i32>} : memref<4x128xf32, #tpu.memory_space<vmem>>, vector<4x128xf32>,
    return
  }
  func.func @transform_0(%arg0: i32) -> (i32, i32) {
    %c0_i32 = arith.constant 0 : i32
    %c0_i32_0 = arith.constant 0 : i32
    %c0_i32_1 = arith.constant 0 : i32
    return %c0_i32, %c0_i32_0 : i32, i32
  }
  func.func @transform_1(%arg0: i32) -> (i32, i32) {
    %c0_i32 = arith.constant 0 : i32
    %c0_i32_0 = arith.constant 0 : i32
    return %c0_i32, %arg0 : i32, i32
  }
  func.func @transform_2(%arg0: i32) -> (i32, i32) {
    %c0_i32 = arith.constant 0 : i32
    %c0_i32_0 = arith.constant 0 : i32
    %c0_i32_1 = arith.constant 0 : i32
    return %c0_i32, %c0_i32_0 : i32, i32
  }
  func.func @transform_3(%arg0: i32) -> (i32, i32) {
    %c0_i32 = arith.constant 0 : i32
    %c0_i32_0 = arith.constant 0 : i32
    return %c0_i32, %arg0 : i32, i32
  }
}

module attributes {stable_mosaic.version = 11 : i64} {
  func.func @_colmax_kernel(%arg0: i32, %arg1: memref<49x128xf32, #tpu.memory_space<vmem>>, %arg2: memref<1x128xf32, #tpu.memory_space<vmem>>) attributes {dimension_semantics = [#tpu.dimension_semantics<parallel>], iteration_bounds = array<i64: 1>, scalar_prefetch = 0 : i64, scratch_operands = 0 : i64, tpu.core_type = #tpu.core_type<tc>, window_params = [{transform_indices = @transform_0, window_bounds = array<i64: 49, 128>}, {transform_indices = @transform_1, window_bounds = array<i64: 1, 128>}]} {
    %c0 = arith.constant 0 : index
    %c0_0 = arith.constant 0 : index
    %0 = vector.load %arg1[%c0, %c0_0] : memref<49x128xf32, #tpu.memory_space<vmem>>, vector<49x128xf32>
    %cst = arith.constant dense<0xFF800000> : vector<128xf32>
    %1 = vector.multi_reduction <maximumf>, %0, %cst [0] : vector<49x128xf32> to vector<128xf32>
    %2 = vector.shape_cast %1 : vector<128xf32> to vector<1x128xf32>
    %c0_1 = arith.constant 0 : index
    %c0_2 = arith.constant 0 : index
    %3 = vector.load %arg2[%c0_1, %c0_2] : memref<1x128xf32, #tpu.memory_space<vmem>>, vector<1x128xf32>
    tpu.vector_store %arg2[%c0_1, %c0_2], %2 {strides = array<i32>} : memref<1x128xf32, #tpu.memory_space<vmem>>, vector<1x128xf32>,
    return
  }
  func.func @transform_0(%arg0: i32) -> (i32, i32) {
    %c0_i32 = arith.constant 0 : i32
    %c0_i32_0 = arith.constant 0 : i32
    return %c0_i32, %arg0 : i32, i32
  }
  func.func @transform_1(%arg0: i32) -> (i32, i32) {
    %c0_i32 = arith.constant 0 : i32
    %c0_i32_0 = arith.constant 0 : i32
    return %c0_i32, %arg0 : i32, i32
  }
}

module attributes {stable_mosaic.version = 11 : i64} {
  func.func @_mm_kernel(%arg0: i32, %arg1: memref<4x36xbf16, #tpu.memory_space<vmem>>, %arg2: memref<36x128xbf16, #tpu.memory_space<vmem>>, %arg3: memref<4x1xf32, #tpu.memory_space<vmem>>, %arg4: memref<4x128xf32, #tpu.memory_space<vmem>>) attributes {dimension_semantics = [#tpu.dimension_semantics<parallel>], iteration_bounds = array<i64: 1>, scalar_prefetch = 0 : i64, scratch_operands = 0 : i64, tpu.core_type = #tpu.core_type<tc>, window_params = [{pipeline_mode = #tpu.pipeline_mode<synchronous>, transform_indices = @transform_0, window_bounds = array<i64: 4, 36>}, {transform_indices = @transform_1, window_bounds = array<i64: 36, 128>}, {pipeline_mode = #tpu.pipeline_mode<synchronous>, transform_indices = @transform_2, window_bounds = array<i64: 4, 1>}, {transform_indices = @transform_3, window_bounds = array<i64: 4, 128>}]} {
    %c0 = arith.constant 0 : index
    %c0_0 = arith.constant 0 : index
    %0 = vector.load %arg2[%c0, %c0_0] : memref<36x128xbf16, #tpu.memory_space<vmem>>, vector<36x128xbf16>
    %c0_1 = arith.constant 0 : index
    %c0_2 = arith.constant 0 : index
    %1 = vector.load %arg1[%c0_1, %c0_2] : memref<4x36xbf16, #tpu.memory_space<vmem>>, vector<4x36xbf16>
    %cst = arith.constant dense<0.000000e+00> : vector<4x128xf32>
    %2 = tpu.matmul %1, %0, %cst {dimension_numbers = #tpu.dot_dimension_numbers<[1], [0], [0], [1], [0, 0, 1, 1], [], []>} : vector<4x36xbf16>, vector<36x128xbf16>, vector<4x128xf32> -> vector<4x128xf32>
    %c0_3 = arith.constant 0 : index
    %c0_4 = arith.constant 0 : index
    %3 = vector.load %arg3[%c0_3, %c0_4] : memref<4x1xf32, #tpu.memory_space<vmem>>, vector<4x1xf32>
    %4 = vector.broadcast %3 : vector<4x1xf32> to vector<4x128xf32>
    %5 = arith.addf %2, %4 : vector<4x128xf32>
    %cst_5 = arith.constant 0.000000e+00 : f32
    %6 = vector.broadcast %cst_5 : f32 to vector<4x128xf32>
    %7 = arith.maximumf %5, %6 : vector<4x128xf32>
    %c0_6 = arith.constant 0 : index
    %c0_7 = arith.constant 0 : index
    %8 = vector.load %arg4[%c0_6, %c0_7] : memref<4x128xf32, #tpu.memory_space<vmem>>, vector<4x128xf32>
    tpu.vector_store %arg4[%c0_6, %c0_7], %7 {strides = array<i32>} : memref<4x128xf32, #tpu.memory_space<vmem>>, vector<4x128xf32>,
    return
  }
  func.func @transform_0(%arg0: i32) -> (i32, i32) {
    %c0_i32 = arith.constant 0 : i32
    %c0_i32_0 = arith.constant 0 : i32
    %c0_i32_1 = arith.constant 0 : i32
    return %c0_i32, %c0_i32_0 : i32, i32
  }
  func.func @transform_1(%arg0: i32) -> (i32, i32) {
    %c0_i32 = arith.constant 0 : i32
    %c0_i32_0 = arith.constant 0 : i32
    return %c0_i32, %arg0 : i32, i32
  }
  func.func @transform_2(%arg0: i32) -> (i32, i32) {
    %c0_i32 = arith.constant 0 : i32
    %c0_i32_0 = arith.constant 0 : i32
    %c0_i32_1 = arith.constant 0 : i32
    return %c0_i32, %c0_i32_0 : i32, i32
  }
  func.func @transform_3(%arg0: i32) -> (i32, i32) {
    %c0_i32 = arith.constant 0 : i32
    %c0_i32_0 = arith.constant 0 : i32
    return %c0_i32, %arg0 : i32, i32
  }
}

module attributes {stable_mosaic.version = 11 : i64} {
  func.func @_fusion_kernel(%arg0: i32, %arg1: memref<16x16xbf16, #tpu.memory_space<vmem>>, %arg2: memref<16x512xbf16, #tpu.memory_space<vmem>>, %arg3: memref<16x16xbf16, #tpu.memory_space<vmem>>, %arg4: memref<16x512xbf16, #tpu.memory_space<vmem>>, %arg5: memref<16x1xf32, #tpu.memory_space<vmem>>, %arg6: memref<16x512xf32, #tpu.memory_space<vmem>>, %arg7: memref<16x512xf32, #tpu.memory_space<vmem>>) attributes {dimension_semantics = [#tpu.dimension_semantics<parallel>], iteration_bounds = array<i64: 1>, scalar_prefetch = 0 : i64, scratch_operands = 0 : i64, tpu.core_type = #tpu.core_type<tc>, window_params = [{pipeline_mode = #tpu.pipeline_mode<synchronous>, transform_indices = @transform_0, window_bounds = array<i64: 16, 16>}, {transform_indices = @transform_1, window_bounds = array<i64: 16, 512>}, {pipeline_mode = #tpu.pipeline_mode<synchronous>, transform_indices = @transform_2, window_bounds = array<i64: 16, 16>}, {transform_indices = @transform_3, window_bounds = array<i64: 16, 512>}, {pipeline_mode = #tpu.pipeline_mode<synchronous>, transform_indices = @transform_4, window_bounds = array<i64: 16, 1>}, {transform_indices = @transform_5, window_bounds = array<i64: 16, 512>}, {transform_indices = @transform_6, window_bounds = array<i64: 16, 512>}]} {
    %c0 = arith.constant 0 : index
    %c0_0 = arith.constant 0 : index
    %0 = vector.load %arg1[%c0, %c0_0] : memref<16x16xbf16, #tpu.memory_space<vmem>>, vector<16x16xbf16>
    %c0_1 = arith.constant 0 : index
    %c0_2 = arith.constant 0 : index
    %1 = vector.load %arg2[%c0_1, %c0_2] : memref<16x512xbf16, #tpu.memory_space<vmem>>, vector<16x512xbf16>
    %cst = arith.constant dense<0.000000e+00> : vector<16x512xf32>
    %2 = tpu.matmul %0, %1, %cst {dimension_numbers = #tpu.dot_dimension_numbers<[1], [0], [0], [1], [0, 0, 1, 1], [], []>} : vector<16x16xbf16>, vector<16x512xbf16>, vector<16x512xf32> -> vector<16x512xf32>
    %c0_3 = arith.constant 0 : index
    %c0_4 = arith.constant 0 : index
    %3 = vector.load %arg3[%c0_3, %c0_4] : memref<16x16xbf16, #tpu.memory_space<vmem>>, vector<16x16xbf16>
    %c0_5 = arith.constant 0 : index
    %c0_6 = arith.constant 0 : index
    %4 = vector.load %arg4[%c0_5, %c0_6] : memref<16x512xbf16, #tpu.memory_space<vmem>>, vector<16x512xbf16>
    %cst_7 = arith.constant dense<0.000000e+00> : vector<16x512xf32>
    %5 = tpu.matmul %3, %4, %cst_7 {dimension_numbers = #tpu.dot_dimension_numbers<[1], [0], [0], [1], [0, 0, 1, 1], [], []>} : vector<16x16xbf16>, vector<16x512xbf16>, vector<16x512xf32> -> vector<16x512xf32>
    %6 = arith.addf %2, %5 : vector<16x512xf32>
    %c0_8 = arith.constant 0 : index
    %c0_9 = arith.constant 0 : index
    %7 = vector.load %arg5[%c0_8, %c0_9] : memref<16x1xf32, #tpu.memory_space<vmem>>, vector<16x1xf32>
    %8 = vector.broadcast %7 : vector<16x1xf32> to vector<16x512xf32>
    %9 = arith.addf %6, %8 : vector<16x512xf32>
    %c0_10 = arith.constant 0 : index
    %c0_11 = arith.constant 0 : index
    %10 = vector.load %arg6[%c0_10, %c0_11] : memref<16x512xf32, #tpu.memory_space<vmem>>, vector<16x512xf32>
    %11 = arith.addf %9, %10 : vector<16x512xf32>
    %c0_12 = arith.constant 0 : index
    %c0_13 = arith.constant 0 : index
    %12 = vector.load %arg7[%c0_12, %c0_13] : memref<16x512xf32, #tpu.memory_space<vmem>>, vector<16x512xf32>
    tpu.vector_store %arg7[%c0_12, %c0_13], %11 {strides = array<i32>} : memref<16x512xf32, #tpu.memory_space<vmem>>, vector<16x512xf32>,
    return
  }
  func.func @transform_0(%arg0: i32) -> (i32, i32) {
    %c0_i32 = arith.constant 0 : i32
    %c0_i32_0 = arith.constant 0 : i32
    %c0_i32_1 = arith.constant 0 : i32
    return %c0_i32, %c0_i32_0 : i32, i32
  }
  func.func @transform_1(%arg0: i32) -> (i32, i32) {
    %c0_i32 = arith.constant 0 : i32
    %c0_i32_0 = arith.constant 0 : i32
    return %c0_i32, %arg0 : i32, i32
  }
  func.func @transform_2(%arg0: i32) -> (i32, i32) {
    %c0_i32 = arith.constant 0 : i32
    %c0_i32_0 = arith.constant 0 : i32
    %c0_i32_1 = arith.constant 0 : i32
    return %c0_i32, %c0_i32_0 : i32, i32
  }
  func.func @transform_3(%arg0: i32) -> (i32, i32) {
    %c0_i32 = arith.constant 0 : i32
    %c0_i32_0 = arith.constant 0 : i32
    return %c0_i32, %arg0 : i32, i32
  }
  func.func @transform_4(%arg0: i32) -> (i32, i32) {
    %c0_i32 = arith.constant 0 : i32
    %c0_i32_0 = arith.constant 0 : i32
    %c0_i32_1 = arith.constant 0 : i32
    return %c0_i32, %c0_i32_0 : i32, i32
  }
  func.func @transform_5(%arg0: i32) -> (i32, i32) {
    %c0_i32 = arith.constant 0 : i32
    %c0_i32_0 = arith.constant 0 : i32
    return %c0_i32, %arg0 : i32, i32
  }
  func.func @transform_6(%arg0: i32) -> (i32, i32) {
    %c0_i32 = arith.constant 0 : i32
    %c0_i32_0 = arith.constant 0 : i32
    return %c0_i32, %arg0 : i32, i32
  }
}

module attributes {stable_mosaic.version = 11 : i64} {
  func.func @_mm_kernel(%arg0: i32, %arg1: memref<16x4xbf16, #tpu.memory_space<vmem>>, %arg2: memref<4x512xbf16, #tpu.memory_space<vmem>>, %arg3: memref<16x1xf32, #tpu.memory_space<vmem>>, %arg4: memref<4x512xbf16, #tpu.memory_space<vmem>>, %arg5: memref<16x512xf32, #tpu.memory_space<vmem>>, %arg6: memref<16x512xf32, #tpu.memory_space<vmem>>) attributes {dimension_semantics = [#tpu.dimension_semantics<parallel>], iteration_bounds = array<i64: 1>, scalar_prefetch = 0 : i64, scratch_operands = 0 : i64, tpu.core_type = #tpu.core_type<tc>, window_params = [{pipeline_mode = #tpu.pipeline_mode<synchronous>, transform_indices = @transform_0, window_bounds = array<i64: 16, 4>}, {transform_indices = @transform_1, window_bounds = array<i64: 4, 512>}, {pipeline_mode = #tpu.pipeline_mode<synchronous>, transform_indices = @transform_2, window_bounds = array<i64: 16, 1>}, {transform_indices = @transform_3, window_bounds = array<i64: 4, 512>}, {transform_indices = @transform_4, window_bounds = array<i64: 16, 512>}, {transform_indices = @transform_5, window_bounds = array<i64: 16, 512>}]} {
    %c0 = arith.constant 0 : index
    %c0_0 = arith.constant 0 : index
    %0 = vector.load %arg2[%c0, %c0_0] : memref<4x512xbf16, #tpu.memory_space<vmem>>, vector<4x512xbf16>
    %c0_1 = arith.constant 0 : index
    %c0_2 = arith.constant 0 : index
    %1 = vector.load %arg4[%c0_1, %c0_2] : memref<4x512xbf16, #tpu.memory_space<vmem>>, vector<4x512xbf16>
    %2 = arith.addf %0, %1 : vector<4x512xbf16>
    %c0_3 = arith.constant 0 : index
    %c0_4 = arith.constant 0 : index
    %3 = vector.load %arg1[%c0_3, %c0_4] : memref<16x4xbf16, #tpu.memory_space<vmem>>, vector<16x4xbf16>
    %cst = arith.constant dense<0.000000e+00> : vector<16x512xf32>
    %4 = tpu.matmul %3, %2, %cst {dimension_numbers = #tpu.dot_dimension_numbers<[1], [0], [0], [1], [0, 0, 1, 1], [], []>} : vector<16x4xbf16>, vector<4x512xbf16>, vector<16x512xf32> -> vector<16x512xf32>
    %c0_5 = arith.constant 0 : index
    %c0_6 = arith.constant 0 : index
    %5 = vector.load %arg3[%c0_5, %c0_6] : memref<16x1xf32, #tpu.memory_space<vmem>>, vector<16x1xf32>
    %6 = vector.broadcast %5 : vector<16x1xf32> to vector<16x512xf32>
    %7 = arith.addf %4, %6 : vector<16x512xf32>
    %8 = arith.negf %7 : vector<16x512xf32>
    %9 = math.exp %8 : vector<16x512xf32>
    %cst_7 = arith.constant 1.000000e+00 : f32
    %10 = vector.broadcast %cst_7 : f32 to vector<16x512xf32>
    %11 = arith.addf %10, %9 : vector<16x512xf32>
    %12 = arith.divf %10, %11 : vector<16x512xf32>
    %c0_8 = arith.constant 0 : index
    %c0_9 = arith.constant 0 : index
    %13 = vector.load %arg5[%c0_8, %c0_9] : memref<16x512xf32, #tpu.memory_space<vmem>>, vector<16x512xf32>
    %14 = arith.mulf %12, %13 : vector<16x512xf32>
    %c0_10 = arith.constant 0 : index
    %c0_11 = arith.constant 0 : index
    %15 = vector.load %arg6[%c0_10, %c0_11] : memref<16x512xf32, #tpu.memory_space<vmem>>, vector<16x512xf32>
    tpu.vector_store %arg6[%c0_10, %c0_11], %14 {strides = array<i32>} : memref<16x512xf32, #tpu.memory_space<vmem>>, vector<16x512xf32>,
    return
  }
  func.func @transform_0(%arg0: i32) -> (i32, i32) {
    %c0_i32 = arith.constant 0 : i32
    %c0_i32_0 = arith.constant 0 : i32
    %c0_i32_1 = arith.constant 0 : i32
    return %c0_i32, %c0_i32_0 : i32, i32
  }
  func.func @transform_1(%arg0: i32) -> (i32, i32) {
    %c0_i32 = arith.constant 0 : i32
    %c0_i32_0 = arith.constant 0 : i32
    return %c0_i32, %arg0 : i32, i32
  }
  func.func @transform_2(%arg0: i32) -> (i32, i32) {
    %c0_i32 = arith.constant 0 : i32
    %c0_i32_0 = arith.constant 0 : i32
    %c0_i32_1 = arith.constant 0 : i32
    return %c0_i32, %c0_i32_0 : i32, i32
  }
  func.func @transform_3(%arg0: i32) -> (i32, i32) {
    %c0_i32 = arith.constant 0 : i32
    %c0_i32_0 = arith.constant 0 : i32
    return %c0_i32, %arg0 : i32, i32
  }
  func.func @transform_4(%arg0: i32) -> (i32, i32) {
    %c0_i32 = arith.constant 0 : i32
    %c0_i32_0 = arith.constant 0 : i32
    return %c0_i32, %arg0 : i32, i32
  }
  func.func @transform_5(%arg0: i32) -> (i32, i32) {
    %c0_i32 = arith.constant 0 : i32
    %c0_i32_0 = arith.constant 0 : i32
    return %c0_i32, %arg0 : i32, i32
  }
}

</mosaic_0001>

<llo_original>
// kernel: ssamc_forward.11
$region0: #{ssamc_forward.11}
  #allocation0 [shape = 'u32[]', space=smem, size = 0x4, offset = 0x4, fixed_abs, tag = 'smem constant byte address 0x4 - core index']
  #allocation1 [shape = 'u32[144,128]{1,0:T(1,128)}', space=vmem, size = 0x12000, scoped, tag = 'internal scratch']
  %s0 = inlined_call_operand.vmem [shape: bf16[16,32], index: 0, kind: input, shape index: {}]
  %s1 = inlined_call_operand.vmem [shape: bf16[32,512], index: 1, kind: input, shape index: {}]
  %s2 = inlined_call_operand.vmem [shape: f32[16,1], index: 2, kind: input, shape index: {}]
  %s3 = inlined_call_operand.vmem [shape: f32[16,512], index: 3, kind: output, shape index: {}]
  %s4 = sld [smem:[#allocation0]]
  $region22: #{ssamc_forward.11} parent=0
    _
  %s6 = ssub.s32 1, %s4
  %s7 = scalar_select 0, %s6, %s4
  // Predicated region
  $region2: #{ssamc_forward.11} parent=0 // pred_check
    _
  $region3: #{ssamc_forward.11} parent=0 // pred_check_branch
    %9 = sbr.rel (0) target = $region5
  $region4: #{ssamc_forward.11} parent=0 // pred_region
    _
  $region5: #{ssamc_forward.11} parent=0 // pred_fallthru
    _
  // Predicated region
  $region6: #{ssamc_forward.11} parent=0 // pred_check
    _
  $region7: #{ssamc_forward.11} parent=0 // pred_check_branch
    %11 = sbr.rel (0) target = $region9
  $region8: #{ssamc_forward.11} parent=0 // pred_region
    _
  $region9: #{ssamc_forward.11} parent=0 // pred_fallthru
    _
  // Predicated region
  $region10: #{ssamc_forward.11} parent=0 // pred_check
    _
  $region11: #{ssamc_forward.11} parent=0 // pred_check_branch
    %13 = sbr.rel (0) target = $region13
  $region12: #{ssamc_forward.11} parent=0 // pred_region
    _
  $region13: #{ssamc_forward.11} parent=0 // pred_fallthru
    _
  %v15 = vld [vmem:[%s1] sm:$0xff]
  %v16 = vld [vmem:[%s1 + $0x8] sm:$0xff]
  %v17 = vld [vmem:[%s1 + $0x10] sm:$0xff]
  %v18 = vld [vmem:[%s1 + $0x18] sm:$0xff]
  %v19 = vld [vmem:[%s1 + $0x20] sm:$0xff]
  %v20 = vld [vmem:[%s1 + $0x28] sm:$0xff]
  %v21 = vld [vmem:[%s1 + $0x30] sm:$0xff]
  %v22 = vld [vmem:[%s1 + $0x38] sm:$0xff]
  %v23 = vld [vmem:[%s0] sm:$0xf]
  %v24 = vld [vmem:[%s0 + $0x4] sm:$0xf]
  %v25 = vld [vmem:[%s2] sm:$0xff]
  %v26 = vld [vmem:[%s2 + $0x8] sm:$0xff]
  %28 = vset.pattern.permute.xlu0 0
  %29 = vperm.xlu0 %28, %v25
  %v30 = vpop.permute.xlu0 %29
  %33 = vset.pattern.permute.xlu0 0
  %34 = vperm.xlu0 %33, %v26
  %v35 = vpop.permute.xlu0 %34
  %v39 = vunpack.c.l.b16 %v23
  %v40 = vunpack.c.l.b16 %v24
  %v41 = vpack.c.b16 %v40, %v39
  %v50 = vunpack.c.l.b16 %v15
  %v51 = vunpack.c.h.b16 %v15
  %v52 = vunpack.c.l.b16 %v16
  %v53 = vunpack.c.h.b16 %v16
  %v54 = vunpack.c.l.b16 %v17
  %v55 = vunpack.c.h.b16 %v17
  %v56 = vunpack.c.l.b16 %v18
  %v57 = vunpack.c.h.b16 %v18
  %v58 = vunpack.c.l.b16 %v19
  %v59 = vunpack.c.h.b16 %v19
  %v60 = vunpack.c.l.b16 %v20
  %v61 = vunpack.c.h.b16 %v20
  %v62 = vunpack.c.l.b16 %v21
  %v63 = vunpack.c.h.b16 %v21
  %v64 = vunpack.c.l.b16 %v22
  %v65 = vunpack.c.h.b16 %v22
  %v66 = vpack.c.b16 %v54, %v50
  %v67 = vpack.c.b16 %v55, %v51
  %v68 = vpack.c.b16 %v56, %v52
  %v69 = vpack.c.b16 %v57, %v53
  %v70 = vpack.c.b16 %v62, %v58
  %v71 = vpack.c.b16 %v63, %v59
  %v72 = vpack.c.b16 %v64, %v60
  %v73 = vpack.c.b16 %v65, %v61
  %vm82 = vcmask 261120
  %v84 = vsel %vm82, %v41, 0
  %86 = vmatprep.subr.bf16.mxu0 0
  %87 = vmatpush1.bf16.msra.mxu0 0
  %88 = vmatprep.subr.bf16.mxu0 0
  %89 = vmatpush1.bf16.msra.mxu0 0
  %90 = vmatprep.subr.bf16.mxu0 0
  %91 = vmatpush1.bf16.msra.mxu0 0
  %92 = vmatprep.subr.bf16.mxu0 0
  %93 = vmatpush1.bf16.msra.mxu0 0
  %94 = vmatprep.subr.bf16.mxu0 0
  %95 = vmatpush1.bf16.msra.mxu0 0
  %96 = vmatprep.subr.bf16.mxu0 0
  %97 = vmatpush1.bf16.msra.mxu0 0
  %98 = vmatprep.subr.bf16.mxu0 %v71
  %99 = vmatpush1.bf16.msra.mxu0 %v70
  %100 = vmatprep.subr.bf16.mxu0 %v67
  %101 = vmatpush1.bf16.msra.mxu0 %v66
  %102 = vmatprep.subr.bf16.mxu0 0
  %103 = vmatpush2.bf16.msra.mxu0 0
  %104 = vmatprep.subr.bf16.mxu0 0
  %105 = vmatpush2.bf16.msra.mxu0 0
  %106 = vmatprep.subr.bf16.mxu0 0
  %107 = vmatpush2.bf16.msra.mxu0 0
  %108 = vmatprep.subr.bf16.mxu0 0
  %109 = vmatpush2.bf16.msra.mxu0 0
  %110 = vmatprep.subr.bf16.mxu0 0
  %111 = vmatpush2.bf16.msra.mxu0 0
  %112 = vmatprep.subr.bf16.mxu0 0
  %113 = vmatpush2.bf16.msra.mxu0 0
  %114 = vmatprep.subr.bf16.mxu0 0
  %115 = vmatpush2.bf16.msra.mxu0 0
  %116 = vmatprep.subr.bf16.mxu0 0
  %117 = vmatpush2.bf16.msra.mxu0 0
  %118 = vmatprep.mubr.bf16.mxu0 0
  %119 = vmatmul.mubr.bf16.gmra.mxu0 %v84
  %v120 = vpop.f32.mrf.mxu0
  %v121 = vadd.f32 %v30, %v120
  %v122 = vpop.f32.mrf.mxu0
  %v123 = vadd.f32 %v30, %v122
  %v124 = vpop.f32.mrf.mxu0
  %v125 = vadd.f32 %v35, %v124
  %v126 = vpop.f32.mrf.mxu0
  %v127 = vadd.f32 %v35, %v126
  %128 = vdwg.mxu0
  %129 = vmatprep.subr.bf16.mxu0 0
  %130 = vmatpush1.bf16.msra.mxu0 0
  %131 = vmatprep.subr.bf16.mxu0 0
  %132 = vmatpush1.bf16.msra.mxu0 0
  %133 = vmatprep.subr.bf16.mxu0 0
  %134 = vmatpush1.bf16.msra.mxu0 0
  %135 = vmatprep.subr.bf16.mxu0 0
  %136 = vmatpush1.bf16.msra.mxu0 0
  %137 = vmatprep.subr.bf16.mxu0 0
  %138 = vmatpush1.bf16.msra.mxu0 0
  %139 = vmatprep.subr.bf16.mxu0 0
  %140 = vmatpush1.bf16.msra.mxu0 0
  %141 = vmatprep.subr.bf16.mxu0 %v73
  %142 = vmatpush1.bf16.msra.mxu0 %v72
  %143 = vmatprep.subr.bf16.mxu0 %v69
  %144 = vmatpush1.bf16.msra.mxu0 %v68
  %145 = vmatprep.subr.bf16.mxu0 0
  %146 = vmatpush2.bf16.msra.mxu0 0
  %147 = vmatprep.subr.bf16.mxu0 0
  %148 = vmatpush2.bf16.msra.mxu0 0
  %149 = vmatprep.subr.bf16.mxu0 0
  %150 = vmatpush2.bf16.msra.mxu0 0
  %151 = vmatprep.subr.bf16.mxu0 0
  %152 = vmatpush2.bf16.msra.mxu0 0
  %153 = vmatprep.subr.bf16.mxu0 0
  %154 = vmatpush2.bf16.msra.mxu0 0
  %155 = vmatprep.subr.bf16.mxu0 0
  %156 = vmatpush2.bf16.msra.mxu0 0
  %157 = vmatprep.subr.bf16.mxu0 0
  %158 = vmatpush2.bf16.msra.mxu0 0
  %159 = vmatprep.subr.bf16.mxu0 0
  %160 = vmatpush2.bf16.msra.mxu0 0
  %161 = vmatprep.mubr.bf16.mxu0 0
  %162 = vmatmul.mubr.bf16.gmra.mxu0 %v84
  %v163 = vpop.f32.mrf.mxu0
  %v164 = vadd.f32 %v30, %v163
  %v165 = vpop.f32.mrf.mxu0
  %v166 = vadd.f32 %v30, %v165
  %v167 = vpop.f32.mrf.mxu0
  %v168 = vadd.f32 %v35, %v167
  %v169 = vpop.f32.mrf.mxu0
  %v170 = vadd.f32 %v35, %v169
  %171 = vdwg.mxu0
  %172 = vst [vmem:[%s3] sm:$0xff] %v121
  %173 = vst [vmem:[%s3 + $0x8] sm:$0xff] %v123
  %174 = vst [vmem:[%s3 + $0x10] sm:$0xff] %v164
  %175 = vst [vmem:[%s3 + $0x18] sm:$0xff] %v166
  %176 = vst [vmem:[%s3 + $0x20] sm:$0xff] %v125
  %177 = vst [vmem:[%s3 + $0x28] sm:$0xff] %v127
  %178 = vst [vmem:[%s3 + $0x30] sm:$0xff] %v168
  %179 = vst [vmem:[%s3 + $0x38] sm:$0xff] %v170
  // Predicated region
  $region14: #{ssamc_forward.11} parent=0 // pred_check
    _
  $region15: #{ssamc_forward.11} parent=0 // pred_check_branch
    %181 = sbr.rel (0) target = $region17
  $region16: #{ssamc_forward.11} parent=0 // pred_region
    _
  $region17: #{ssamc_forward.11} parent=0 // pred_fallthru
    _
  // Predicated region
  $region18: #{ssamc_forward.11} parent=0 // pred_check
    _
  $region19: #{ssamc_forward.11} parent=0 // pred_check_branch
    %183 = sbr.rel (0) target = $region21
  $region20: #{ssamc_forward.11} parent=0 // pred_region
    _
  $region21: #{ssamc_forward.11} parent=0 // pred_fallthru
    _

// kernel: ssamc_forward.12
$region0: #{ssamc_forward.12}
  #allocation0 [shape = 'u32[]', space=smem, size = 0x4, offset = 0x4, fixed_abs, tag = 'smem constant byte address 0x4 - core index']
  #allocation1 [shape = 'u32[144,128]{1,0:T(1,128)}', space=vmem, size = 0x12000, scoped, tag = 'internal scratch']
  %s0 = inlined_call_operand.vmem [shape: bf16[16,144], index: 0, kind: input, shape index: {}]
  %s1 = inlined_call_operand.vmem [shape: bf16[144,512], index: 1, kind: input, shape index: {}]
  %s2 = inlined_call_operand.vmem [shape: f32[16,1], index: 2, kind: input, shape index: {}]
  %s3 = inlined_call_operand.vmem [shape: f32[16,512], index: 3, kind: output, shape index: {}]
  %s4 = sld [smem:[#allocation0]]
  $region22: #{ssamc_forward.12} parent=0
    _
  %s6 = ssub.s32 1, %s4
  %s7 = scalar_select 0, %s6, %s4
  // Predicated region
  $region2: #{ssamc_forward.12} parent=0 // pred_check
    _
  $region3: #{ssamc_forward.12} parent=0 // pred_check_branch
    %9 = sbr.rel (0) target = $region5
  $region4: #{ssamc_forward.12} parent=0 // pred_region
    _
  $region5: #{ssamc_forward.12} parent=0 // pred_fallthru
    _
  // Predicated region
  $region6: #{ssamc_forward.12} parent=0 // pred_check
    _
  $region7: #{ssamc_forward.12} parent=0 // pred_check_branch
    %11 = sbr.rel (0) target = $region9
  $region8: #{ssamc_forward.12} parent=0 // pred_region
    _
  $region9: #{ssamc_forward.12} parent=0 // pred_fallthru
    _
  // Predicated region
  $region10: #{ssamc_forward.12} parent=0 // pred_check
    _
  $region11: #{ssamc_forward.12} parent=0 // pred_check_branch
    %13 = sbr.rel (0) target = $region13
  $region12: #{ssamc_forward.12} parent=0 // pred_region
    _
  $region13: #{ssamc_forward.12} parent=0 // pred_fallthru
    _
  %v15 = vld [vmem:[%s1] sm:$0xff]
  %v16 = vld [vmem:[%s1 + $0x8] sm:$0xff]
  %v17 = vld [vmem:[%s1 + $0x10] sm:$0xff]
  %v18 = vld [vmem:[%s1 + $0x18] sm:$0xff]
  %v19 = vld [vmem:[%s1 + $0x20] sm:$0xff]
  %v20 = vld [vmem:[%s1 + $0x28] sm:$0xff]
  %v21 = vld [vmem:[%s1 + $0x30] sm:$0xff]
  %v22 = vld [vmem:[%s1 + $0x38] sm:$0xff]
  %v23 = vld [vmem:[%s1 + $0x40] sm:$0xff]
  %v24 = vld [vmem:[%s1 + $0x48] sm:$0xff]
  %v25 = vld [vmem:[%s1 + $0x50] sm:$0xff]
  %v26 = vld [vmem:[%s1 + $0x58] sm:$0xff]
  %v27 = vld [vmem:[%s1 + $0x60] sm:$0xff]
  %v28 = vld [vmem:[%s1 + $0x68] sm:$0xff]
  %v29 = vld [vmem:[%s1 + $0x70] sm:$0xff]
  %v30 = vld [vmem:[%s1 + $0x78] sm:$0xff]
  %v31 = vld [vmem:[%s1 + $0x80] sm:$0xff]
  %v32 = vld [vmem:[%s1 + $0x88] sm:$0xff]
  %v33 = vld [vmem:[%s1 + $0x90] sm:$0xff]
  %v34 = vld [vmem:[%s1 + $0x98] sm:$0xff]
  %v35 = vld [vmem:[%s1 + $0xa0] sm:$0xff]
  %v36 = vld [vmem:[%s1 + $0xa8] sm:$0xff]
  %v37 = vld [vmem:[%s1 + $0xb0] sm:$0xff]
  %v38 = vld [vmem:[%s1 + $0xb8] sm:$0xff]
  %v39 = vld [vmem:[%s1 + $0xc0] sm:$0xff]
  %v40 = vld [vmem:[%s1 + $0xc8] sm:$0xff]
  %v41 = vld [vmem:[%s1 + $0xd0] sm:$0xff]
  %v42 = vld [vmem:[%s1 + $0xd8] sm:$0xff]
  %v43 = vld [vmem:[%s1 + $0xe0] sm:$0xff]
  %v44 = vld [vmem:[%s1 + $0xe8] sm:$0xff]
  %v45 = vld [vmem:[%s1 + $0xf0] sm:$0xff]
  %v46 = vld [vmem:[%s1 + $0xf8] sm:$0xff]
  %v47 = vld [vmem:[%s1 + $0x100] sm:$0xff]
  %v48 = vld [vmem:[%s1 + $0x108] sm:$0xff]
  %v49 = vld [vmem:[%s1 + $0x110] sm:$0xff]
  %v50 = vld [vmem:[%s1 + $0x118] sm:$0xff]
  %v51 = vld [vmem:[%s0] sm:$0xff]
  %v52 = vld [vmem:[%s0 + $0x8] sm:$0xff]
  %v53 = vld [vmem:[%s2] sm:$0xff]
  %v54 = vld [vmem:[%s2 + $0x8] sm:$0xff]
  %56 = vset.pattern.permute.xlu0 0
  %57 = vperm.xlu0 %56, %v53
  %v58 = vpop.permute.xlu0 %57
  %61 = vset.pattern.permute.xlu0 0
  %62 = vperm.xlu0 %61, %v54
  %v63 = vpop.permute.xlu0 %62
  %v67 = vunpack.c.l.b16 %v51
  %v68 = vunpack.c.h.b16 %v51
  %v69 = vunpack.c.l.b16 %v52
  %v70 = vunpack.c.h.b16 %v52
  %v71 = vpack.c.b16 %v69, %v67
  %v72 = vpack.c.b16 %v70, %v68
  %v110 = vunpack.c.l.b16 %v15
  %v111 = vunpack.c.h.b16 %v15
  %v112 = vunpack.c.l.b16 %v16
  %v113 = vunpack.c.h.b16 %v16
  %v114 = vunpack.c.l.b16 %v17
  %v115 = vunpack.c.h.b16 %v17
  %v116 = vunpack.c.l.b16 %v18
  %v117 = vunpack.c.h.b16 %v18
  %v118 = vunpack.c.l.b16 %v19
  %v119 = vunpack.c.h.b16 %v19
  %v120 = vunpack.c.l.b16 %v20
  %v121 = vunpack.c.h.b16 %v20
  %v122 = vunpack.c.l.b16 %v21
  %v123 = vunpack.c.h.b16 %v21
  %v124 = vunpack.c.l.b16 %v22
  %v125 = vunpack.c.h.b16 %v22
  %v126 = vunpack.c.l.b16 %v23
  %v127 = vunpack.c.h.b16 %v23
  %v128 = vunpack.c.l.b16 %v24
  %v129 = vunpack.c.h.b16 %v24
  %v130 = vunpack.c.l.b16 %v25
  %v131 = vunpack.c.h.b16 %v25
  %v132 = vunpack.c.l.b16 %v26
  %v133 = vunpack.c.h.b16 %v26
  %v134 = vunpack.c.l.b16 %v27
  %v135 = vunpack.c.h.b16 %v27
  %v136 = vunpack.c.l.b16 %v28
  %v137 = vunpack.c.h.b16 %v28
  %v138 = vunpack.c.l.b16 %v29
  %v139 = vunpack.c.h.b16 %v29
  %v140 = vunpack.c.l.b16 %v30
  %v141 = vunpack.c.h.b16 %v30
  %v142 = vunpack.c.l.b16 %v31
  %v143 = vunpack.c.h.b16 %v31
  %v144 = vunpack.c.l.b16 %v32
  %v145 = vunpack.c.h.b16 %v32
  %v146 = vunpack.c.l.b16 %v33
  %v147 = vunpack.c.h.b16 %v33
  %v148 = vunpack.c.l.b16 %v34
  %v149 = vunpack.c.h.b16 %v34
  %v150 = vunpack.c.l.b16 %v35
  %v151 = vunpack.c.h.b16 %v35
  %v152 = vunpack.c.l.b16 %v36
  %v153 = vunpack.c.h.b16 %v36
  %v154 = vunpack.c.l.b16 %v37
  %v155 = vunpack.c.h.b16 %v37
  %v156 = vunpack.c.l.b16 %v38
  %v157 = vunpack.c.h.b16 %v38
  %v158 = vunpack.c.l.b16 %v39
  %v159 = vunpack.c.h.b16 %v39
  %v160 = vunpack.c.l.b16 %v40
  %v161 = vunpack.c.h.b16 %v40
  %v162 = vunpack.c.l.b16 %v41
  %v163 = vunpack.c.h.b16 %v41
  %v164 = vunpack.c.l.b16 %v42
  %v165 = vunpack.c.h.b16 %v42
  %v166 = vunpack.c.l.b16 %v43
  %v167 = vunpack.c.h.b16 %v43
  %v168 = vunpack.c.l.b16 %v44
  %v169 = vunpack.c.h.b16 %v44
  %v170 = vunpack.c.l.b16 %v45
  %v171 = vunpack.c.h.b16 %v45
  %v172 = vunpack.c.l.b16 %v46
  %v173 = vunpack.c.h.b16 %v46
  %v174 = vunpack.c.l.b16 %v47
  %v175 = vunpack.c.h.b16 %v47
  %v176 = vunpack.c.l.b16 %v48
  %v177 = vunpack.c.h.b16 %v48
  %v178 = vunpack.c.l.b16 %v49
  %v179 = vunpack.c.h.b16 %v49
  %v180 = vunpack.c.l.b16 %v50
  %v181 = vunpack.c.h.b16 %v50
  %v182 = vpack.c.b16 %v114, %v110
  %v183 = vpack.c.b16 %v115, %v111
  %v184 = vpack.c.b16 %v116, %v112
  %v185 = vpack.c.b16 %v117, %v113
  %v186 = vpack.c.b16 %v122, %v118
  %v187 = vpack.c.b16 %v123, %v119
  %v188 = vpack.c.b16 %v124, %v120
  %v189 = vpack.c.b16 %v125, %v121
  %v190 = vpack.c.b16 %v130, %v126
  %v191 = vpack.c.b16 %v131, %v127
  %v192 = vpack.c.b16 %v132, %v128
  %v193 = vpack.c.b16 %v133, %v129
  %v194 = vpack.c.b16 %v138, %v134
  %v195 = vpack.c.b16 %v139, %v135
  %v196 = vpack.c.b16 %v140, %v136
  %v197 = vpack.c.b16 %v141, %v137
  %v198 = vpack.c.b16 %v146, %v142
  %v199 = vpack.c.b16 %v147, %v143
  %v200 = vpack.c.b16 %v148, %v144
  %v201 = vpack.c.b16 %v149, %v145
  %v202 = vpack.c.b16 %v154, %v150
  %v203 = vpack.c.b16 %v155, %v151
  %v204 = vpack.c.b16 %v156, %v152
  %v205 = vpack.c.b16 %v157, %v153
  %v206 = vpack.c.b16 %v162, %v158
  %v207 = vpack.c.b16 %v163, %v159
  %v208 = vpack.c.b16 %v164, %v160
  %v209 = vpack.c.b16 %v165, %v161
  %v210 = vpack.c.b16 %v170, %v166
  %v211 = vpack.c.b16 %v171, %v167
  %v212 = vpack.c.b16 %v172, %v168
  %v213 = vpack.c.b16 %v173, %v169
  %v214 = vpack.c.b16 %v178, %v174
  %v215 = vpack.c.b16 %v179, %v175
  %v216 = vpack.c.b16 %v180, %v176
  %v217 = vpack.c.b16 %v181, %v177
  %vm254 = vcmask 130048
  %v256 = vsel %vm254, %v72, 0
  %258 = vmatprep.subr.bf16.mxu0 %v211
  %259 = vmatpush1.bf16.msra.mxu0 %v210
  %260 = vmatprep.subr.bf16.mxu0 %v207
  %261 = vmatpush1.bf16.msra.mxu0 %v206
  %262 = vmatprep.subr.bf16.mxu0 %v203
  %263 = vmatpush1.bf16.msra.mxu0 %v202
  %264 = vmatprep.subr.bf16.mxu0 %v199
  %265 = vmatpush1.bf16.msra.mxu0 %v198
  %266 = vmatprep.subr.bf16.mxu0 %v195
  %267 = vmatpush1.bf16.msra.mxu0 %v194
  %268 = vmatprep.subr.bf16.mxu0 %v191
  %269 = vmatpush1.bf16.msra.mxu0 %v190
  %270 = vmatprep.subr.bf16.mxu0 %v187
  %271 = vmatpush1.bf16.msra.mxu0 %v186
  %272 = vmatprep.subr.bf16.mxu0 %v183
  %273 = vmatpush1.bf16.msra.mxu0 %v182
  %274 = vmatprep.subr.bf16.mxu0 0
  %275 = vmatpush2.bf16.msra.mxu0 0
  %276 = vmatprep.subr.bf16.mxu0 0
  %277 = vmatpush2.bf16.msra.mxu0 0
  %278 = vmatprep.subr.bf16.mxu0 0
  %279 = vmatpush2.bf16.msra.mxu0 0
  %280 = vmatprep.subr.bf16.mxu0 0
  %281 = vmatpush2.bf16.msra.mxu0 0
  %282 = vmatprep.subr.bf16.mxu0 0
  %283 = vmatpush2.bf16.msra.mxu0 0
  %284 = vmatprep.subr.bf16.mxu0 0
  %285 = vmatpush2.bf16.msra.mxu0 0
  %286 = vmatprep.subr.bf16.mxu0 0
  %287 = vmatpush2.bf16.msra.mxu0 0
  %288 = vmatprep.subr.bf16.mxu0 %v215
  %289 = vmatpush2.bf16.msra.mxu0 %v214
  %290 = vmatprep.mubr.bf16.mxu0 %v256
  %291 = vmatmul.mubr.bf16.gmra.mxu0 %v71
  %v292 = vpop.f32.mrf.mxu0
  %v293 = vadd.f32 %v58, %v292
  %v294 = vpop.f32.mrf.mxu0
  %v295 = vadd.f32 %v58, %v294
  %v296 = vpop.f32.mrf.mxu0
  %v297 = vadd.f32 %v63, %v296
  %v298 = vpop.f32.mrf.mxu0
  %v299 = vadd.f32 %v63, %v298
  %300 = vdwg.mxu0
  %301 = vmatprep.subr.bf16.mxu0 %v213
  %302 = vmatpush1.bf16.msra.mxu0 %v212
  %303 = vmatprep.subr.bf16.mxu0 %v209
  %304 = vmatpush1.bf16.msra.mxu0 %v208
  %305 = vmatprep.subr.bf16.mxu0 %v205
  %306 = vmatpush1.bf16.msra.mxu0 %v204
  %307 = vmatprep.subr.bf16.mxu0 %v201
  %308 = vmatpush1.bf16.msra.mxu0 %v200
  %309 = vmatprep.subr.bf16.mxu0 %v197
  %310 = vmatpush1.bf16.msra.mxu0 %v196
  %311 = vmatprep.subr.bf16.mxu0 %v193
  %312 = vmatpush1.bf16.msra.mxu0 %v192
  %313 = vmatprep.subr.bf16.mxu0 %v189
  %314 = vmatpush1.bf16.msra.mxu0 %v188
  %315 = vmatprep.subr.bf16.mxu0 %v185
  %316 = vmatpush1.bf16.msra.mxu0 %v184
  %317 = vmatprep.subr.bf16.mxu0 0
  %318 = vmatpush2.bf16.msra.mxu0 0
  %319 = vmatprep.subr.bf16.mxu0 0
  %320 = vmatpush2.bf16.msra.mxu0 0
  %321 = vmatprep.subr.bf16.mxu0 0
  %322 = vmatpush2.bf16.msra.mxu0 0
  %323 = vmatprep.subr.bf16.mxu0 0
  %324 = vmatpush2.bf16.msra.mxu0 0
  %325 = vmatprep.subr.bf16.mxu0 0
  %326 = vmatpush2.bf16.msra.mxu0 0
  %327 = vmatprep.subr.bf16.mxu0 0
  %328 = vmatpush2.bf16.msra.mxu0 0
  %329 = vmatprep.subr.bf16.mxu0 0
  %330 = vmatpush2.bf16.msra.mxu0 0
  %331 = vmatprep.subr.bf16.mxu0 %v217
  %332 = vmatpush2.bf16.msra.mxu0 %v216
  %333 = vmatprep.mubr.bf16.mxu0 %v256
  %334 = vmatmul.mubr.bf16.gmra.mxu0 %v71
  %v335 = vpop.f32.mrf.mxu0
  %v336 = vadd.f32 %v58, %v335
  %v337 = vpop.f32.mrf.mxu0
  %v338 = vadd.f32 %v58, %v337
  %v339 = vpop.f32.mrf.mxu0
  %v340 = vadd.f32 %v63, %v339
  %v341 = vpop.f32.mrf.mxu0
  %v342 = vadd.f32 %v63, %v341
  %343 = vdwg.mxu0
  %v344 = vmax.f32 %v293, 0.0
  %v345 = vmax.f32 %v295, 0.0
  %v346 = vmax.f32 %v336, 0.0
  %v347 = vmax.f32 %v338, 0.0
  %v348 = vmax.f32 %v297, 0.0
  %v349 = vmax.f32 %v299, 0.0
  %v350 = vmax.f32 %v340, 0.0
  %v351 = vmax.f32 %v342, 0.0
  %352 = vst [vmem:[%s3] sm:$0xff] %v344
  %353 = vst [vmem:[%s3 + $0x8] sm:$0xff] %v345
  %354 = vst [vmem:[%s3 + $0x10] sm:$0xff] %v346
  %355 = vst [vmem:[%s3 + $0x18] sm:$0xff] %v347
  %356 = vst [vmem:[%s3 + $0x20] sm:$0xff] %v348
  %357 = vst [vmem:[%s3 + $0x28] sm:$0xff] %v349
  %358 = vst [vmem:[%s3 + $0x30] sm:$0xff] %v350
  %359 = vst [vmem:[%s3 + $0x38] sm:$0xff] %v351
  // Predicated region
  $region14: #{ssamc_forward.12} parent=0 // pred_check
    _
  $region15: #{ssamc_forward.12} parent=0 // pred_check_branch
    %361 = sbr.rel (0) target = $region17
  $region16: #{ssamc_forward.12} parent=0 // pred_region
    _
  $region17: #{ssamc_forward.12} parent=0 // pred_fallthru
    _
  // Predicated region
  $region18: #{ssamc_forward.12} parent=0 // pred_check
    _
  $region19: #{ssamc_forward.12} parent=0 // pred_check_branch
    %363 = sbr.rel (0) target = $region21
  $region20: #{ssamc_forward.12} parent=0 // pred_region
    _
  $region21: #{ssamc_forward.12} parent=0 // pred_fallthru
    _

// kernel: ssamc_forward.14
$region0: #{ssamc_forward.14}
  #allocation0 [shape = 'u32[]', space=smem, size = 0x4, offset = 0x4, fixed_abs, tag = 'smem constant byte address 0x4 - core index']
  #allocation1 [shape = 'u32[144,128]{1,0:T(1,128)}', space=vmem, size = 0x12000, scoped, tag = 'internal scratch']
  %s0 = inlined_call_operand.vmem [shape: bf16[16,512], index: 0, kind: input, shape index: {}]
  %s1 = inlined_call_operand.vmem [shape: bf16[4,16], index: 1, kind: input, shape index: {}]
  %s2 = inlined_call_operand.vmem [shape: f32[4,1], index: 2, kind: input, shape index: {}]
  %s3 = inlined_call_operand.vmem [shape: bf16[4,4], index: 3, kind: input, shape index: {}]
  %s4 = inlined_call_operand.vmem [shape: f32[4,1], index: 4, kind: input, shape index: {}]
  %s5 = inlined_call_operand.vmem [shape: f32[4,512], index: 5, kind: output, shape index: {0}]
  %s6 = inlined_call_operand.vmem [shape: f32[4,512], index: 6, kind: output, shape index: {1}]
  %7 = xla_tuple %s5, %s6
  %s8 = sld [smem:[#allocation0]]
  $region38: #{ssamc_forward.14} parent=0
    _
  %s10 = ssub.s32 1, %s8
  %s11 = scalar_select 0, %s10, %s8
  // Predicated region
  $region2: #{ssamc_forward.14} parent=0 // pred_check
    _
  $region3: #{ssamc_forward.14} parent=0 // pred_check_branch
    %13 = sbr.rel (0) target = $region5
  $region4: #{ssamc_forward.14} parent=0 // pred_region
    _
  $region5: #{ssamc_forward.14} parent=0 // pred_fallthru
    _
  // Predicated region
  $region6: #{ssamc_forward.14} parent=0 // pred_check
    _
  $region7: #{ssamc_forward.14} parent=0 // pred_check_branch
    %15 = sbr.rel (0) target = $region9
  $region8: #{ssamc_forward.14} parent=0 // pred_region
    _
  $region9: #{ssamc_forward.14} parent=0 // pred_fallthru
    _
  // Predicated region
  $region10: #{ssamc_forward.14} parent=0 // pred_check
    _
  $region11: #{ssamc_forward.14} parent=0 // pred_check_branch
    %17 = sbr.rel (0) target = $region13
  $region12: #{ssamc_forward.14} parent=0 // pred_region
    _
  $region13: #{ssamc_forward.14} parent=0 // pred_fallthru
    _
  // Predicated region
  $region14: #{ssamc_forward.14} parent=0 // pred_check
    _
  $region15: #{ssamc_forward.14} parent=0 // pred_check_branch
    %19 = sbr.rel (0) target = $region17
  $region16: #{ssamc_forward.14} parent=0 // pred_region
    _
  $region17: #{ssamc_forward.14} parent=0 // pred_fallthru
    _
  // Predicated region
  $region18: #{ssamc_forward.14} parent=0 // pred_check
    _
  $region19: #{ssamc_forward.14} parent=0 // pred_check_branch
    %21 = sbr.rel (0) target = $region21
  $region20: #{ssamc_forward.14} parent=0 // pred_region
    _
  $region21: #{ssamc_forward.14} parent=0 // pred_fallthru
    _
  %v23 = vld [vmem:[%s1] sm:$0x3]
  %v24 = vld [vmem:[%s0] sm:$0xff]
  %v25 = vld [vmem:[%s0 + $0x8] sm:$0xff]
  %v26 = vld [vmem:[%s0 + $0x10] sm:$0xff]
  %v27 = vld [vmem:[%s0 + $0x18] sm:$0xff]
  %v28 = vld [vmem:[%s2] sm:$0xf]
  %30 = vset.pattern.permute.xlu0 0
  %31 = vperm.xlu0 %30, %v28
  %v32 = vpop.permute.xlu0 %31
  %v38 = vunpack.c.l.b16 %v24
  %v39 = vunpack.c.h.b16 %v24
  %v40 = vunpack.c.l.b16 %v25
  %v41 = vunpack.c.h.b16 %v25
  %v42 = vunpack.c.l.b16 %v26
  %v43 = vunpack.c.h.b16 %v26
  %v44 = vunpack.c.l.b16 %v27
  %v45 = vunpack.c.h.b16 %v27
  %v46 = vpack.c.b16 %v42, %v38
  %v47 = vpack.c.b16 %v43, %v39
  %v48 = vpack.c.b16 %v44, %v40
  %v49 = vpack.c.b16 %v45, %v41
  %vm54 = vcmask 130048
  %v56 = vsel %vm54, %v23, 0
  %58 = vmatprep.subr.bf16.mxu0 0
  %59 = vmatpush1.bf16.msra.mxu0 0
  %60 = vmatprep.subr.bf16.mxu0 0
  %61 = vmatpush1.bf16.msra.mxu0 0
  %62 = vmatprep.subr.bf16.mxu0 0
  %63 = vmatpush1.bf16.msra.mxu0 0
  %64 = vmatprep.subr.bf16.mxu0 0
  %65 = vmatpush1.bf16.msra.mxu0 0
  %66 = vmatprep.subr.bf16.mxu0 0
  %67 = vmatpush1.bf16.msra.mxu0 0
  %68 = vmatprep.subr.bf16.mxu0 0
  %69 = vmatpush1.bf16.msra.mxu0 0
  %70 = vmatprep.subr.bf16.mxu0 0
  %71 = vmatpush1.bf16.msra.mxu0 0
  %72 = vmatprep.subr.bf16.mxu0 %v47
  %73 = vmatpush1.bf16.msra.mxu0 %v46
  %74 = vmatprep.subr.bf16.mxu0 0
  %75 = vmatpush2.bf16.msra.mxu0 0
  %76 = vmatprep.subr.bf16.mxu0 0
  %77 = vmatpush2.bf16.msra.mxu0 0
  %78 = vmatprep.subr.bf16.mxu0 0
  %79 = vmatpush2.bf16.msra.mxu0 0
  %80 = vmatprep.subr.bf16.mxu0 0
  %81 = vmatpush2.bf16.msra.mxu0 0
  %82 = vmatprep.subr.bf16.mxu0 0
  %83 = vmatpush2.bf16.msra.mxu0 0
  %84 = vmatprep.subr.bf16.mxu0 0
  %85 = vmatpush2.bf16.msra.mxu0 0
  %86 = vmatprep.subr.bf16.mxu0 0
  %87 = vmatpush2.bf16.msra.mxu0 0
  %88 = vmatprep.subr.bf16.mxu0 0
  %89 = vmatpush2.bf16.msra.mxu0 0
  %90 = vmatprep.mubr.bf16.mxu0 0
  %91 = vmatmul.mubr.bf16.gmra.mxu0 %v56
  %v92 = vpop.f32.mrf.mxu0
  %v93 = vadd.f32 %v32, %v92
  %v94 = vpop.f32.mrf.mxu0
  %v95 = vadd.f32 %v32, %v94
  %v96 = vpop.f32.mrf.mxu0
  %v97 = vpop.f32.mrf.mxu0
  %98 = vdwg.mxu0
  %99 = vmatprep.subr.bf16.mxu0 0
  %100 = vmatpush1.bf16.msra.mxu0 0
  %101 = vmatprep.subr.bf16.mxu0 0
  %102 = vmatpush1.bf16.msra.mxu0 0
  %103 = vmatprep.subr.bf16.mxu0 0
  %104 = vmatpush1.bf16.msra.mxu0 0
  %105 = vmatprep.subr.bf16.mxu0 0
  %106 = vmatpush1.bf16.msra.mxu0 0
  %107 = vmatprep.subr.bf16.mxu0 0
  %108 = vmatpush1.bf16.msra.mxu0 0
  %109 = vmatprep.subr.bf16.mxu0 0
  %110 = vmatpush1.bf16.msra.mxu0 0
  %111 = vmatprep.subr.bf16.mxu0 0
  %112 = vmatpush1.bf16.msra.mxu0 0
  %113 = vmatprep.subr.bf16.mxu0 %v49
  %114 = vmatpush1.bf16.msra.mxu0 %v48
  %115 = vmatprep.subr.bf16.mxu0 0
  %116 = vmatpush2.bf16.msra.mxu0 0
  %117 = vmatprep.subr.bf16.mxu0 0
  %118 = vmatpush2.bf16.msra.mxu0 0
  %119 = vmatprep.subr.bf16.mxu0 0
  %120 = vmatpush2.bf16.msra.mxu0 0
  %121 = vmatprep.subr.bf16.mxu0 0
  %122 = vmatpush2.bf16.msra.mxu0 0
  %123 = vmatprep.subr.bf16.mxu0 0
  %124 = vmatpush2.bf16.msra.mxu0 0
  %125 = vmatprep.subr.bf16.mxu0 0
  %126 = vmatpush2.bf16.msra.mxu0 0
  %127 = vmatprep.subr.bf16.mxu0 0
  %128 = vmatpush2.bf16.msra.mxu0 0
  %129 = vmatprep.subr.bf16.mxu0 0
  %130 = vmatpush2.bf16.msra.mxu0 0
  %131 = vmatprep.mubr.bf16.mxu0 0
  %132 = vmatmul.mubr.bf16.gmra.mxu0 %v56
  %v133 = vpop.f32.mrf.mxu0
  %v134 = vadd.f32 %v32, %v133
  %v135 = vpop.f32.mrf.mxu0
  %v136 = vadd.f32 %v32, %v135
  %v137 = vpop.f32.mrf.mxu0
  %v138 = vpop.f32.mrf.mxu0
  %139 = vdwg.mxu0
  %v144 = vcombine.low %v93, %v95
  %v145 = vcombine.low %v134, %v136
  %148 = vst [vmem:[%s5] sm:$0xff] %v144
  %149 = vst [vmem:[%s5 + $0x8] sm:$0xff] %v145
  %v150 = vld [vmem:[%s3] sm:$0x3]
  %v151 = vpack.c.bf16 %v93, %v93
  %v152 = vpack.c.bf16 %v95, %v95
  %v153 = vpack.c.bf16 %v134, %v134
  %v154 = vpack.c.bf16 %v136, %v136
  %v155 = vld [vmem:[%s4] sm:$0xf]
  %157 = vset.pattern.permute.xlu0 0
  %158 = vperm.xlu0 %157, %v155
  %v159 = vpop.permute.xlu0 %158
  %vm161 = vcmask 31744
  %v163 = vsel %vm161, %v150, 0
  %vm165 = vcmask 1041408
  %v167 = vsel %vm165, %v151, 0
  %v170 = vsel %vm165, %v152, 0
  %v173 = vsel %vm165, %v153, 0
  %v176 = vsel %vm165, %v154, 0
  %178 = vmatprep.subr.bf16.mxu0 0
  %179 = vmatpush1.bf16.msra.mxu0 0
  %180 = vmatprep.subr.bf16.mxu0 0
  %181 = vmatpush1.bf16.msra.mxu0 0
  %182 = vmatprep.subr.bf16.mxu0 0
  %183 = vmatpush1.bf16.msra.mxu0 0
  %184 = vmatprep.subr.bf16.mxu0 0
  %185 = vmatpush1.bf16.msra.mxu0 0
  %186 = vmatprep.subr.bf16.mxu0 0
  %187 = vmatpush1.bf16.msra.mxu0 0
  %188 = vmatprep.subr.bf16.mxu0 0
  %189 = vmatpush1.bf16.msra.mxu0 0
  %190 = vmatprep.subr.bf16.mxu0 0
  %191 = vmatpush1.bf16.msra.mxu0 0
  %192 = vmatprep.subr.bf16.mxu0 %v170
  %193 = vmatpush1.bf16.msra.mxu0 %v167
  %194 = vmatprep.subr.bf16.mxu0 0
  %195 = vmatpush2.bf16.msra.mxu0 0
  %196 = vmatprep.subr.bf16.mxu0 0
  %197 = vmatpush2.bf16.msra.mxu0 0
  %198 = vmatprep.subr.bf16.mxu0 0
  %199 = vmatpush2.bf16.msra.mxu0 0
  %200 = vmatprep.subr.bf16.mxu0 0
  %201 = vmatpush2.bf16.msra.mxu0 0
  %202 = vmatprep.subr.bf16.mxu0 0
  %203 = vmatpush2.bf16.msra.mxu0 0
  %204 = vmatprep.subr.bf16.mxu0 0
  %205 = vmatpush2.bf16.msra.mxu0 0
  %206 = vmatprep.subr.bf16.mxu0 0
  %207 = vmatpush2.bf16.msra.mxu0 0
  %208 = vmatprep.subr.bf16.mxu0 0
  %209 = vmatpush2.bf16.msra.mxu0 0
  %210 = vmatprep.mubr.bf16.mxu0 0
  %211 = vmatmul.mubr.bf16.gmra.mxu0 %v163
  %v212 = vpop.f32.mrf.mxu0
  %v213 = vadd.f32 %v159, %v212
  %v214 = vpop.f32.mrf.mxu0
  %v215 = vadd.f32 %v159, %v214
  %v216 = vpop.f32.mrf.mxu0
  %v217 = vpop.f32.mrf.mxu0
  %218 = vdwg.mxu0
  %219 = vmatprep.subr.bf16.mxu0 0
  %220 = vmatpush1.bf16.msra.mxu0 0
  %221 = vmatprep.subr.bf16.mxu0 0
  %222 = vmatpush1.bf16.msra.mxu0 0
  %223 = vmatprep.subr.bf16.mxu0 0
  %224 = vmatpush1.bf16.msra.mxu0 0
  %225 = vmatprep.subr.bf16.mxu0 0
  %226 = vmatpush1.bf16.msra.mxu0 0
  %227 = vmatprep.subr.bf16.mxu0 0
  %228 = vmatpush1.bf16.msra.mxu0 0
  %229 = vmatprep.subr.bf16.mxu0 0
  %230 = vmatpush1.bf16.msra.mxu0 0
  %231 = vmatprep.subr.bf16.mxu0 0
  %232 = vmatpush1.bf16.msra.mxu0 0
  %233 = vmatprep.subr.bf16.mxu0 %v176
  %234 = vmatpush1.bf16.msra.mxu0 %v173
  %235 = vmatprep.subr.bf16.mxu0 0
  %236 = vmatpush2.bf16.msra.mxu0 0
  %237 = vmatprep.subr.bf16.mxu0 0
  %238 = vmatpush2.bf16.msra.mxu0 0
  %239 = vmatprep.subr.bf16.mxu0 0
  %240 = vmatpush2.bf16.msra.mxu0 0
  %241 = vmatprep.subr.bf16.mxu0 0
  %242 = vmatpush2.bf16.msra.mxu0 0
  %243 = vmatprep.subr.bf16.mxu0 0
  %244 = vmatpush2.bf16.msra.mxu0 0
  %245 = vmatprep.subr.bf16.mxu0 0
  %246 = vmatpush2.bf16.msra.mxu0 0
  %247 = vmatprep.subr.bf16.mxu0 0
  %248 = vmatpush2.bf16.msra.mxu0 0
  %249 = vmatprep.subr.bf16.mxu0 0
  %250 = vmatpush2.bf16.msra.mxu0 0
  %251 = vmatprep.mubr.bf16.mxu0 0
  %252 = vmatmul.mubr.bf16.gmra.mxu0 %v163
  %v253 = vpop.f32.mrf.mxu0
  %v254 = vadd.f32 %v159, %v253
  %v255 = vpop.f32.mrf.mxu0
  %v256 = vadd.f32 %v159, %v255
  %v257 = vpop.f32.mrf.mxu0
  %v258 = vpop.f32.mrf.mxu0
  %259 = vdwg.mxu0
  %v264 = vcombine.low %v213, %v215
  %v265 = vcombine.low %v254, %v256
  %268 = vst [vmem:[%s6] sm:$0xff] %v264
  %269 = vst [vmem:[%s6 + $0x8] sm:$0xff] %v265
  // Predicated region
  $region22: #{ssamc_forward.14} parent=0 // pred_check
    _
  $region23: #{ssamc_forward.14} parent=0 // pred_check_branch
    %271 = sbr.rel (0) target = $region25
  $region24: #{ssamc_forward.14} parent=0 // pred_region
    _
  $region25: #{ssamc_forward.14} parent=0 // pred_fallthru
    _
  // Predicated region
  $region26: #{ssamc_forward.14} parent=0 // pred_check
    _
  $region27: #{ssamc_forward.14} parent=0 // pred_check_branch
    %273 = sbr.rel (0) target = $region29
  $region28: #{ssamc_forward.14} parent=0 // pred_region
    _
  $region29: #{ssamc_forward.14} parent=0 // pred_fallthru
    _
  // Predicated region
  $region30: #{ssamc_forward.14} parent=0 // pred_check
    _
  $region31: #{ssamc_forward.14} parent=0 // pred_check_branch
    %275 = sbr.rel (0) target = $region33
  $region32: #{ssamc_forward.14} parent=0 // pred_region
    _
  $region33: #{ssamc_forward.14} parent=0 // pred_fallthru
    _
  // Predicated region
  $region34: #{ssamc_forward.14} parent=0 // pred_check
    _
  $region35: #{ssamc_forward.14} parent=0 // pred_check_branch
    %277 = sbr.rel (0) target = $region37
  $region36: #{ssamc_forward.14} parent=0 // pred_region
    _
  $region37: #{ssamc_forward.14} parent=0 // pred_fallthru
    _

// kernel: ssamc_forward.13
$region0: #{ssamc_forward.13}
  #allocation0 [shape = 'u32[]', space=smem, size = 0x4, offset = 0x4, fixed_abs, tag = 'smem constant byte address 0x4 - core index']
  #allocation1 [shape = 'u32[144,128]{1,0:T(1,128)}', space=vmem, size = 0x12000, scoped, tag = 'internal scratch']
  %s0 = inlined_call_operand.vmem [shape: bf16[144,512], index: 0, kind: input, shape index: {}]
  %s1 = inlined_call_operand.vmem [shape: bf16[16,144], index: 1, kind: input, shape index: {}]
  %s2 = inlined_call_operand.vmem [shape: f32[16,1], index: 2, kind: input, shape index: {}]
  %s3 = inlined_call_operand.vmem [shape: bf16[48,16], index: 3, kind: input, shape index: {}]
  %s4 = inlined_call_operand.vmem [shape: bf16[16,16], index: 4, kind: input, shape index: {}]
  %s5 = inlined_call_operand.vmem [shape: f32[16,1], index: 5, kind: input, shape index: {}]
  %s6 = inlined_call_operand.vmem [shape: f32[16,512], index: 6, kind: output, shape index: {}]
  %s7 = sld [smem:[#allocation0]]
  $region34: #{ssamc_forward.13} parent=0
    _
  %s9 = ssub.s32 1, %s7
  %s10 = scalar_select 0, %s9, %s7
  // Predicated region
  $region2: #{ssamc_forward.13} parent=0 // pred_check
    _
  $region3: #{ssamc_forward.13} parent=0 // pred_check_branch
    %12 = sbr.rel (0) target = $region5
  $region4: #{ssamc_forward.13} parent=0 // pred_region
    _
  $region5: #{ssamc_forward.13} parent=0 // pred_fallthru
    _
  // Predicated region
  $region6: #{ssamc_forward.13} parent=0 // pred_check
    _
  $region7: #{ssamc_forward.13} parent=0 // pred_check_branch
    %14 = sbr.rel (0) target = $region9
  $region8: #{ssamc_forward.13} parent=0 // pred_region
    _
  $region9: #{ssamc_forward.13} parent=0 // pred_fallthru
    _
  // Predicated region
  $region10: #{ssamc_forward.13} parent=0 // pred_check
    _
  $region11: #{ssamc_forward.13} parent=0 // pred_check_branch
    %16 = sbr.rel (0) target = $region13
  $region12: #{ssamc_forward.13} parent=0 // pred_region
    _
  $region13: #{ssamc_forward.13} parent=0 // pred_fallthru
    _
  // Predicated region
  $region14: #{ssamc_forward.13} parent=0 // pred_check
    _
  $region15: #{ssamc_forward.13} parent=0 // pred_check_branch
    %18 = sbr.rel (0) target = $region17
  $region16: #{ssamc_forward.13} parent=0 // pred_region
    _
  $region17: #{ssamc_forward.13} parent=0 // pred_fallthru
    _
  // Predicated region
  $region18: #{ssamc_forward.13} parent=0 // pred_check
    _
  $region19: #{ssamc_forward.13} parent=0 // pred_check_branch
    %20 = sbr.rel (0) target = $region21
  $region20: #{ssamc_forward.13} parent=0 // pred_region
    _
  $region21: #{ssamc_forward.13} parent=0 // pred_fallthru
    _
  // Predicated region
  $region22: #{ssamc_forward.13} parent=0 // pred_check
    _
  $region23: #{ssamc_forward.13} parent=0 // pred_check_branch
    %22 = sbr.rel (0) target = $region25
  $region24: #{ssamc_forward.13} parent=0 // pred_region
    _
  $region25: #{ssamc_forward.13} parent=0 // pred_fallthru
    _
  %v24 = vld [vmem:[%s1] sm:$0xff]
  %v25 = vld [vmem:[%s1 + $0x8] sm:$0xff]
  %v26 = vld [vmem:[%s0] sm:$0xff]
  %v27 = vld [vmem:[%s0 + $0x8] sm:$0xff]
  %v28 = vld [vmem:[%s0 + $0x10] sm:$0xff]
  %v29 = vld [vmem:[%s0 + $0x18] sm:$0xff]
  %v30 = vld [vmem:[%s0 + $0x20] sm:$0xff]
  %v31 = vld [vmem:[%s0 + $0x28] sm:$0xff]
  %v32 = vld [vmem:[%s0 + $0x30] sm:$0xff]
  %v33 = vld [vmem:[%s0 + $0x38] sm:$0xff]
  %v34 = vld [vmem:[%s0 + $0x40] sm:$0xff]
  %v35 = vld [vmem:[%s0 + $0x48] sm:$0xff]
  %v36 = vld [vmem:[%s0 + $0x50] sm:$0xff]
  %v37 = vld [vmem:[%s0 + $0x58] sm:$0xff]
  %v38 = vld [vmem:[%s0 + $0x60] sm:$0xff]
  %v39 = vld [vmem:[%s0 + $0x68] sm:$0xff]
  %v40 = vld [vmem:[%s0 + $0x70] sm:$0xff]
  %v41 = vld [vmem:[%s0 + $0x78] sm:$0xff]
  %v42 = vld [vmem:[%s0 + $0x80] sm:$0xff]
  %v43 = vld [vmem:[%s0 + $0x88] sm:$0xff]
  %v44 = vld [vmem:[%s0 + $0x90] sm:$0xff]
  %v45 = vld [vmem:[%s0 + $0x98] sm:$0xff]
  %v46 = vld [vmem:[%s0 + $0xa0] sm:$0xff]
  %v47 = vld [vmem:[%s0 + $0xa8] sm:$0xff]
  %v48 = vld [vmem:[%s0 + $0xb0] sm:$0xff]
  %v49 = vld [vmem:[%s0 + $0xb8] sm:$0xff]
  %v50 = vld [vmem:[%s0 + $0xc0] sm:$0xff]
  %v51 = vld [vmem:[%s0 + $0xc8] sm:$0xff]
  %v52 = vld [vmem:[%s0 + $0xd0] sm:$0xff]
  %v53 = vld [vmem:[%s0 + $0xd8] sm:$0xff]
  %v54 = vld [vmem:[%s0 + $0xe0] sm:$0xff]
  %v55 = vld [vmem:[%s0 + $0xe8] sm:$0xff]
  %v56 = vld [vmem:[%s0 + $0xf0] sm:$0xff]
  %v57 = vld [vmem:[%s0 + $0xf8] sm:$0xff]
  %v58 = vld [vmem:[%s0 + $0x100] sm:$0xff]
  %v59 = vld [vmem:[%s0 + $0x108] sm:$0xff]
  %v60 = vld [vmem:[%s0 + $0x110] sm:$0xff]
  %v61 = vld [vmem:[%s0 + $0x118] sm:$0xff]
  %v62 = vld [vmem:[%s2] sm:$0xff]
  %v63 = vld [vmem:[%s2 + $0x8] sm:$0xff]
  %65 = vset.pattern.permute.xlu0 0
  %66 = vperm.xlu0 %65, %v62
  %v67 = vpop.permute.xlu0 %66
  %70 = vset.pattern.permute.xlu0 0
  %71 = vperm.xlu0 %70, %v63
  %v72 = vpop.permute.xlu0 %71
  %v76 = vunpack.c.l.b16 %v24
  %v77 = vunpack.c.h.b16 %v24
  %v78 = vunpack.c.l.b16 %v25
  %v79 = vunpack.c.h.b16 %v25
  %v80 = vpack.c.b16 %v78, %v76
  %v81 = vpack.c.b16 %v79, %v77
  %v119 = vunpack.c.l.b16 %v26
  %v120 = vunpack.c.h.b16 %v26
  %v121 = vunpack.c.l.b16 %v27
  %v122 = vunpack.c.h.b16 %v27
  %v123 = vunpack.c.l.b16 %v28
  %v124 = vunpack.c.h.b16 %v28
  %v125 = vunpack.c.l.b16 %v29
  %v126 = vunpack.c.h.b16 %v29
  %v127 = vunpack.c.l.b16 %v30
  %v128 = vunpack.c.h.b16 %v30
  %v129 = vunpack.c.l.b16 %v31
  %v130 = vunpack.c.h.b16 %v31
  %v131 = vunpack.c.l.b16 %v32
  %v132 = vunpack.c.h.b16 %v32
  %v133 = vunpack.c.l.b16 %v33
  %v134 = vunpack.c.h.b16 %v33
  %v135 = vunpack.c.l.b16 %v34
  %v136 = vunpack.c.h.b16 %v34
  %v137 = vunpack.c.l.b16 %v35
  %v138 = vunpack.c.h.b16 %v35
  %v139 = vunpack.c.l.b16 %v36
  %v140 = vunpack.c.h.b16 %v36
  %v141 = vunpack.c.l.b16 %v37
  %v142 = vunpack.c.h.b16 %v37
  %v143 = vunpack.c.l.b16 %v38
  %v144 = vunpack.c.h.b16 %v38
  %v145 = vunpack.c.l.b16 %v39
  %v146 = vunpack.c.h.b16 %v39
  %v147 = vunpack.c.l.b16 %v40
  %v148 = vunpack.c.h.b16 %v40
  %v149 = vunpack.c.l.b16 %v41
  %v150 = vunpack.c.h.b16 %v41
  %v151 = vunpack.c.l.b16 %v42
  %v152 = vunpack.c.h.b16 %v42
  %v153 = vunpack.c.l.b16 %v43
  %v154 = vunpack.c.h.b16 %v43
  %v155 = vunpack.c.l.b16 %v44
  %v156 = vunpack.c.h.b16 %v44
  %v157 = vunpack.c.l.b16 %v45
  %v158 = vunpack.c.h.b16 %v45
  %v159 = vunpack.c.l.b16 %v46
  %v160 = vunpack.c.h.b16 %v46
  %v161 = vunpack.c.l.b16 %v47
  %v162 = vunpack.c.h.b16 %v47
  %v163 = vunpack.c.l.b16 %v48
  %v164 = vunpack.c.h.b16 %v48
  %v165 = vunpack.c.l.b16 %v49
  %v166 = vunpack.c.h.b16 %v49
  %v167 = vunpack.c.l.b16 %v50
  %v168 = vunpack.c.h.b16 %v50
  %v169 = vunpack.c.l.b16 %v51
  %v170 = vunpack.c.h.b16 %v51
  %v171 = vunpack.c.l.b16 %v52
  %v172 = vunpack.c.h.b16 %v52
  %v173 = vunpack.c.l.b16 %v53
  %v174 = vunpack.c.h.b16 %v53
  %v175 = vunpack.c.l.b16 %v54
  %v176 = vunpack.c.h.b16 %v54
  %v177 = vunpack.c.l.b16 %v55
  %v178 = vunpack.c.h.b16 %v55
  %v179 = vunpack.c.l.b16 %v56
  %v180 = vunpack.c.h.b16 %v56
  %v181 = vunpack.c.l.b16 %v57
  %v182 = vunpack.c.h.b16 %v57
  %v183 = vunpack.c.l.b16 %v58
  %v184 = vunpack.c.h.b16 %v58
  %v185 = vunpack.c.l.b16 %v59
  %v186 = vunpack.c.h.b16 %v59
  %v187 = vunpack.c.l.b16 %v60
  %v188 = vunpack.c.h.b16 %v60
  %v189 = vunpack.c.l.b16 %v61
  %v190 = vunpack.c.h.b16 %v61
  %v191 = vpack.c.b16 %v123, %v119
  %v192 = vpack.c.b16 %v124, %v120
  %v193 = vpack.c.b16 %v125, %v121
  %v194 = vpack.c.b16 %v126, %v122
  %v195 = vpack.c.b16 %v131, %v127
  %v196 = vpack.c.b16 %v132, %v128
  %v197 = vpack.c.b16 %v133, %v129
  %v198 = vpack.c.b16 %v134, %v130
  %v199 = vpack.c.b16 %v139, %v135
  %v200 = vpack.c.b16 %v140, %v136
  %v201 = vpack.c.b16 %v141, %v137
  %v202 = vpack.c.b16 %v142, %v138
  %v203 = vpack.c.b16 %v147, %v143
  %v204 = vpack.c.b16 %v148, %v144
  %v205 = vpack.c.b16 %v149, %v145
  %v206 = vpack.c.b16 %v150, %v146
  %v207 = vpack.c.b16 %v155, %v151
  %v208 = vpack.c.b16 %v156, %v152
  %v209 = vpack.c.b16 %v157, %v153
  %v210 = vpack.c.b16 %v158, %v154
  %v211 = vpack.c.b16 %v163, %v159
  %v212 = vpack.c.b16 %v164, %v160
  %v213 = vpack.c.b16 %v165, %v161
  %v214 = vpack.c.b16 %v166, %v162
  %v215 = vpack.c.b16 %v171, %v167
  %v216 = vpack.c.b16 %v172, %v168
  %v217 = vpack.c.b16 %v173, %v169
  %v218 = vpack.c.b16 %v174, %v170
  %v219 = vpack.c.b16 %v179, %v175
  %v220 = vpack.c.b16 %v180, %v176
  %v221 = vpack.c.b16 %v181, %v177
  %v222 = vpack.c.b16 %v182, %v178
  %v223 = vpack.c.b16 %v187, %v183
  %v224 = vpack.c.b16 %v188, %v184
  %v225 = vpack.c.b16 %v189, %v185
  %v226 = vpack.c.b16 %v190, %v186
  %vm263 = vcmask 130048
  %v265 = vsel %vm263, %v81, 0
  %267 = vmatprep.subr.bf16.mxu0 %v220
  %268 = vmatpush1.bf16.msra.mxu0 %v219
  %269 = vmatprep.subr.bf16.mxu0 %v216
  %270 = vmatpush1.bf16.msra.mxu0 %v215
  %271 = vmatprep.subr.bf16.mxu0 %v212
  %272 = vmatpush1.bf16.msra.mxu0 %v211
  %273 = vmatprep.subr.bf16.mxu0 %v208
  %274 = vmatpush1.bf16.msra.mxu0 %v207
  %275 = vmatprep.subr.bf16.mxu0 %v204
  %276 = vmatpush1.bf16.msra.mxu0 %v203
  %277 = vmatprep.subr.bf16.mxu0 %v200
  %278 = vmatpush1.bf16.msra.mxu0 %v199
  %279 = vmatprep.subr.bf16.mxu0 %v196
  %280 = vmatpush1.bf16.msra.mxu0 %v195
  %281 = vmatprep.subr.bf16.mxu0 %v192
  %282 = vmatpush1.bf16.msra.mxu0 %v191
  %283 = vmatprep.subr.bf16.mxu0 0
  %284 = vmatpush2.bf16.msra.mxu0 0
  %285 = vmatprep.subr.bf16.mxu0 0
  %286 = vmatpush2.bf16.msra.mxu0 0
  %287 = vmatprep.subr.bf16.mxu0 0
  %288 = vmatpush2.bf16.msra.mxu0 0
  %289 = vmatprep.subr.bf16.mxu0 0
  %290 = vmatpush2.bf16.msra.mxu0 0
  %291 = vmatprep.subr.bf16.mxu0 0
  %292 = vmatpush2.bf16.msra.mxu0 0
  %293 = vmatprep.subr.bf16.mxu0 0
  %294 = vmatpush2.bf16.msra.mxu0 0
  %295 = vmatprep.subr.bf16.mxu0 0
  %296 = vmatpush2.bf16.msra.mxu0 0
  %297 = vmatprep.subr.bf16.mxu0 %v224
  %298 = vmatpush2.bf16.msra.mxu0 %v223
  %299 = vmatprep.mubr.bf16.mxu0 %v265
  %300 = vmatmul.mubr.bf16.gmra.mxu0 %v80
  %v301 = vpop.f32.mrf.mxu0
  %v302 = vadd.f32 %v67, %v301
  %v303 = vpop.f32.mrf.mxu0
  %v304 = vadd.f32 %v67, %v303
  %v305 = vpop.f32.mrf.mxu0
  %v306 = vadd.f32 %v72, %v305
  %v307 = vpop.f32.mrf.mxu0
  %v308 = vadd.f32 %v72, %v307
  %309 = vdwg.mxu0
  %310 = vmatprep.subr.bf16.mxu0 %v222
  %311 = vmatpush1.bf16.msra.mxu0 %v221
  %312 = vmatprep.subr.bf16.mxu0 %v218
  %313 = vmatpush1.bf16.msra.mxu0 %v217
  %314 = vmatprep.subr.bf16.mxu0 %v214
  %315 = vmatpush1.bf16.msra.mxu0 %v213
  %316 = vmatprep.subr.bf16.mxu0 %v210
  %317 = vmatpush1.bf16.msra.mxu0 %v209
  %318 = vmatprep.subr.bf16.mxu0 %v206
  %319 = vmatpush1.bf16.msra.mxu0 %v205
  %320 = vmatprep.subr.bf16.mxu0 %v202
  %321 = vmatpush1.bf16.msra.mxu0 %v201
  %322 = vmatprep.subr.bf16.mxu0 %v198
  %323 = vmatpush1.bf16.msra.mxu0 %v197
  %324 = vmatprep.subr.bf16.mxu0 %v194
  %325 = vmatpush1.bf16.msra.mxu0 %v193
  %326 = vmatprep.subr.bf16.mxu0 0
  %327 = vmatpush2.bf16.msra.mxu0 0
  %328 = vmatprep.subr.bf16.mxu0 0
  %329 = vmatpush2.bf16.msra.mxu0 0
  %330 = vmatprep.subr.bf16.mxu0 0
  %331 = vmatpush2.bf16.msra.mxu0 0
  %332 = vmatprep.subr.bf16.mxu0 0
  %333 = vmatpush2.bf16.msra.mxu0 0
  %334 = vmatprep.subr.bf16.mxu0 0
  %335 = vmatpush2.bf16.msra.mxu0 0
  %336 = vmatprep.subr.bf16.mxu0 0
  %337 = vmatpush2.bf16.msra.mxu0 0
  %338 = vmatprep.subr.bf16.mxu0 0
  %339 = vmatpush2.bf16.msra.mxu0 0
  %340 = vmatprep.subr.bf16.mxu0 %v226
  %341 = vmatpush2.bf16.msra.mxu0 %v225
  %342 = vmatprep.mubr.bf16.mxu0 %v265
  %343 = vmatmul.mubr.bf16.gmra.mxu0 %v80
  %v344 = vpop.f32.mrf.mxu0
  %v345 = vadd.f32 %v67, %v344
  %v346 = vpop.f32.mrf.mxu0
  %v347 = vadd.f32 %v67, %v346
  %v348 = vpop.f32.mrf.mxu0
  %v349 = vadd.f32 %v72, %v348
  %v350 = vpop.f32.mrf.mxu0
  %v351 = vadd.f32 %v72, %v350
  %352 = vdwg.mxu0
  %v353 = vpack.c.bf16 %v306, %v302
  %v354 = vpack.c.bf16 %v308, %v304
  %v355 = vpack.c.bf16 %v349, %v345
  %v356 = vpack.c.bf16 %v351, %v347
  %v357 = vld [vmem:[%s3] sm:$0xf]
  %v358 = vld [vmem:[%s3 + $0x4] sm:$0xf]
  %v359 = vld [vmem:[%s3 + $0x8] sm:$0xf]
  %v360 = vld [vmem:[%s3 + $0xc] sm:$0xf]
  %v361 = vld [vmem:[%s3 + $0x10] sm:$0xf]
  %v362 = vld [vmem:[%s3 + $0x14] sm:$0xf]
  %v369 = vunpack.c.l.b16 %v357
  %v370 = vunpack.c.l.b16 %v358
  %v371 = vunpack.c.l.b16 %v359
  %v372 = vunpack.c.l.b16 %v360
  %v373 = vunpack.c.l.b16 %v361
  %v374 = vunpack.c.l.b16 %v362
  %v375 = vpack.c.b16 %v370, %v369
  %v376 = vpack.c.b16 %v372, %v371
  %v377 = vpack.c.b16 %v374, %v373
  %v379 = vsel %vm263, %v375, 0
  %v382 = vsel %vm263, %v376, 0
  %v385 = vsel %vm263, %v377, 0
  %387 = vmatprep.subr.bf16.mxu0 0
  %388 = vmatpush1.bf16.msra.mxu0 0
  %389 = vmatprep.subr.bf16.mxu0 0
  %390 = vmatpush1.bf16.msra.mxu0 0
  %391 = vmatprep.subr.bf16.mxu0 0
  %392 = vmatpush1.bf16.msra.mxu0 0
  %393 = vmatprep.subr.bf16.mxu0 0
  %394 = vmatpush1.bf16.msra.mxu0 0
  %395 = vmatprep.subr.bf16.mxu0 0
  %396 = vmatpush1.bf16.msra.mxu0 0
  %397 = vmatprep.subr.bf16.mxu0 0
  %398 = vmatpush1.bf16.msra.mxu0 0
  %399 = vmatprep.subr.bf16.mxu0 0
  %400 = vmatpush1.bf16.msra.mxu0 0
  %401 = vmatprep.subr.bf16.mxu0 %v354
  %402 = vmatpush1.bf16.msra.mxu0 %v353
  %403 = vmatprep.subr.bf16.mxu0 0
  %404 = vmatpush2.bf16.msra.mxu0 0
  %405 = vmatprep.subr.bf16.mxu0 0
  %406 = vmatpush2.bf16.msra.mxu0 0
  %407 = vmatprep.subr.bf16.mxu0 0
  %408 = vmatpush2.bf16.msra.mxu0 0
  %409 = vmatprep.subr.bf16.mxu0 0
  %410 = vmatpush2.bf16.msra.mxu0 0
  %411 = vmatprep.subr.bf16.mxu0 0
  %412 = vmatpush2.bf16.msra.mxu0 0
  %413 = vmatprep.subr.bf16.mxu0 0
  %414 = vmatpush2.bf16.msra.mxu0 0
  %415 = vmatprep.subr.bf16.mxu0 0
  %416 = vmatpush2.bf16.msra.mxu0 0
  %417 = vmatprep.subr.bf16.mxu0 0
  %418 = vmatpush2.bf16.msra.mxu0 0
  %419 = vmatprep.mubr.bf16.mxu0 0
  %420 = vmatmul.mubr.bf16.gmra.mxu0 %v379
  %v421 = vpop.f32.mrf.mxu0
  %v422 = vadd.f32 0.0, %v421
  %v423 = vpop.f32.mrf.mxu0
  %v424 = vadd.f32 0.0, %v423
  %v425 = vpop.f32.mrf.mxu0
  %v426 = vadd.f32 0.0, %v425
  %v427 = vpop.f32.mrf.mxu0
  %v428 = vadd.f32 0.0, %v427
  %429 = vmatprep.mubr.bf16.mxu0 0
  %430 = vmatmul.mubr.bf16.gmra.mxu0 %v382
  %v431 = vpop.f32.mrf.mxu0
  %v432 = vadd.f32 0.0, %v431
  %v433 = vpop.f32.mrf.mxu0
  %v434 = vadd.f32 0.0, %v433
  %v435 = vpop.f32.mrf.mxu0
  %v436 = vadd.f32 0.0, %v435
  %v437 = vpop.f32.mrf.mxu0
  %v438 = vadd.f32 0.0, %v437
  %439 = vmatprep.mubr.bf16.mxu0 0
  %440 = vmatmul.mubr.bf16.gmra.mxu0 %v385
  %v441 = vpop.f32.mrf.mxu0
  %v442 = vadd.f32 0.0, %v441
  %v443 = vpop.f32.mrf.mxu0
  %v444 = vadd.f32 0.0, %v443
  %v445 = vpop.f32.mrf.mxu0
  %v446 = vadd.f32 0.0, %v445
  %v447 = vpop.f32.mrf.mxu0
  %v448 = vadd.f32 0.0, %v447
  %449 = vdwg.mxu0
  %450 = vmatprep.subr.bf16.mxu0 0
  %451 = vmatpush1.bf16.msra.mxu0 0
  %452 = vmatprep.subr.bf16.mxu0 0
  %453 = vmatpush1.bf16.msra.mxu0 0
  %454 = vmatprep.subr.bf16.mxu0 0
  %455 = vmatpush1.bf16.msra.mxu0 0
  %456 = vmatprep.subr.bf16.mxu0 0
  %457 = vmatpush1.bf16.msra.mxu0 0
  %458 = vmatprep.subr.bf16.mxu0 0
  %459 = vmatpush1.bf16.msra.mxu0 0
  %460 = vmatprep.subr.bf16.mxu0 0
  %461 = vmatpush1.bf16.msra.mxu0 0
  %462 = vmatprep.subr.bf16.mxu0 0
  %463 = vmatpush1.bf16.msra.mxu0 0
  %464 = vmatprep.subr.bf16.mxu0 %v356
  %465 = vmatpush1.bf16.msra.mxu0 %v355
  %466 = vmatprep.subr.bf16.mxu0 0
  %467 = vmatpush2.bf16.msra.mxu0 0
  %468 = vmatprep.subr.bf16.mxu0 0
  %469 = vmatpush2.bf16.msra.mxu0 0
  %470 = vmatprep.subr.bf16.mxu0 0
  %471 = vmatpush2.bf16.msra.mxu0 0
  %472 = vmatprep.subr.bf16.mxu0 0
  %473 = vmatpush2.bf16.msra.mxu0 0
  %474 = vmatprep.subr.bf16.mxu0 0
  %475 = vmatpush2.bf16.msra.mxu0 0
  %476 = vmatprep.subr.bf16.mxu0 0
  %477 = vmatpush2.bf16.msra.mxu0 0
  %478 = vmatprep.subr.bf16.mxu0 0
  %479 = vmatpush2.bf16.msra.mxu0 0
  %480 = vmatprep.subr.bf16.mxu0 0
  %481 = vmatpush2.bf16.msra.mxu0 0
  %482 = vmatprep.mubr.bf16.mxu0 0
  %483 = vmatmul.mubr.bf16.gmra.mxu0 %v379
  %v484 = vpop.f32.mrf.mxu0
  %v485 = vadd.f32 0.0, %v484
  %v486 = vpop.f32.mrf.mxu0
  %v487 = vadd.f32 0.0, %v486
  %v488 = vpop.f32.mrf.mxu0
  %v489 = vadd.f32 0.0, %v488
  %v490 = vpop.f32.mrf.mxu0
  %v491 = vadd.f32 0.0, %v490
  %492 = vmatprep.mubr.bf16.mxu0 0
  %493 = vmatmul.mubr.bf16.gmra.mxu0 %v382
  %v494 = vpop.f32.mrf.mxu0
  %v495 = vadd.f32 0.0, %v494
  %v496 = vpop.f32.mrf.mxu0
  %v497 = vadd.f32 0.0, %v496
  %v498 = vpop.f32.mrf.mxu0
  %v499 = vadd.f32 0.0, %v498
  %v500 = vpop.f32.mrf.mxu0
  %v501 = vadd.f32 0.0, %v500
  %502 = vmatprep.mubr.bf16.mxu0 0
  %503 = vmatmul.mubr.bf16.gmra.mxu0 %v385
  %v504 = vpop.f32.mrf.mxu0
  %v505 = vadd.f32 0.0, %v504
  %v506 = vpop.f32.mrf.mxu0
  %v507 = vadd.f32 0.0, %v506
  %v508 = vpop.f32.mrf.mxu0
  %v509 = vadd.f32 0.0, %v508
  %v510 = vpop.f32.mrf.mxu0
  %v511 = vadd.f32 0.0, %v510
  %512 = vdwg.mxu0
  %v513 = vmul.f32 %v422, %v422
  %v514 = vmul.f32 %v424, %v424
  %v515 = vmul.f32 %v485, %v485
  %v516 = vmul.f32 %v487, %v487
  %v517 = vmul.f32 %v426, %v426
  %v518 = vmul.f32 %v428, %v428
  %v519 = vmul.f32 %v489, %v489
  %v520 = vmul.f32 %v491, %v491
  %v521 = vadd.f32 %v513, %v517
  %v522 = vrot.slane %v521, 4
  %v523 = vadd.f32 %v521, %v522
  %v524 = vrot.slane %v523, 2
  %v525 = vadd.f32 %v523, %v524
  %v526 = vrot.slane %v525, 1
  %v527 = vadd.f32 %v525, %v526
  %v528 = vadd.f32 %v514, %v518
  %v529 = vrot.slane %v528, 4
  %v530 = vadd.f32 %v528, %v529
  %v531 = vrot.slane %v530, 2
  %v532 = vadd.f32 %v530, %v531
  %v533 = vrot.slane %v532, 1
  %v534 = vadd.f32 %v532, %v533
  %v535 = vadd.f32 %v515, %v519
  %v536 = vrot.slane %v535, 4
  %v537 = vadd.f32 %v535, %v536
  %v538 = vrot.slane %v537, 2
  %v539 = vadd.f32 %v537, %v538
  %v540 = vrot.slane %v539, 1
  %v541 = vadd.f32 %v539, %v540
  %v542 = vadd.f32 %v516, %v520
  %v543 = vrot.slane %v542, 4
  %v544 = vadd.f32 %v542, %v543
  %v545 = vrot.slane %v544, 2
  %v546 = vadd.f32 %v544, %v545
  %v547 = vrot.slane %v546, 1
  %v548 = vadd.f32 %v546, %v547
  %v549 = vmax.f32 %v527, 1e-24
  %v550 = vmax.f32 %v534, 1e-24
  %v551 = vmax.f32 %v541, 1e-24
  %v552 = vmax.f32 %v548, 1e-24
  %v553 = vrsqrt.pop %v549
  %v554 = vrsqrt.pop %v550
  %v555 = vrsqrt.pop %v551
  %v556 = vrsqrt.pop %v552
  %v557 = vmul.f32 %v422, %v553
  %v558 = vmul.f32 %v424, %v554
  %v559 = vmul.f32 %v485, %v555
  %v560 = vmul.f32 %v487, %v556
  %v561 = vmul.f32 %v426, %v553
  %v562 = vmul.f32 %v428, %v554
  %v563 = vmul.f32 %v489, %v555
  %v564 = vmul.f32 %v491, %v556
  %v565 = vmul.f32 %v432, %v432
  %v566 = vmul.f32 %v434, %v434
  %v567 = vmul.f32 %v495, %v495
  %v568 = vmul.f32 %v497, %v497
  %v569 = vmul.f32 %v436, %v436
  %v570 = vmul.f32 %v438, %v438
  %v571 = vmul.f32 %v499, %v499
  %v572 = vmul.f32 %v501, %v501
  %v573 = vadd.f32 %v565, %v569
  %v574 = vrot.slane %v573, 4
  %v575 = vadd.f32 %v573, %v574
  %v576 = vrot.slane %v575, 2
  %v577 = vadd.f32 %v575, %v576
  %v578 = vrot.slane %v577, 1
  %v579 = vadd.f32 %v577, %v578
  %v580 = vadd.f32 %v566, %v570
  %v581 = vrot.slane %v580, 4
  %v582 = vadd.f32 %v580, %v581
  %v583 = vrot.slane %v582, 2
  %v584 = vadd.f32 %v582, %v583
  %v585 = vrot.slane %v584, 1
  %v586 = vadd.f32 %v584, %v585
  %v587 = vadd.f32 %v567, %v571
  %v588 = vrot.slane %v587, 4
  %v589 = vadd.f32 %v587, %v588
  %v590 = vrot.slane %v589, 2
  %v591 = vadd.f32 %v589, %v590
  %v592 = vrot.slane %v591, 1
  %v593 = vadd.f32 %v591, %v592
  %v594 = vadd.f32 %v568, %v572
  %v595 = vrot.slane %v594, 4
  %v596 = vadd.f32 %v594, %v595
  %v597 = vrot.slane %v596, 2
  %v598 = vadd.f32 %v596, %v597
  %v599 = vrot.slane %v598, 1
  %v600 = vadd.f32 %v598, %v599
  %v601 = vmax.f32 %v579, 1e-24
  %v602 = vmax.f32 %v586, 1e-24
  %v603 = vmax.f32 %v593, 1e-24
  %v604 = vmax.f32 %v600, 1e-24
  %v605 = vrsqrt.pop %v601
  %v606 = vrsqrt.pop %v602
  %v607 = vrsqrt.pop %v603
  %v608 = vrsqrt.pop %v604
  %v609 = vmul.f32 %v432, %v605
  %v610 = vmul.f32 %v434, %v606
  %v611 = vmul.f32 %v495, %v607
  %v612 = vmul.f32 %v497, %v608
  %v613 = vmul.f32 %v436, %v605
  %v614 = vmul.f32 %v438, %v606
  %v615 = vmul.f32 %v499, %v607
  %v616 = vmul.f32 %v501, %v608
  %v617 = vmax.f32 %v609, %v613
  %v618 = vrot.slane %v617, 4
  %v619 = vmax.f32 %v617, %v618
  %v620 = vrot.slane %v619, 2
  %v621 = vmax.f32 %v619, %v620
  %v622 = vrot.slane %v621, 1
  %v623 = vmax.f32 %v621, %v622
  %v624 = vmax.f32 %v610, %v614
  %v625 = vrot.slane %v624, 4
  %v626 = vmax.f32 %v624, %v625
  %v627 = vrot.slane %v626, 2
  %v628 = vmax.f32 %v626, %v627
  %v629 = vrot.slane %v628, 1
  %v630 = vmax.f32 %v628, %v629
  %v631 = vmax.f32 %v611, %v615
  %v632 = vrot.slane %v631, 4
  %v633 = vmax.f32 %v631, %v632
  %v634 = vrot.slane %v633, 2
  %v635 = vmax.f32 %v633, %v634
  %v636 = vrot.slane %v635, 1
  %v637 = vmax.f32 %v635, %v636
  %v638 = vmax.f32 %v612, %v616
  %v639 = vrot.slane %v638, 4
  %v640 = vmax.f32 %v638, %v639
  %v641 = vrot.slane %v640, 2
  %v642 = vmax.f32 %v640, %v641
  %v643 = vrot.slane %v642, 1
  %v644 = vmax.f32 %v642, %v643
  %v645 = vmin.f32 %v609, %v613
  %v646 = vrot.slane %v645, 4
  %v647 = vmin.f32 %v645, %v646
  %v648 = vrot.slane %v647, 2
  %v649 = vmin.f32 %v647, %v648
  %v650 = vrot.slane %v649, 1
  %v651 = vmin.f32 %v649, %v650
  %v652 = vmin.f32 %v610, %v614
  %v653 = vrot.slane %v652, 4
  %v654 = vmin.f32 %v652, %v653
  %v655 = vrot.slane %v654, 2
  %v656 = vmin.f32 %v654, %v655
  %v657 = vrot.slane %v656, 1
  %v658 = vmin.f32 %v656, %v657
  %v659 = vmin.f32 %v611, %v615
  %v660 = vrot.slane %v659, 4
  %v661 = vmin.f32 %v659, %v660
  %v662 = vrot.slane %v661, 2
  %v663 = vmin.f32 %v661, %v662
  %v664 = vrot.slane %v663, 1
  %v665 = vmin.f32 %v663, %v664
  %v666 = vmin.f32 %v612, %v616
  %v667 = vrot.slane %v666, 4
  %v668 = vmin.f32 %v666, %v667
  %v669 = vrot.slane %v668, 2
  %v670 = vmin.f32 %v668, %v669
  %v671 = vrot.slane %v670, 1
  %v672 = vmin.f32 %v670, %v671
  %v673 = vmul.f32 %v557, %v623
  %v674 = vmul.f32 %v558, %v630
  %v675 = vmul.f32 %v559, %v637
  %v676 = vmul.f32 %v560, %v644
  %v677 = vmul.f32 %v561, %v623
  %v678 = vmul.f32 %v562, %v630
  %v679 = vmul.f32 %v563, %v637
  %v680 = vmul.f32 %v564, %v644
  %v681 = vmul.f32 %v557, %v651
  %v682 = vmul.f32 %v558, %v658
  %v683 = vmul.f32 %v559, %v665
  %v684 = vmul.f32 %v560, %v672
  %v685 = vmul.f32 %v561, %v651
  %v686 = vmul.f32 %v562, %v658
  %v687 = vmul.f32 %v563, %v665
  %v688 = vmul.f32 %v564, %v672
  %v689 = vmax.f32 %v673, %v681
  %v690 = vmax.f32 %v674, %v682
  %v691 = vmax.f32 %v675, %v683
  %v692 = vmax.f32 %v676, %v684
  %v693 = vmax.f32 %v677, %v685
  %v694 = vmax.f32 %v678, %v686
  %v695 = vmax.f32 %v679, %v687
  %v696 = vmax.f32 %v680, %v688
  %v697 = vlaneseq
  %v698 = vshrl.u32 %v697, 7
  %v699 = vsub.s32 0, %v698
  %v700 = vrot.slane %v609, %v699
  %v701 = vlaneseq
  %v702 = vshrl.u32 %v701, 7
  %v703 = vsub.s32 0, %v702
  %v704 = vrot.slane %v610, %v703
  %v705 = vlaneseq
  %v706 = vshrl.u32 %v705, 7
  %v707 = vsub.s32 0, %v706
  %v708 = vrot.slane %v611, %v707
  %v709 = vlaneseq
  %v710 = vshrl.u32 %v709, 7
  %v711 = vsub.s32 0, %v710
  %v712 = vrot.slane %v612, %v711
  %v713 = vmul.f32 %v557, %v700
  %v714 = vmul.f32 %v558, %v704
  %v715 = vmul.f32 %v559, %v708
  %v716 = vmul.f32 %v560, %v712
  %v717 = vmul.f32 %v561, %v700
  %v718 = vmul.f32 %v562, %v704
  %v719 = vmul.f32 %v563, %v708
  %v720 = vmul.f32 %v564, %v712
  %v721 = vsub.f32 %v713, %v689
  %v722 = vsub.f32 %v714, %v690
  %v723 = vsub.f32 %v715, %v691
  %v724 = vsub.f32 %v716, %v692
  %v725 = vsub.f32 %v717, %v693
  %v726 = vsub.f32 %v718, %v694
  %v727 = vsub.f32 %v719, %v695
  %v728 = vsub.f32 %v720, %v696
  %v729 = vmul.f32 %v721, 1.442695
  %v730 = vpow.pop %v729
  %v731 = vmul.f32 %v722, 1.442695
  %v732 = vpow.pop %v731
  %v733 = vmul.f32 %v723, 1.442695
  %v734 = vpow.pop %v733
  %v735 = vmul.f32 %v724, 1.442695
  %v736 = vpow.pop %v735
  %v737 = vmul.f32 %v725, 1.442695
  %v738 = vpow.pop %v737
  %v739 = vmul.f32 %v726, 1.442695
  %v740 = vpow.pop %v739
  %v741 = vmul.f32 %v727, 1.442695
  %v742 = vpow.pop %v741
  %v743 = vmul.f32 %v728, 1.442695
  %v744 = vpow.pop %v743
  %v745 = vlaneseq
  %v746 = vshrl.u32 %v745, 7
  %v747 = vsub.s32 0, %v746
  %v748 = vrot.slane %v442, %v747
  %v749 = vlaneseq
  %v750 = vshrl.u32 %v749, 7
  %v751 = vsub.s32 0, %v750
  %v752 = vrot.slane %v444, %v751
  %v753 = vlaneseq
  %v754 = vshrl.u32 %v753, 7
  %v755 = vsub.s32 0, %v754
  %v756 = vrot.slane %v505, %v755
  %v757 = vlaneseq
  %v758 = vshrl.u32 %v757, 7
  %v759 = vsub.s32 0, %v758
  %v760 = vrot.slane %v507, %v759
  %v761 = vmul.f32 %v730, %v748
  %v762 = vmul.f32 %v732, %v752
  %v763 = vmul.f32 %v734, %v756
  %v764 = vmul.f32 %v736, %v760
  %v765 = vmul.f32 %v738, %v748
  %v766 = vmul.f32 %v740, %v752
  %v767 = vmul.f32 %v742, %v756
  %v768 = vmul.f32 %v744, %v760
  %v769 = vadd.f32 %v761, 0.0
  %v770 = vadd.f32 %v762, 0.0
  %v771 = vadd.f32 %v763, 0.0
  %v772 = vadd.f32 %v764, 0.0
  %v773 = vadd.f32 %v765, 0.0
  %v774 = vadd.f32 %v766, 0.0
  %v775 = vadd.f32 %v767, 0.0
  %v776 = vadd.f32 %v768, 0.0
  %v777 = vadd.f32 %v730, 0.0
  %v778 = vadd.f32 %v732, 0.0
  %v779 = vadd.f32 %v734, 0.0
  %v780 = vadd.f32 %v736, 0.0
  %v781 = vadd.f32 %v738, 0.0
  %v782 = vadd.f32 %v740, 0.0
  %v783 = vadd.f32 %v742, 0.0
  %v784 = vadd.f32 %v744, 0.0
  %v785 = vlaneseq
  %v786 = vshrl.u32 %v785, 7
  %v787 = vsub.s32 1, %v786
  %v788 = vrot.slane %v609, %v787
  %v789 = vlaneseq
  %v790 = vshrl.u32 %v789, 7
  %v791 = vsub.s32 1, %v790
  %v792 = vrot.slane %v610, %v791
  %v793 = vlaneseq
  %v794 = vshrl.u32 %v793, 7
  %v795 = vsub.s32 1, %v794
  %v796 = vrot.slane %v611, %v795
  %v797 = vlaneseq
  %v798 = vshrl.u32 %v797, 7
  %v799 = vsub.s32 1, %v798
  %v800 = vrot.slane %v612, %v799
  %v801 = vmul.f32 %v557, %v788
  %v802 = vmul.f32 %v558, %v792
  %v803 = vmul.f32 %v559, %v796
  %v804 = vmul.f32 %v560, %v800
  %v805 = vmul.f32 %v561, %v788
  %v806 = vmul.f32 %v562, %v792
  %v807 = vmul.f32 %v563, %v796
  %v808 = vmul.f32 %v564, %v800
  %v809 = vsub.f32 %v801, %v689
  %v810 = vsub.f32 %v802, %v690
  %v811 = vsub.f32 %v803, %v691
  %v812 = vsub.f32 %v804, %v692
  %v813 = vsub.f32 %v805, %v693
  %v814 = vsub.f32 %v806, %v694
  %v815 = vsub.f32 %v807, %v695
  %v816 = vsub.f32 %v808, %v696
  %v817 = vmul.f32 %v809, 1.442695
  %v818 = vpow.pop %v817
  %v819 = vmul.f32 %v810, 1.442695
  %v820 = vpow.pop %v819
  %v821 = vmul.f32 %v811, 1.442695
  %v822 = vpow.pop %v821
  %v823 = vmul.f32 %v812, 1.442695
  %v824 = vpow.pop %v823
  %v825 = vmul.f32 %v813, 1.442695
  %v826 = vpow.pop %v825
  %v827 = vmul.f32 %v814, 1.442695
  %v828 = vpow.pop %v827
  %v829 = vmul.f32 %v815, 1.442695
  %v830 = vpow.pop %v829
  %v831 = vmul.f32 %v816, 1.442695
  %v832 = vpow.pop %v831
  %v833 = vlaneseq
  %v834 = vshrl.u32 %v833, 7
  %v835 = vsub.s32 1, %v834
  %v836 = vrot.slane %v442, %v835
  %v837 = vlaneseq
  %v838 = vshrl.u32 %v837, 7
  %v839 = vsub.s32 1, %v838
  %v840 = vrot.slane %v444, %v839
  %v841 = vlaneseq
  %v842 = vshrl.u32 %v841, 7
  %v843 = vsub.s32 1, %v842
  %v844 = vrot.slane %v505, %v843
  %v845 = vlaneseq
  %v846 = vshrl.u32 %v845, 7
  %v847 = vsub.s32 1, %v846
  %v848 = vrot.slane %v507, %v847
  %v849 = vmul.f32 %v818, %v836
  %v850 = vmul.f32 %v820, %v840
  %v851 = vmul.f32 %v822, %v844
  %v852 = vmul.f32 %v824, %v848
  %v853 = vmul.f32 %v826, %v836
  %v854 = vmul.f32 %v828, %v840
  %v855 = vmul.f32 %v830, %v844
  %v856 = vmul.f32 %v832, %v848
  %v857 = vadd.f32 %v769, %v849
  %v858 = vadd.f32 %v770, %v850
  %v859 = vadd.f32 %v771, %v851
  %v860 = vadd.f32 %v772, %v852
  %v861 = vadd.f32 %v773, %v853
  %v862 = vadd.f32 %v774, %v854
  %v863 = vadd.f32 %v775, %v855
  %v864 = vadd.f32 %v776, %v856
  %v865 = vadd.f32 %v777, %v818
  %v866 = vadd.f32 %v778, %v820
  %v867 = vadd.f32 %v779, %v822
  %v868 = vadd.f32 %v780, %v824
  %v869 = vadd.f32 %v781, %v826
  %v870 = vadd.f32 %v782, %v828
  %v871 = vadd.f32 %v783, %v830
  %v872 = vadd.f32 %v784, %v832
  %v873 = vlaneseq
  %v874 = vshrl.u32 %v873, 7
  %v875 = vsub.s32 2, %v874
  %v876 = vrot.slane %v609, %v875
  %v877 = vlaneseq
  %v878 = vshrl.u32 %v877, 7
  %v879 = vsub.s32 2, %v878
  %v880 = vrot.slane %v610, %v879
  %v881 = vlaneseq
  %v882 = vshrl.u32 %v881, 7
  %v883 = vsub.s32 2, %v882
  %v884 = vrot.slane %v611, %v883
  %v885 = vlaneseq
  %v886 = vshrl.u32 %v885, 7
  %v887 = vsub.s32 2, %v886
  %v888 = vrot.slane %v612, %v887
  %v889 = vmul.f32 %v557, %v876
  %v890 = vmul.f32 %v558, %v880
  %v891 = vmul.f32 %v559, %v884
  %v892 = vmul.f32 %v560, %v888
  %v893 = vmul.f32 %v561, %v876
  %v894 = vmul.f32 %v562, %v880
  %v895 = vmul.f32 %v563, %v884
  %v896 = vmul.f32 %v564, %v888
  %v897 = vsub.f32 %v889, %v689
  %v898 = vsub.f32 %v890, %v690
  %v899 = vsub.f32 %v891, %v691
  %v900 = vsub.f32 %v892, %v692
  %v901 = vsub.f32 %v893, %v693
  %v902 = vsub.f32 %v894, %v694
  %v903 = vsub.f32 %v895, %v695
  %v904 = vsub.f32 %v896, %v696
  %v905 = vmul.f32 %v897, 1.442695
  %v906 = vpow.pop %v905
  %v907 = vmul.f32 %v898, 1.442695
  %v908 = vpow.pop %v907
  %v909 = vmul.f32 %v899, 1.442695
  %v910 = vpow.pop %v909
  %v911 = vmul.f32 %v900, 1.442695
  %v912 = vpow.pop %v911
  %v913 = vmul.f32 %v901, 1.442695
  %v914 = vpow.pop %v913
  %v915 = vmul.f32 %v902, 1.442695
  %v916 = vpow.pop %v915
  %v917 = vmul.f32 %v903, 1.442695
  %v918 = vpow.pop %v917
  %v919 = vmul.f32 %v904, 1.442695
  %v920 = vpow.pop %v919
  %v921 = vlaneseq
  %v922 = vshrl.u32 %v921, 7
  %v923 = vsub.s32 2, %v922
  %v924 = vrot.slane %v442, %v923
  %v925 = vlaneseq
  %v926 = vshrl.u32 %v925, 7
  %v927 = vsub.s32 2, %v926
  %v928 = vrot.slane %v444, %v927
  %v929 = vlaneseq
  %v930 = vshrl.u32 %v929, 7
  %v931 = vsub.s32 2, %v930
  %v932 = vrot.slane %v505, %v931
  %v933 = vlaneseq
  %v934 = vshrl.u32 %v933, 7
  %v935 = vsub.s32 2, %v934
  %v936 = vrot.slane %v507, %v935
  %v937 = vmul.f32 %v906, %v924
  %v938 = vmul.f32 %v908, %v928
  %v939 = vmul.f32 %v910, %v932
  %v940 = vmul.f32 %v912, %v936
  %v941 = vmul.f32 %v914, %v924
  %v942 = vmul.f32 %v916, %v928
  %v943 = vmul.f32 %v918, %v932
  %v944 = vmul.f32 %v920, %v936
  %v945 = vadd.f32 %v857, %v937
  %v946 = vadd.f32 %v858, %v938
  %v947 = vadd.f32 %v859, %v939
  %v948 = vadd.f32 %v860, %v940
  %v949 = vadd.f32 %v861, %v941
  %v950 = vadd.f32 %v862, %v942
  %v951 = vadd.f32 %v863, %v943
  %v952 = vadd.f32 %v864, %v944
  %v953 = vadd.f32 %v865, %v906
  %v954 = vadd.f32 %v866, %v908
  %v955 = vadd.f32 %v867, %v910
  %v956 = vadd.f32 %v868, %v912
  %v957 = vadd.f32 %v869, %v914
  %v958 = vadd.f32 %v870, %v916
  %v959 = vadd.f32 %v871, %v918
  %v960 = vadd.f32 %v872, %v920
  %v961 = vlaneseq
  %v962 = vshrl.u32 %v961, 7
  %v963 = vsub.s32 3, %v962
  %v964 = vrot.slane %v609, %v963
  %v965 = vlaneseq
  %v966 = vshrl.u32 %v965, 7
  %v967 = vsub.s32 3, %v966
  %v968 = vrot.slane %v610, %v967
  %v969 = vlaneseq
  %v970 = vshrl.u32 %v969, 7
  %v971 = vsub.s32 3, %v970
  %v972 = vrot.slane %v611, %v971
  %v973 = vlaneseq
  %v974 = vshrl.u32 %v973, 7
  %v975 = vsub.s32 3, %v974
  %v976 = vrot.slane %v612, %v975
  %v977 = vmul.f32 %v557, %v964
  %v978 = vmul.f32 %v558, %v968
  %v979 = vmul.f32 %v559, %v972
  %v980 = vmul.f32 %v560, %v976
  %v981 = vmul.f32 %v561, %v964
  %v982 = vmul.f32 %v562, %v968
  %v983 = vmul.f32 %v563, %v972
  %v984 = vmul.f32 %v564, %v976
  %v985 = vsub.f32 %v977, %v689
  %v986 = vsub.f32 %v978, %v690
  %v987 = vsub.f32 %v979, %v691
  %v988 = vsub.f32 %v980, %v692
  %v989 = vsub.f32 %v981, %v693
  %v990 = vsub.f32 %v982, %v694
  %v991 = vsub.f32 %v983, %v695
  %v992 = vsub.f32 %v984, %v696
  %v993 = vmul.f32 %v985, 1.442695
  %v994 = vpow.pop %v993
  %v995 = vmul.f32 %v986, 1.442695
  %v996 = vpow.pop %v995
  %v997 = vmul.f32 %v987, 1.442695
  %v998 = vpow.pop %v997
  %v999 = vmul.f32 %v988, 1.442695
  %v1000 = vpow.pop %v999
  %v1001 = vmul.f32 %v989, 1.442695
  %v1002 = vpow.pop %v1001
  %v1003 = vmul.f32 %v990, 1.442695
  %v1004 = vpow.pop %v1003
  %v1005 = vmul.f32 %v991, 1.442695
  %v1006 = vpow.pop %v1005
  %v1007 = vmul.f32 %v992, 1.442695
  %v1008 = vpow.pop %v1007
  %v1009 = vlaneseq
  %v1010 = vshrl.u32 %v1009, 7
  %v1011 = vsub.s32 3, %v1010
  %v1012 = vrot.slane %v442, %v1011
  %v1013 = vlaneseq
  %v1014 = vshrl.u32 %v1013, 7
  %v1015 = vsub.s32 3, %v1014
  %v1016 = vrot.slane %v444, %v1015
  %v1017 = vlaneseq
  %v1018 = vshrl.u32 %v1017, 7
  %v1019 = vsub.s32 3, %v1018
  %v1020 = vrot.slane %v505, %v1019
  %v1021 = vlaneseq
  %v1022 = vshrl.u32 %v1021, 7
  %v1023 = vsub.s32 3, %v1022
  %v1024 = vrot.slane %v507, %v1023
  %v1025 = vmul.f32 %v994, %v1012
  %v1026 = vmul.f32 %v996, %v1016
  %v1027 = vmul.f32 %v998, %v1020
  %v1028 = vmul.f32 %v1000, %v1024
  %v1029 = vmul.f32 %v1002, %v1012
  %v1030 = vmul.f32 %v1004, %v1016
  %v1031 = vmul.f32 %v1006, %v1020
  %v1032 = vmul.f32 %v1008, %v1024
  %v1033 = vadd.f32 %v945, %v1025
  %v1034 = vadd.f32 %v946, %v1026
  %v1035 = vadd.f32 %v947, %v1027
  %v1036 = vadd.f32 %v948, %v1028
  %v1037 = vadd.f32 %v949, %v1029
  %v1038 = vadd.f32 %v950, %v1030
  %v1039 = vadd.f32 %v951, %v1031
  %v1040 = vadd.f32 %v952, %v1032
  %v1041 = vadd.f32 %v953, %v994
  %v1042 = vadd.f32 %v954, %v996
  %v1043 = vadd.f32 %v955, %v998
  %v1044 = vadd.f32 %v956, %v1000
  %v1045 = vadd.f32 %v957, %v1002
  %v1046 = vadd.f32 %v958, %v1004
  %v1047 = vadd.f32 %v959, %v1006
  %v1048 = vadd.f32 %v960, %v1008
  %v1049 = vlaneseq
  %v1050 = vshrl.u32 %v1049, 7
  %v1051 = vsub.s32 4, %v1050
  %v1052 = vrot.slane %v609, %v1051
  %v1053 = vlaneseq
  %v1054 = vshrl.u32 %v1053, 7
  %v1055 = vsub.s32 4, %v1054
  %v1056 = vrot.slane %v610, %v1055
  %v1057 = vlaneseq
  %v1058 = vshrl.u32 %v1057, 7
  %v1059 = vsub.s32 4, %v1058
  %v1060 = vrot.slane %v611, %v1059
  %v1061 = vlaneseq
  %v1062 = vshrl.u32 %v1061, 7
  %v1063 = vsub.s32 4, %v1062
  %v1064 = vrot.slane %v612, %v1063
  %v1065 = vmul.f32 %v557, %v1052
  %v1066 = vmul.f32 %v558, %v1056
  %v1067 = vmul.f32 %v559, %v1060
  %v1068 = vmul.f32 %v560, %v1064
  %v1069 = vmul.f32 %v561, %v1052
  %v1070 = vmul.f32 %v562, %v1056
  %v1071 = vmul.f32 %v563, %v1060
  %v1072 = vmul.f32 %v564, %v1064
  %v1073 = vsub.f32 %v1065, %v689
  %v1074 = vsub.f32 %v1066, %v690
  %v1075 = vsub.f32 %v1067, %v691
  %v1076 = vsub.f32 %v1068, %v692
  %v1077 = vsub.f32 %v1069, %v693
  %v1078 = vsub.f32 %v1070, %v694
  %v1079 = vsub.f32 %v1071, %v695
  %v1080 = vsub.f32 %v1072, %v696
  %v1081 = vmul.f32 %v1073, 1.442695
  %v1082 = vpow.pop %v1081
  %v1083 = vmul.f32 %v1074, 1.442695
  %v1084 = vpow.pop %v1083
  %v1085 = vmul.f32 %v1075, 1.442695
  %v1086 = vpow.pop %v1085
  %v1087 = vmul.f32 %v1076, 1.442695
  %v1088 = vpow.pop %v1087
  %v1089 = vmul.f32 %v1077, 1.442695
  %v1090 = vpow.pop %v1089
  %v1091 = vmul.f32 %v1078, 1.442695
  %v1092 = vpow.pop %v1091
  %v1093 = vmul.f32 %v1079, 1.442695
  %v1094 = vpow.pop %v1093
  %v1095 = vmul.f32 %v1080, 1.442695
  %v1096 = vpow.pop %v1095
  %v1097 = vlaneseq
  %v1098 = vshrl.u32 %v1097, 7
  %v1099 = vsub.s32 4, %v1098
  %v1100 = vrot.slane %v442, %v1099
  %v1101 = vlaneseq
  %v1102 = vshrl.u32 %v1101, 7
  %v1103 = vsub.s32 4, %v1102
  %v1104 = vrot.slane %v444, %v1103
  %v1105 = vlaneseq
  %v1106 = vshrl.u32 %v1105, 7
  %v1107 = vsub.s32 4, %v1106
  %v1108 = vrot.slane %v505, %v1107
  %v1109 = vlaneseq
  %v1110 = vshrl.u32 %v1109, 7
  %v1111 = vsub.s32 4, %v1110
  %v1112 = vrot.slane %v507, %v1111
  %v1113 = vmul.f32 %v1082, %v1100
  %v1114 = vmul.f32 %v1084, %v1104
  %v1115 = vmul.f32 %v1086, %v1108
  %v1116 = vmul.f32 %v1088, %v1112
  %v1117 = vmul.f32 %v1090, %v1100
  %v1118 = vmul.f32 %v1092, %v1104
  %v1119 = vmul.f32 %v1094, %v1108
  %v1120 = vmul.f32 %v1096, %v1112
  %v1121 = vadd.f32 %v1033, %v1113
  %v1122 = vadd.f32 %v1034, %v1114
  %v1123 = vadd.f32 %v1035, %v1115
  %v1124 = vadd.f32 %v1036, %v1116
  %v1125 = vadd.f32 %v1037, %v1117
  %v1126 = vadd.f32 %v1038, %v1118
  %v1127 = vadd.f32 %v1039, %v1119
  %v1128 = vadd.f32 %v1040, %v1120
  %v1129 = vadd.f32 %v1041, %v1082
  %v1130 = vadd.f32 %v1042, %v1084
  %v1131 = vadd.f32 %v1043, %v1086
  %v1132 = vadd.f32 %v1044, %v1088
  %v1133 = vadd.f32 %v1045, %v1090
  %v1134 = vadd.f32 %v1046, %v1092
  %v1135 = vadd.f32 %v1047, %v1094
  %v1136 = vadd.f32 %v1048, %v1096
  %v1137 = vlaneseq
  %v1138 = vshrl.u32 %v1137, 7
  %v1139 = vsub.s32 5, %v1138
  %v1140 = vrot.slane %v609, %v1139
  %v1141 = vlaneseq
  %v1142 = vshrl.u32 %v1141, 7
  %v1143 = vsub.s32 5, %v1142
  %v1144 = vrot.slane %v610, %v1143
  %v1145 = vlaneseq
  %v1146 = vshrl.u32 %v1145, 7
  %v1147 = vsub.s32 5, %v1146
  %v1148 = vrot.slane %v611, %v1147
  %v1149 = vlaneseq
  %v1150 = vshrl.u32 %v1149, 7
  %v1151 = vsub.s32 5, %v1150
  %v1152 = vrot.slane %v612, %v1151
  %v1153 = vmul.f32 %v557, %v1140
  %v1154 = vmul.f32 %v558, %v1144
  %v1155 = vmul.f32 %v559, %v1148
  %v1156 = vmul.f32 %v560, %v1152
  %v1157 = vmul.f32 %v561, %v1140
  %v1158 = vmul.f32 %v562, %v1144
  %v1159 = vmul.f32 %v563, %v1148
  %v1160 = vmul.f32 %v564, %v1152
  %v1161 = vsub.f32 %v1153, %v689
  %v1162 = vsub.f32 %v1154, %v690
  %v1163 = vsub.f32 %v1155, %v691
  %v1164 = vsub.f32 %v1156, %v692
  %v1165 = vsub.f32 %v1157, %v693
  %v1166 = vsub.f32 %v1158, %v694
  %v1167 = vsub.f32 %v1159, %v695
  %v1168 = vsub.f32 %v1160, %v696
  %v1169 = vmul.f32 %v1161, 1.442695
  %v1170 = vpow.pop %v1169
  %v1171 = vmul.f32 %v1162, 1.442695
  %v1172 = vpow.pop %v1171
  %v1173 = vmul.f32 %v1163, 1.442695
  %v1174 = vpow.pop %v1173
  %v1175 = vmul.f32 %v1164, 1.442695
  %v1176 = vpow.pop %v1175
  %v1177 = vmul.f32 %v1165, 1.442695
  %v1178 = vpow.pop %v1177
  %v1179 = vmul.f32 %v1166, 1.442695
  %v1180 = vpow.pop %v1179
  %v1181 = vmul.f32 %v1167, 1.442695
  %v1182 = vpow.pop %v1181
  %v1183 = vmul.f32 %v1168, 1.442695
  %v1184 = vpow.pop %v1183
  %v1185 = vlaneseq
  %v1186 = vshrl.u32 %v1185, 7
  %v1187 = vsub.s32 5, %v1186
  %v1188 = vrot.slane %v442, %v1187
  %v1189 = vlaneseq
  %v1190 = vshrl.u32 %v1189, 7
  %v1191 = vsub.s32 5, %v1190
  %v1192 = vrot.slane %v444, %v1191
  %v1193 = vlaneseq
  %v1194 = vshrl.u32 %v1193, 7
  %v1195 = vsub.s32 5, %v1194
  %v1196 = vrot.slane %v505, %v1195
  %v1197 = vlaneseq
  %v1198 = vshrl.u32 %v1197, 7
  %v1199 = vsub.s32 5, %v1198
  %v1200 = vrot.slane %v507, %v1199
  %v1201 = vmul.f32 %v1170, %v1188
  %v1202 = vmul.f32 %v1172, %v1192
  %v1203 = vmul.f32 %v1174, %v1196
  %v1204 = vmul.f32 %v1176, %v1200
  %v1205 = vmul.f32 %v1178, %v1188
  %v1206 = vmul.f32 %v1180, %v1192
  %v1207 = vmul.f32 %v1182, %v1196
  %v1208 = vmul.f32 %v1184, %v1200
  %v1209 = vadd.f32 %v1121, %v1201
  %v1210 = vadd.f32 %v1122, %v1202
  %v1211 = vadd.f32 %v1123, %v1203
  %v1212 = vadd.f32 %v1124, %v1204
  %v1213 = vadd.f32 %v1125, %v1205
  %v1214 = vadd.f32 %v1126, %v1206
  %v1215 = vadd.f32 %v1127, %v1207
  %v1216 = vadd.f32 %v1128, %v1208
  %v1217 = vadd.f32 %v1129, %v1170
  %v1218 = vadd.f32 %v1130, %v1172
  %v1219 = vadd.f32 %v1131, %v1174
  %v1220 = vadd.f32 %v1132, %v1176
  %v1221 = vadd.f32 %v1133, %v1178
  %v1222 = vadd.f32 %v1134, %v1180
  %v1223 = vadd.f32 %v1135, %v1182
  %v1224 = vadd.f32 %v1136, %v1184
  %v1225 = vlaneseq
  %v1226 = vshrl.u32 %v1225, 7
  %v1227 = vsub.s32 6, %v1226
  %v1228 = vrot.slane %v609, %v1227
  %v1229 = vlaneseq
  %v1230 = vshrl.u32 %v1229, 7
  %v1231 = vsub.s32 6, %v1230
  %v1232 = vrot.slane %v610, %v1231
  %v1233 = vlaneseq
  %v1234 = vshrl.u32 %v1233, 7
  %v1235 = vsub.s32 6, %v1234
  %v1236 = vrot.slane %v611, %v1235
  %v1237 = vlaneseq
  %v1238 = vshrl.u32 %v1237, 7
  %v1239 = vsub.s32 6, %v1238
  %v1240 = vrot.slane %v612, %v1239
  %v1241 = vmul.f32 %v557, %v1228
  %v1242 = vmul.f32 %v558, %v1232
  %v1243 = vmul.f32 %v559, %v1236
  %v1244 = vmul.f32 %v560, %v1240
  %v1245 = vmul.f32 %v561, %v1228
  %v1246 = vmul.f32 %v562, %v1232
  %v1247 = vmul.f32 %v563, %v1236
  %v1248 = vmul.f32 %v564, %v1240
  %v1249 = vsub.f32 %v1241, %v689
  %v1250 = vsub.f32 %v1242, %v690
  %v1251 = vsub.f32 %v1243, %v691
  %v1252 = vsub.f32 %v1244, %v692
  %v1253 = vsub.f32 %v1245, %v693
  %v1254 = vsub.f32 %v1246, %v694
  %v1255 = vsub.f32 %v1247, %v695
  %v1256 = vsub.f32 %v1248, %v696
  %v1257 = vmul.f32 %v1249, 1.442695
  %v1258 = vpow.pop %v1257
  %v1259 = vmul.f32 %v1250, 1.442695
  %v1260 = vpow.pop %v1259
  %v1261 = vmul.f32 %v1251, 1.442695
  %v1262 = vpow.pop %v1261
  %v1263 = vmul.f32 %v1252, 1.442695
  %v1264 = vpow.pop %v1263
  %v1265 = vmul.f32 %v1253, 1.442695
  %v1266 = vpow.pop %v1265
  %v1267 = vmul.f32 %v1254, 1.442695
  %v1268 = vpow.pop %v1267
  %v1269 = vmul.f32 %v1255, 1.442695
  %v1270 = vpow.pop %v1269
  %v1271 = vmul.f32 %v1256, 1.442695
  %v1272 = vpow.pop %v1271
  %v1273 = vlaneseq
  %v1274 = vshrl.u32 %v1273, 7
  %v1275 = vsub.s32 6, %v1274
  %v1276 = vrot.slane %v442, %v1275
  %v1277 = vlaneseq
  %v1278 = vshrl.u32 %v1277, 7
  %v1279 = vsub.s32 6, %v1278
  %v1280 = vrot.slane %v444, %v1279
  %v1281 = vlaneseq
  %v1282 = vshrl.u32 %v1281, 7
  %v1283 = vsub.s32 6, %v1282
  %v1284 = vrot.slane %v505, %v1283
  %v1285 = vlaneseq
  %v1286 = vshrl.u32 %v1285, 7
  %v1287 = vsub.s32 6, %v1286
  %v1288 = vrot.slane %v507, %v1287
  %v1289 = vmul.f32 %v1258, %v1276
  %v1290 = vmul.f32 %v1260, %v1280
  %v1291 = vmul.f32 %v1262, %v1284
  %v1292 = vmul.f32 %v1264, %v1288
  %v1293 = vmul.f32 %v1266, %v1276
  %v1294 = vmul.f32 %v1268, %v1280
  %v1295 = vmul.f32 %v1270, %v1284
  %v1296 = vmul.f32 %v1272, %v1288
  %v1297 = vadd.f32 %v1209, %v1289
  %v1298 = vadd.f32 %v1210, %v1290
  %v1299 = vadd.f32 %v1211, %v1291
  %v1300 = vadd.f32 %v1212, %v1292
  %v1301 = vadd.f32 %v1213, %v1293
  %v1302 = vadd.f32 %v1214, %v1294
  %v1303 = vadd.f32 %v1215, %v1295
  %v1304 = vadd.f32 %v1216, %v1296
  %v1305 = vadd.f32 %v1217, %v1258
  %v1306 = vadd.f32 %v1218, %v1260
  %v1307 = vadd.f32 %v1219, %v1262
  %v1308 = vadd.f32 %v1220, %v1264
  %v1309 = vadd.f32 %v1221, %v1266
  %v1310 = vadd.f32 %v1222, %v1268
  %v1311 = vadd.f32 %v1223, %v1270
  %v1312 = vadd.f32 %v1224, %v1272
  %v1313 = vlaneseq
  %v1314 = vshrl.u32 %v1313, 7
  %v1315 = vsub.s32 7, %v1314
  %v1316 = vrot.slane %v609, %v1315
  %v1317 = vlaneseq
  %v1318 = vshrl.u32 %v1317, 7
  %v1319 = vsub.s32 7, %v1318
  %v1320 = vrot.slane %v610, %v1319
  %v1321 = vlaneseq
  %v1322 = vshrl.u32 %v1321, 7
  %v1323 = vsub.s32 7, %v1322
  %v1324 = vrot.slane %v611, %v1323
  %v1325 = vlaneseq
  %v1326 = vshrl.u32 %v1325, 7
  %v1327 = vsub.s32 7, %v1326
  %v1328 = vrot.slane %v612, %v1327
  %v1329 = vmul.f32 %v557, %v1316
  %v1330 = vmul.f32 %v558, %v1320
  %v1331 = vmul.f32 %v559, %v1324
  %v1332 = vmul.f32 %v560, %v1328
  %v1333 = vmul.f32 %v561, %v1316
  %v1334 = vmul.f32 %v562, %v1320
  %v1335 = vmul.f32 %v563, %v1324
  %v1336 = vmul.f32 %v564, %v1328
  %v1337 = vsub.f32 %v1329, %v689
  %v1338 = vsub.f32 %v1330, %v690
  %v1339 = vsub.f32 %v1331, %v691
  %v1340 = vsub.f32 %v1332, %v692
  %v1341 = vsub.f32 %v1333, %v693
  %v1342 = vsub.f32 %v1334, %v694
  %v1343 = vsub.f32 %v1335, %v695
  %v1344 = vsub.f32 %v1336, %v696
  %v1345 = vmul.f32 %v1337, 1.442695
  %v1346 = vpow.pop %v1345
  %v1347 = vmul.f32 %v1338, 1.442695
  %v1348 = vpow.pop %v1347
  %v1349 = vmul.f32 %v1339, 1.442695
  %v1350 = vpow.pop %v1349
  %v1351 = vmul.f32 %v1340, 1.442695
  %v1352 = vpow.pop %v1351
  %v1353 = vmul.f32 %v1341, 1.442695
  %v1354 = vpow.pop %v1353
  %v1355 = vmul.f32 %v1342, 1.442695
  %v1356 = vpow.pop %v1355
  %v1357 = vmul.f32 %v1343, 1.442695
  %v1358 = vpow.pop %v1357
  %v1359 = vmul.f32 %v1344, 1.442695
  %v1360 = vpow.pop %v1359
  %v1361 = vlaneseq
  %v1362 = vshrl.u32 %v1361, 7
  %v1363 = vsub.s32 7, %v1362
  %v1364 = vrot.slane %v442, %v1363
  %v1365 = vlaneseq
  %v1366 = vshrl.u32 %v1365, 7
  %v1367 = vsub.s32 7, %v1366
  %v1368 = vrot.slane %v444, %v1367
  %v1369 = vlaneseq
  %v1370 = vshrl.u32 %v1369, 7
  %v1371 = vsub.s32 7, %v1370
  %v1372 = vrot.slane %v505, %v1371
  %v1373 = vlaneseq
  %v1374 = vshrl.u32 %v1373, 7
  %v1375 = vsub.s32 7, %v1374
  %v1376 = vrot.slane %v507, %v1375
  %v1377 = vmul.f32 %v1346, %v1364
  %v1378 = vmul.f32 %v1348, %v1368
  %v1379 = vmul.f32 %v1350, %v1372
  %v1380 = vmul.f32 %v1352, %v1376
  %v1381 = vmul.f32 %v1354, %v1364
  %v1382 = vmul.f32 %v1356, %v1368
  %v1383 = vmul.f32 %v1358, %v1372
  %v1384 = vmul.f32 %v1360, %v1376
  %v1385 = vadd.f32 %v1297, %v1377
  %v1386 = vadd.f32 %v1298, %v1378
  %v1387 = vadd.f32 %v1299, %v1379
  %v1388 = vadd.f32 %v1300, %v1380
  %v1389 = vadd.f32 %v1301, %v1381
  %v1390 = vadd.f32 %v1302, %v1382
  %v1391 = vadd.f32 %v1303, %v1383
  %v1392 = vadd.f32 %v1304, %v1384
  %v1393 = vadd.f32 %v1305, %v1346
  %v1394 = vadd.f32 %v1306, %v1348
  %v1395 = vadd.f32 %v1307, %v1350
  %v1396 = vadd.f32 %v1308, %v1352
  %v1397 = vadd.f32 %v1309, %v1354
  %v1398 = vadd.f32 %v1310, %v1356
  %v1399 = vadd.f32 %v1311, %v1358
  %v1400 = vadd.f32 %v1312, %v1360
  %v1401 = vlaneseq
  %v1402 = vshrl.u32 %v1401, 7
  %v1403 = vsub.s32 0, %v1402
  %v1404 = vrot.slane %v613, %v1403
  %v1405 = vlaneseq
  %v1406 = vshrl.u32 %v1405, 7
  %v1407 = vsub.s32 0, %v1406
  %v1408 = vrot.slane %v614, %v1407
  %v1409 = vlaneseq
  %v1410 = vshrl.u32 %v1409, 7
  %v1411 = vsub.s32 0, %v1410
  %v1412 = vrot.slane %v615, %v1411
  %v1413 = vlaneseq
  %v1414 = vshrl.u32 %v1413, 7
  %v1415 = vsub.s32 0, %v1414
  %v1416 = vrot.slane %v616, %v1415
  %v1417 = vmul.f32 %v557, %v1404
  %v1418 = vmul.f32 %v558, %v1408
  %v1419 = vmul.f32 %v559, %v1412
  %v1420 = vmul.f32 %v560, %v1416
  %v1421 = vmul.f32 %v561, %v1404
  %v1422 = vmul.f32 %v562, %v1408
  %v1423 = vmul.f32 %v563, %v1412
  %v1424 = vmul.f32 %v564, %v1416
  %v1425 = vsub.f32 %v1417, %v689
  %v1426 = vsub.f32 %v1418, %v690
  %v1427 = vsub.f32 %v1419, %v691
  %v1428 = vsub.f32 %v1420, %v692
  %v1429 = vsub.f32 %v1421, %v693
  %v1430 = vsub.f32 %v1422, %v694
  %v1431 = vsub.f32 %v1423, %v695
  %v1432 = vsub.f32 %v1424, %v696
  %v1433 = vmul.f32 %v1425, 1.442695
  %v1434 = vpow.pop %v1433
  %v1435 = vmul.f32 %v1426, 1.442695
  %v1436 = vpow.pop %v1435
  %v1437 = vmul.f32 %v1427, 1.442695
  %v1438 = vpow.pop %v1437
  %v1439 = vmul.f32 %v1428, 1.442695
  %v1440 = vpow.pop %v1439
  %v1441 = vmul.f32 %v1429, 1.442695
  %v1442 = vpow.pop %v1441
  %v1443 = vmul.f32 %v1430, 1.442695
  %v1444 = vpow.pop %v1443
  %v1445 = vmul.f32 %v1431, 1.442695
  %v1446 = vpow.pop %v1445
  %v1447 = vmul.f32 %v1432, 1.442695
  %v1448 = vpow.pop %v1447
  %v1449 = vlaneseq
  %v1450 = vshrl.u32 %v1449, 7
  %v1451 = vsub.s32 0, %v1450
  %v1452 = vrot.slane %v446, %v1451
  %v1453 = vlaneseq
  %v1454 = vshrl.u32 %v1453, 7
  %v1455 = vsub.s32 0, %v1454
  %v1456 = vrot.slane %v448, %v1455
  %v1457 = vlaneseq
  %v1458 = vshrl.u32 %v1457, 7
  %v1459 = vsub.s32 0, %v1458
  %v1460 = vrot.slane %v509, %v1459
  %v1461 = vlaneseq
  %v1462 = vshrl.u32 %v1461, 7
  %v1463 = vsub.s32 0, %v1462
  %v1464 = vrot.slane %v511, %v1463
  %v1465 = vmul.f32 %v1434, %v1452
  %v1466 = vmul.f32 %v1436, %v1456
  %v1467 = vmul.f32 %v1438, %v1460
  %v1468 = vmul.f32 %v1440, %v1464
  %v1469 = vmul.f32 %v1442, %v1452
  %v1470 = vmul.f32 %v1444, %v1456
  %v1471 = vmul.f32 %v1446, %v1460
  %v1472 = vmul.f32 %v1448, %v1464
  %v1473 = vadd.f32 %v1385, %v1465
  %v1474 = vadd.f32 %v1386, %v1466
  %v1475 = vadd.f32 %v1387, %v1467
  %v1476 = vadd.f32 %v1388, %v1468
  %v1477 = vadd.f32 %v1389, %v1469
  %v1478 = vadd.f32 %v1390, %v1470
  %v1479 = vadd.f32 %v1391, %v1471
  %v1480 = vadd.f32 %v1392, %v1472
  %v1481 = vadd.f32 %v1393, %v1434
  %v1482 = vadd.f32 %v1394, %v1436
  %v1483 = vadd.f32 %v1395, %v1438
  %v1484 = vadd.f32 %v1396, %v1440
  %v1485 = vadd.f32 %v1397, %v1442
  %v1486 = vadd.f32 %v1398, %v1444
  %v1487 = vadd.f32 %v1399, %v1446
  %v1488 = vadd.f32 %v1400, %v1448
  %v1489 = vlaneseq
  %v1490 = vshrl.u32 %v1489, 7
  %v1491 = vsub.s32 1, %v1490
  %v1492 = vrot.slane %v613, %v1491
  %v1493 = vlaneseq
  %v1494 = vshrl.u32 %v1493, 7
  %v1495 = vsub.s32 1, %v1494
  %v1496 = vrot.slane %v614, %v1495
  %v1497 = vlaneseq
  %v1498 = vshrl.u32 %v1497, 7
  %v1499 = vsub.s32 1, %v1498
  %v1500 = vrot.slane %v615, %v1499
  %v1501 = vlaneseq
  %v1502 = vshrl.u32 %v1501, 7
  %v1503 = vsub.s32 1, %v1502
  %v1504 = vrot.slane %v616, %v1503
  %v1505 = vmul.f32 %v557, %v1492
  %v1506 = vmul.f32 %v558, %v1496
  %v1507 = vmul.f32 %v559, %v1500
  %v1508 = vmul.f32 %v560, %v1504
  %v1509 = vmul.f32 %v561, %v1492
  %v1510 = vmul.f32 %v562, %v1496
  %v1511 = vmul.f32 %v563, %v1500
  %v1512 = vmul.f32 %v564, %v1504
  %v1513 = vsub.f32 %v1505, %v689
  %v1514 = vsub.f32 %v1506, %v690
  %v1515 = vsub.f32 %v1507, %v691
  %v1516 = vsub.f32 %v1508, %v692
  %v1517 = vsub.f32 %v1509, %v693
  %v1518 = vsub.f32 %v1510, %v694
  %v1519 = vsub.f32 %v1511, %v695
  %v1520 = vsub.f32 %v1512, %v696
  %v1521 = vmul.f32 %v1513, 1.442695
  %v1522 = vpow.pop %v1521
  %v1523 = vmul.f32 %v1514, 1.442695
  %v1524 = vpow.pop %v1523
  %v1525 = vmul.f32 %v1515, 1.442695
  %v1526 = vpow.pop %v1525
  %v1527 = vmul.f32 %v1516, 1.442695
  %v1528 = vpow.pop %v1527
  %v1529 = vmul.f32 %v1517, 1.442695
  %v1530 = vpow.pop %v1529
  %v1531 = vmul.f32 %v1518, 1.442695
  %v1532 = vpow.pop %v1531
  %v1533 = vmul.f32 %v1519, 1.442695
  %v1534 = vpow.pop %v1533
  %v1535 = vmul.f32 %v1520, 1.442695
  %v1536 = vpow.pop %v1535
  %v1537 = vlaneseq
  %v1538 = vshrl.u32 %v1537, 7
  %v1539 = vsub.s32 1, %v1538
  %v1540 = vrot.slane %v446, %v1539
  %v1541 = vlaneseq
  %v1542 = vshrl.u32 %v1541, 7
  %v1543 = vsub.s32 1, %v1542
  %v1544 = vrot.slane %v448, %v1543
  %v1545 = vlaneseq
  %v1546 = vshrl.u32 %v1545, 7
  %v1547 = vsub.s32 1, %v1546
  %v1548 = vrot.slane %v509, %v1547
  %v1549 = vlaneseq
  %v1550 = vshrl.u32 %v1549, 7
  %v1551 = vsub.s32 1, %v1550
  %v1552 = vrot.slane %v511, %v1551
  %v1553 = vmul.f32 %v1522, %v1540
  %v1554 = vmul.f32 %v1524, %v1544
  %v1555 = vmul.f32 %v1526, %v1548
  %v1556 = vmul.f32 %v1528, %v1552
  %v1557 = vmul.f32 %v1530, %v1540
  %v1558 = vmul.f32 %v1532, %v1544
  %v1559 = vmul.f32 %v1534, %v1548
  %v1560 = vmul.f32 %v1536, %v1552
  %v1561 = vadd.f32 %v1473, %v1553
  %v1562 = vadd.f32 %v1474, %v1554
  %v1563 = vadd.f32 %v1475, %v1555
  %v1564 = vadd.f32 %v1476, %v1556
  %v1565 = vadd.f32 %v1477, %v1557
  %v1566 = vadd.f32 %v1478, %v1558
  %v1567 = vadd.f32 %v1479, %v1559
  %v1568 = vadd.f32 %v1480, %v1560
  %v1569 = vadd.f32 %v1481, %v1522
  %v1570 = vadd.f32 %v1482, %v1524
  %v1571 = vadd.f32 %v1483, %v1526
  %v1572 = vadd.f32 %v1484, %v1528
  %v1573 = vadd.f32 %v1485, %v1530
  %v1574 = vadd.f32 %v1486, %v1532
  %v1575 = vadd.f32 %v1487, %v1534
  %v1576 = vadd.f32 %v1488, %v1536
  %v1577 = vlaneseq
  %v1578 = vshrl.u32 %v1577, 7
  %v1579 = vsub.s32 2, %v1578
  %v1580 = vrot.slane %v613, %v1579
  %v1581 = vlaneseq
  %v1582 = vshrl.u32 %v1581, 7
  %v1583 = vsub.s32 2, %v1582
  %v1584 = vrot.slane %v614, %v1583
  %v1585 = vlaneseq
  %v1586 = vshrl.u32 %v1585, 7
  %v1587 = vsub.s32 2, %v1586
  %v1588 = vrot.slane %v615, %v1587
  %v1589 = vlaneseq
  %v1590 = vshrl.u32 %v1589, 7
  %v1591 = vsub.s32 2, %v1590
  %v1592 = vrot.slane %v616, %v1591
  %v1593 = vmul.f32 %v557, %v1580
  %v1594 = vmul.f32 %v558, %v1584
  %v1595 = vmul.f32 %v559, %v1588
  %v1596 = vmul.f32 %v560, %v1592
  %v1597 = vmul.f32 %v561, %v1580
  %v1598 = vmul.f32 %v562, %v1584
  %v1599 = vmul.f32 %v563, %v1588
  %v1600 = vmul.f32 %v564, %v1592
  %v1601 = vsub.f32 %v1593, %v689
  %v1602 = vsub.f32 %v1594, %v690
  %v1603 = vsub.f32 %v1595, %v691
  %v1604 = vsub.f32 %v1596, %v692
  %v1605 = vsub.f32 %v1597, %v693
  %v1606 = vsub.f32 %v1598, %v694
  %v1607 = vsub.f32 %v1599, %v695
  %v1608 = vsub.f32 %v1600, %v696
  %v1609 = vmul.f32 %v1601, 1.442695
  %v1610 = vpow.pop %v1609
  %v1611 = vmul.f32 %v1602, 1.442695
  %v1612 = vpow.pop %v1611
  %v1613 = vmul.f32 %v1603, 1.442695
  %v1614 = vpow.pop %v1613
  %v1615 = vmul.f32 %v1604, 1.442695
  %v1616 = vpow.pop %v1615
  %v1617 = vmul.f32 %v1605, 1.442695
  %v1618 = vpow.pop %v1617
  %v1619 = vmul.f32 %v1606, 1.442695
  %v1620 = vpow.pop %v1619
  %v1621 = vmul.f32 %v1607, 1.442695
  %v1622 = vpow.pop %v1621
  %v1623 = vmul.f32 %v1608, 1.442695
  %v1624 = vpow.pop %v1623
  %v1625 = vlaneseq
  %v1626 = vshrl.u32 %v1625, 7
  %v1627 = vsub.s32 2, %v1626
  %v1628 = vrot.slane %v446, %v1627
  %v1629 = vlaneseq
  %v1630 = vshrl.u32 %v1629, 7
  %v1631 = vsub.s32 2, %v1630
  %v1632 = vrot.slane %v448, %v1631
  %v1633 = vlaneseq
  %v1634 = vshrl.u32 %v1633, 7
  %v1635 = vsub.s32 2, %v1634
  %v1636 = vrot.slane %v509, %v1635
  %v1637 = vlaneseq
  %v1638 = vshrl.u32 %v1637, 7
  %v1639 = vsub.s32 2, %v1638
  %v1640 = vrot.slane %v511, %v1639
  %v1641 = vmul.f32 %v1610, %v1628
  %v1642 = vmul.f32 %v1612, %v1632
  %v1643 = vmul.f32 %v1614, %v1636
  %v1644 = vmul.f32 %v1616, %v1640
  %v1645 = vmul.f32 %v1618, %v1628
  %v1646 = vmul.f32 %v1620, %v1632
  %v1647 = vmul.f32 %v1622, %v1636
  %v1648 = vmul.f32 %v1624, %v1640
  %v1649 = vadd.f32 %v1561, %v1641
  %v1650 = vadd.f32 %v1562, %v1642
  %v1651 = vadd.f32 %v1563, %v1643
  %v1652 = vadd.f32 %v1564, %v1644
  %v1653 = vadd.f32 %v1565, %v1645
  %v1654 = vadd.f32 %v1566, %v1646
  %v1655 = vadd.f32 %v1567, %v1647
  %v1656 = vadd.f32 %v1568, %v1648
  %v1657 = vadd.f32 %v1569, %v1610
  %v1658 = vadd.f32 %v1570, %v1612
  %v1659 = vadd.f32 %v1571, %v1614
  %v1660 = vadd.f32 %v1572, %v1616
  %v1661 = vadd.f32 %v1573, %v1618
  %v1662 = vadd.f32 %v1574, %v1620
  %v1663 = vadd.f32 %v1575, %v1622
  %v1664 = vadd.f32 %v1576, %v1624
  %v1665 = vlaneseq
  %v1666 = vshrl.u32 %v1665, 7
  %v1667 = vsub.s32 3, %v1666
  %v1668 = vrot.slane %v613, %v1667
  %v1669 = vlaneseq
  %v1670 = vshrl.u32 %v1669, 7
  %v1671 = vsub.s32 3, %v1670
  %v1672 = vrot.slane %v614, %v1671
  %v1673 = vlaneseq
  %v1674 = vshrl.u32 %v1673, 7
  %v1675 = vsub.s32 3, %v1674
  %v1676 = vrot.slane %v615, %v1675
  %v1677 = vlaneseq
  %v1678 = vshrl.u32 %v1677, 7
  %v1679 = vsub.s32 3, %v1678
  %v1680 = vrot.slane %v616, %v1679
  %v1681 = vmul.f32 %v557, %v1668
  %v1682 = vmul.f32 %v558, %v1672
  %v1683 = vmul.f32 %v559, %v1676
  %v1684 = vmul.f32 %v560, %v1680
  %v1685 = vmul.f32 %v561, %v1668
  %v1686 = vmul.f32 %v562, %v1672
  %v1687 = vmul.f32 %v563, %v1676
  %v1688 = vmul.f32 %v564, %v1680
  %v1689 = vsub.f32 %v1681, %v689
  %v1690 = vsub.f32 %v1682, %v690
  %v1691 = vsub.f32 %v1683, %v691
  %v1692 = vsub.f32 %v1684, %v692
  %v1693 = vsub.f32 %v1685, %v693
  %v1694 = vsub.f32 %v1686, %v694
  %v1695 = vsub.f32 %v1687, %v695
  %v1696 = vsub.f32 %v1688, %v696
  %v1697 = vmul.f32 %v1689, 1.442695
  %v1698 = vpow.pop %v1697
  %v1699 = vmul.f32 %v1690, 1.442695
  %v1700 = vpow.pop %v1699
  %v1701 = vmul.f32 %v1691, 1.442695
  %v1702 = vpow.pop %v1701
  %v1703 = vmul.f32 %v1692, 1.442695
  %v1704 = vpow.pop %v1703
  %v1705 = vmul.f32 %v1693, 1.442695
  %v1706 = vpow.pop %v1705
  %v1707 = vmul.f32 %v1694, 1.442695
  %v1708 = vpow.pop %v1707
  %v1709 = vmul.f32 %v1695, 1.442695
  %v1710 = vpow.pop %v1709
  %v1711 = vmul.f32 %v1696, 1.442695
  %v1712 = vpow.pop %v1711
  %v1713 = vlaneseq
  %v1714 = vshrl.u32 %v1713, 7
  %v1715 = vsub.s32 3, %v1714
  %v1716 = vrot.slane %v446, %v1715
  %v1717 = vlaneseq
  %v1718 = vshrl.u32 %v1717, 7
  %v1719 = vsub.s32 3, %v1718
  %v1720 = vrot.slane %v448, %v1719
  %v1721 = vlaneseq
  %v1722 = vshrl.u32 %v1721, 7
  %v1723 = vsub.s32 3, %v1722
  %v1724 = vrot.slane %v509, %v1723
  %v1725 = vlaneseq
  %v1726 = vshrl.u32 %v1725, 7
  %v1727 = vsub.s32 3, %v1726
  %v1728 = vrot.slane %v511, %v1727
  %v1729 = vmul.f32 %v1698, %v1716
  %v1730 = vmul.f32 %v1700, %v1720
  %v1731 = vmul.f32 %v1702, %v1724
  %v1732 = vmul.f32 %v1704, %v1728
  %v1733 = vmul.f32 %v1706, %v1716
  %v1734 = vmul.f32 %v1708, %v1720
  %v1735 = vmul.f32 %v1710, %v1724
  %v1736 = vmul.f32 %v1712, %v1728
  %v1737 = vadd.f32 %v1649, %v1729
  %v1738 = vadd.f32 %v1650, %v1730
  %v1739 = vadd.f32 %v1651, %v1731
  %v1740 = vadd.f32 %v1652, %v1732
  %v1741 = vadd.f32 %v1653, %v1733
  %v1742 = vadd.f32 %v1654, %v1734
  %v1743 = vadd.f32 %v1655, %v1735
  %v1744 = vadd.f32 %v1656, %v1736
  %v1745 = vadd.f32 %v1657, %v1698
  %v1746 = vadd.f32 %v1658, %v1700
  %v1747 = vadd.f32 %v1659, %v1702
  %v1748 = vadd.f32 %v1660, %v1704
  %v1749 = vadd.f32 %v1661, %v1706
  %v1750 = vadd.f32 %v1662, %v1708
  %v1751 = vadd.f32 %v1663, %v1710
  %v1752 = vadd.f32 %v1664, %v1712
  %v1753 = vlaneseq
  %v1754 = vshrl.u32 %v1753, 7
  %v1755 = vsub.s32 4, %v1754
  %v1756 = vrot.slane %v613, %v1755
  %v1757 = vlaneseq
  %v1758 = vshrl.u32 %v1757, 7
  %v1759 = vsub.s32 4, %v1758
  %v1760 = vrot.slane %v614, %v1759
  %v1761 = vlaneseq
  %v1762 = vshrl.u32 %v1761, 7
  %v1763 = vsub.s32 4, %v1762
  %v1764 = vrot.slane %v615, %v1763
  %v1765 = vlaneseq
  %v1766 = vshrl.u32 %v1765, 7
  %v1767 = vsub.s32 4, %v1766
  %v1768 = vrot.slane %v616, %v1767
  %v1769 = vmul.f32 %v557, %v1756
  %v1770 = vmul.f32 %v558, %v1760
  %v1771 = vmul.f32 %v559, %v1764
  %v1772 = vmul.f32 %v560, %v1768
  %v1773 = vmul.f32 %v561, %v1756
  %v1774 = vmul.f32 %v562, %v1760
  %v1775 = vmul.f32 %v563, %v1764
  %v1776 = vmul.f32 %v564, %v1768
  %v1777 = vsub.f32 %v1769, %v689
  %v1778 = vsub.f32 %v1770, %v690
  %v1779 = vsub.f32 %v1771, %v691
  %v1780 = vsub.f32 %v1772, %v692
  %v1781 = vsub.f32 %v1773, %v693
  %v1782 = vsub.f32 %v1774, %v694
  %v1783 = vsub.f32 %v1775, %v695
  %v1784 = vsub.f32 %v1776, %v696
  %v1785 = vmul.f32 %v1777, 1.442695
  %v1786 = vpow.pop %v1785
  %v1787 = vmul.f32 %v1778, 1.442695
  %v1788 = vpow.pop %v1787
  %v1789 = vmul.f32 %v1779, 1.442695
  %v1790 = vpow.pop %v1789
  %v1791 = vmul.f32 %v1780, 1.442695
  %v1792 = vpow.pop %v1791
  %v1793 = vmul.f32 %v1781, 1.442695
  %v1794 = vpow.pop %v1793
  %v1795 = vmul.f32 %v1782, 1.442695
  %v1796 = vpow.pop %v1795
  %v1797 = vmul.f32 %v1783, 1.442695
  %v1798 = vpow.pop %v1797
  %v1799 = vmul.f32 %v1784, 1.442695
  %v1800 = vpow.pop %v1799
  %v1801 = vlaneseq
  %v1802 = vshrl.u32 %v1801, 7
  %v1803 = vsub.s32 4, %v1802
  %v1804 = vrot.slane %v446, %v1803
  %v1805 = vlaneseq
  %v1806 = vshrl.u32 %v1805, 7
  %v1807 = vsub.s32 4, %v1806
  %v1808 = vrot.slane %v448, %v1807
  %v1809 = vlaneseq
  %v1810 = vshrl.u32 %v1809, 7
  %v1811 = vsub.s32 4, %v1810
  %v1812 = vrot.slane %v509, %v1811
  %v1813 = vlaneseq
  %v1814 = vshrl.u32 %v1813, 7
  %v1815 = vsub.s32 4, %v1814
  %v1816 = vrot.slane %v511, %v1815
  %v1817 = vmul.f32 %v1786, %v1804
  %v1818 = vmul.f32 %v1788, %v1808
  %v1819 = vmul.f32 %v1790, %v1812
  %v1820 = vmul.f32 %v1792, %v1816
  %v1821 = vmul.f32 %v1794, %v1804
  %v1822 = vmul.f32 %v1796, %v1808
  %v1823 = vmul.f32 %v1798, %v1812
  %v1824 = vmul.f32 %v1800, %v1816
  %v1825 = vadd.f32 %v1737, %v1817
  %v1826 = vadd.f32 %v1738, %v1818
  %v1827 = vadd.f32 %v1739, %v1819
  %v1828 = vadd.f32 %v1740, %v1820
  %v1829 = vadd.f32 %v1741, %v1821
  %v1830 = vadd.f32 %v1742, %v1822
  %v1831 = vadd.f32 %v1743, %v1823
  %v1832 = vadd.f32 %v1744, %v1824
  %v1833 = vadd.f32 %v1745, %v1786
  %v1834 = vadd.f32 %v1746, %v1788
  %v1835 = vadd.f32 %v1747, %v1790
  %v1836 = vadd.f32 %v1748, %v1792
  %v1837 = vadd.f32 %v1749, %v1794
  %v1838 = vadd.f32 %v1750, %v1796
  %v1839 = vadd.f32 %v1751, %v1798
  %v1840 = vadd.f32 %v1752, %v1800
  %v1841 = vlaneseq
  %v1842 = vshrl.u32 %v1841, 7
  %v1843 = vsub.s32 5, %v1842
  %v1844 = vrot.slane %v613, %v1843
  %v1845 = vlaneseq
  %v1846 = vshrl.u32 %v1845, 7
  %v1847 = vsub.s32 5, %v1846
  %v1848 = vrot.slane %v614, %v1847
  %v1849 = vlaneseq
  %v1850 = vshrl.u32 %v1849, 7
  %v1851 = vsub.s32 5, %v1850
  %v1852 = vrot.slane %v615, %v1851
  %v1853 = vlaneseq
  %v1854 = vshrl.u32 %v1853, 7
  %v1855 = vsub.s32 5, %v1854
  %v1856 = vrot.slane %v616, %v1855
  %v1857 = vmul.f32 %v557, %v1844
  %v1858 = vmul.f32 %v558, %v1848
  %v1859 = vmul.f32 %v559, %v1852
  %v1860 = vmul.f32 %v560, %v1856
  %v1861 = vmul.f32 %v561, %v1844
  %v1862 = vmul.f32 %v562, %v1848
  %v1863 = vmul.f32 %v563, %v1852
  %v1864 = vmul.f32 %v564, %v1856
  %v1865 = vsub.f32 %v1857, %v689
  %v1866 = vsub.f32 %v1858, %v690
  %v1867 = vsub.f32 %v1859, %v691
  %v1868 = vsub.f32 %v1860, %v692
  %v1869 = vsub.f32 %v1861, %v693
  %v1870 = vsub.f32 %v1862, %v694
  %v1871 = vsub.f32 %v1863, %v695
  %v1872 = vsub.f32 %v1864, %v696
  %v1873 = vmul.f32 %v1865, 1.442695
  %v1874 = vpow.pop %v1873
  %v1875 = vmul.f32 %v1866, 1.442695
  %v1876 = vpow.pop %v1875
  %v1877 = vmul.f32 %v1867, 1.442695
  %v1878 = vpow.pop %v1877
  %v1879 = vmul.f32 %v1868, 1.442695
  %v1880 = vpow.pop %v1879
  %v1881 = vmul.f32 %v1869, 1.442695
  %v1882 = vpow.pop %v1881
  %v1883 = vmul.f32 %v1870, 1.442695
  %v1884 = vpow.pop %v1883
  %v1885 = vmul.f32 %v1871, 1.442695
  %v1886 = vpow.pop %v1885
  %v1887 = vmul.f32 %v1872, 1.442695
  %v1888 = vpow.pop %v1887
  %v1889 = vlaneseq
  %v1890 = vshrl.u32 %v1889, 7
  %v1891 = vsub.s32 5, %v1890
  %v1892 = vrot.slane %v446, %v1891
  %v1893 = vlaneseq
  %v1894 = vshrl.u32 %v1893, 7
  %v1895 = vsub.s32 5, %v1894
  %v1896 = vrot.slane %v448, %v1895
  %v1897 = vlaneseq
  %v1898 = vshrl.u32 %v1897, 7
  %v1899 = vsub.s32 5, %v1898
  %v1900 = vrot.slane %v509, %v1899
  %v1901 = vlaneseq
  %v1902 = vshrl.u32 %v1901, 7
  %v1903 = vsub.s32 5, %v1902
  %v1904 = vrot.slane %v511, %v1903
  %v1905 = vmul.f32 %v1874, %v1892
  %v1906 = vmul.f32 %v1876, %v1896
  %v1907 = vmul.f32 %v1878, %v1900
  %v1908 = vmul.f32 %v1880, %v1904
  %v1909 = vmul.f32 %v1882, %v1892
  %v1910 = vmul.f32 %v1884, %v1896
  %v1911 = vmul.f32 %v1886, %v1900
  %v1912 = vmul.f32 %v1888, %v1904
  %v1913 = vadd.f32 %v1825, %v1905
  %v1914 = vadd.f32 %v1826, %v1906
  %v1915 = vadd.f32 %v1827, %v1907
  %v1916 = vadd.f32 %v1828, %v1908
  %v1917 = vadd.f32 %v1829, %v1909
  %v1918 = vadd.f32 %v1830, %v1910
  %v1919 = vadd.f32 %v1831, %v1911
  %v1920 = vadd.f32 %v1832, %v1912
  %v1921 = vadd.f32 %v1833, %v1874
  %v1922 = vadd.f32 %v1834, %v1876
  %v1923 = vadd.f32 %v1835, %v1878
  %v1924 = vadd.f32 %v1836, %v1880
  %v1925 = vadd.f32 %v1837, %v1882
  %v1926 = vadd.f32 %v1838, %v1884
  %v1927 = vadd.f32 %v1839, %v1886
  %v1928 = vadd.f32 %v1840, %v1888
  %v1929 = vlaneseq
  %v1930 = vshrl.u32 %v1929, 7
  %v1931 = vsub.s32 6, %v1930
  %v1932 = vrot.slane %v613, %v1931
  %v1933 = vlaneseq
  %v1934 = vshrl.u32 %v1933, 7
  %v1935 = vsub.s32 6, %v1934
  %v1936 = vrot.slane %v614, %v1935
  %v1937 = vlaneseq
  %v1938 = vshrl.u32 %v1937, 7
  %v1939 = vsub.s32 6, %v1938
  %v1940 = vrot.slane %v615, %v1939
  %v1941 = vlaneseq
  %v1942 = vshrl.u32 %v1941, 7
  %v1943 = vsub.s32 6, %v1942
  %v1944 = vrot.slane %v616, %v1943
  %v1945 = vmul.f32 %v557, %v1932
  %v1946 = vmul.f32 %v558, %v1936
  %v1947 = vmul.f32 %v559, %v1940
  %v1948 = vmul.f32 %v560, %v1944
  %v1949 = vmul.f32 %v561, %v1932
  %v1950 = vmul.f32 %v562, %v1936
  %v1951 = vmul.f32 %v563, %v1940
  %v1952 = vmul.f32 %v564, %v1944
  %v1953 = vsub.f32 %v1945, %v689
  %v1954 = vsub.f32 %v1946, %v690
  %v1955 = vsub.f32 %v1947, %v691
  %v1956 = vsub.f32 %v1948, %v692
  %v1957 = vsub.f32 %v1949, %v693
  %v1958 = vsub.f32 %v1950, %v694
  %v1959 = vsub.f32 %v1951, %v695
  %v1960 = vsub.f32 %v1952, %v696
  %v1961 = vmul.f32 %v1953, 1.442695
  %v1962 = vpow.pop %v1961
  %v1963 = vmul.f32 %v1954, 1.442695
  %v1964 = vpow.pop %v1963
  %v1965 = vmul.f32 %v1955, 1.442695
  %v1966 = vpow.pop %v1965
  %v1967 = vmul.f32 %v1956, 1.442695
  %v1968 = vpow.pop %v1967
  %v1969 = vmul.f32 %v1957, 1.442695
  %v1970 = vpow.pop %v1969
  %v1971 = vmul.f32 %v1958, 1.442695
  %v1972 = vpow.pop %v1971
  %v1973 = vmul.f32 %v1959, 1.442695
  %v1974 = vpow.pop %v1973
  %v1975 = vmul.f32 %v1960, 1.442695
  %v1976 = vpow.pop %v1975
  %v1977 = vlaneseq
  %v1978 = vshrl.u32 %v1977, 7
  %v1979 = vsub.s32 6, %v1978
  %v1980 = vrot.slane %v446, %v1979
  %v1981 = vlaneseq
  %v1982 = vshrl.u32 %v1981, 7
  %v1983 = vsub.s32 6, %v1982
  %v1984 = vrot.slane %v448, %v1983
  %v1985 = vlaneseq
  %v1986 = vshrl.u32 %v1985, 7
  %v1987 = vsub.s32 6, %v1986
  %v1988 = vrot.slane %v509, %v1987
  %v1989 = vlaneseq
  %v1990 = vshrl.u32 %v1989, 7
  %v1991 = vsub.s32 6, %v1990
  %v1992 = vrot.slane %v511, %v1991
  %v1993 = vmul.f32 %v1962, %v1980
  %v1994 = vmul.f32 %v1964, %v1984
  %v1995 = vmul.f32 %v1966, %v1988
  %v1996 = vmul.f32 %v1968, %v1992
  %v1997 = vmul.f32 %v1970, %v1980
  %v1998 = vmul.f32 %v1972, %v1984
  %v1999 = vmul.f32 %v1974, %v1988
  %v2000 = vmul.f32 %v1976, %v1992
  %v2001 = vadd.f32 %v1913, %v1993
  %v2002 = vadd.f32 %v1914, %v1994
  %v2003 = vadd.f32 %v1915, %v1995
  %v2004 = vadd.f32 %v1916, %v1996
  %v2005 = vadd.f32 %v1917, %v1997
  %v2006 = vadd.f32 %v1918, %v1998
  %v2007 = vadd.f32 %v1919, %v1999
  %v2008 = vadd.f32 %v1920, %v2000
  %v2009 = vadd.f32 %v1921, %v1962
  %v2010 = vadd.f32 %v1922, %v1964
  %v2011 = vadd.f32 %v1923, %v1966
  %v2012 = vadd.f32 %v1924, %v1968
  %v2013 = vadd.f32 %v1925, %v1970
  %v2014 = vadd.f32 %v1926, %v1972
  %v2015 = vadd.f32 %v1927, %v1974
  %v2016 = vadd.f32 %v1928, %v1976
  %v2017 = vlaneseq
  %v2018 = vshrl.u32 %v2017, 7
  %v2019 = vsub.s32 7, %v2018
  %v2020 = vrot.slane %v613, %v2019
  %v2021 = vlaneseq
  %v2022 = vshrl.u32 %v2021, 7
  %v2023 = vsub.s32 7, %v2022
  %v2024 = vrot.slane %v614, %v2023
  %v2025 = vlaneseq
  %v2026 = vshrl.u32 %v2025, 7
  %v2027 = vsub.s32 7, %v2026
  %v2028 = vrot.slane %v615, %v2027
  %v2029 = vlaneseq
  %v2030 = vshrl.u32 %v2029, 7
  %v2031 = vsub.s32 7, %v2030
  %v2032 = vrot.slane %v616, %v2031
  %v2033 = vmul.f32 %v557, %v2020
  %v2034 = vmul.f32 %v558, %v2024
  %v2035 = vmul.f32 %v559, %v2028
  %v2036 = vmul.f32 %v560, %v2032
  %v2037 = vmul.f32 %v561, %v2020
  %v2038 = vmul.f32 %v562, %v2024
  %v2039 = vmul.f32 %v563, %v2028
  %v2040 = vmul.f32 %v564, %v2032
  %v2041 = vsub.f32 %v2033, %v689
  %v2042 = vsub.f32 %v2034, %v690
  %v2043 = vsub.f32 %v2035, %v691
  %v2044 = vsub.f32 %v2036, %v692
  %v2045 = vsub.f32 %v2037, %v693
  %v2046 = vsub.f32 %v2038, %v694
  %v2047 = vsub.f32 %v2039, %v695
  %v2048 = vsub.f32 %v2040, %v696
  %v2049 = vmul.f32 %v2041, 1.442695
  %v2050 = vpow.pop %v2049
  %v2051 = vmul.f32 %v2042, 1.442695
  %v2052 = vpow.pop %v2051
  %v2053 = vmul.f32 %v2043, 1.442695
  %v2054 = vpow.pop %v2053
  %v2055 = vmul.f32 %v2044, 1.442695
  %v2056 = vpow.pop %v2055
  %v2057 = vmul.f32 %v2045, 1.442695
  %v2058 = vpow.pop %v2057
  %v2059 = vmul.f32 %v2046, 1.442695
  %v2060 = vpow.pop %v2059
  %v2061 = vmul.f32 %v2047, 1.442695
  %v2062 = vpow.pop %v2061
  %v2063 = vmul.f32 %v2048, 1.442695
  %v2064 = vpow.pop %v2063
  %v2065 = vlaneseq
  %v2066 = vshrl.u32 %v2065, 7
  %v2067 = vsub.s32 7, %v2066
  %v2068 = vrot.slane %v446, %v2067
  %v2069 = vlaneseq
  %v2070 = vshrl.u32 %v2069, 7
  %v2071 = vsub.s32 7, %v2070
  %v2072 = vrot.slane %v448, %v2071
  %v2073 = vlaneseq
  %v2074 = vshrl.u32 %v2073, 7
  %v2075 = vsub.s32 7, %v2074
  %v2076 = vrot.slane %v509, %v2075
  %v2077 = vlaneseq
  %v2078 = vshrl.u32 %v2077, 7
  %v2079 = vsub.s32 7, %v2078
  %v2080 = vrot.slane %v511, %v2079
  %v2081 = vmul.f32 %v2050, %v2068
  %v2082 = vmul.f32 %v2052, %v2072
  %v2083 = vmul.f32 %v2054, %v2076
  %v2084 = vmul.f32 %v2056, %v2080
  %v2085 = vmul.f32 %v2058, %v2068
  %v2086 = vmul.f32 %v2060, %v2072
  %v2087 = vmul.f32 %v2062, %v2076
  %v2088 = vmul.f32 %v2064, %v2080
  %v2089 = vadd.f32 %v2001, %v2081
  %v2090 = vadd.f32 %v2002, %v2082
  %v2091 = vadd.f32 %v2003, %v2083
  %v2092 = vadd.f32 %v2004, %v2084
  %v2093 = vadd.f32 %v2005, %v2085
  %v2094 = vadd.f32 %v2006, %v2086
  %v2095 = vadd.f32 %v2007, %v2087
  %v2096 = vadd.f32 %v2008, %v2088
  %v2097 = vadd.f32 %v2009, %v2050
  %v2098 = vadd.f32 %v2010, %v2052
  %v2099 = vadd.f32 %v2011, %v2054
  %v2100 = vadd.f32 %v2012, %v2056
  %v2101 = vadd.f32 %v2013, %v2058
  %v2102 = vadd.f32 %v2014, %v2060
  %v2103 = vadd.f32 %v2015, %v2062
  %v2104 = vadd.f32 %v2016, %v2064
  %v2105 = vrcp.pop %v2097
  %v2106 = vrcp.pop %v2098
  %v2107 = vrcp.pop %v2099
  %v2108 = vrcp.pop %v2100
  %v2109 = vrcp.pop %v2101
  %v2110 = vrcp.pop %v2102
  %v2111 = vrcp.pop %v2103
  %v2112 = vrcp.pop %v2104
  %v2113 = vmul.f32 %v2089, %v2105
  %v2114 = vmul.f32 %v2090, %v2106
  %v2115 = vmul.f32 %v2091, %v2107
  %v2116 = vmul.f32 %v2092, %v2108
  %v2117 = vmul.f32 %v2093, %v2109
  %v2118 = vmul.f32 %v2094, %v2110
  %v2119 = vmul.f32 %v2095, %v2111
  %v2120 = vmul.f32 %v2096, %v2112
  %v2121 = vld [vmem:[%s4] sm:$0xf]
  %v2122 = vld [vmem:[%s4 + $0x4] sm:$0xf]
  %v2123 = vpack.c.bf16 %v2117, %v2113
  %v2124 = vpack.c.bf16 %v2118, %v2114
  %v2125 = vpack.c.bf16 %v2119, %v2115
  %v2126 = vpack.c.bf16 %v2120, %v2116
  %v2127 = vld [vmem:[%s5] sm:$0xff]
  %v2128 = vld [vmem:[%s5 + $0x8] sm:$0xff]
  %2130 = vset.pattern.permute.xlu0 0
  %2131 = vperm.xlu0 %2130, %v2127
  %v2132 = vpop.permute.xlu0 %2131
  %2135 = vset.pattern.permute.xlu0 0
  %2136 = vperm.xlu0 %2135, %v2128
  %v2137 = vpop.permute.xlu0 %2136
  %v2141 = vunpack.c.l.b16 %v2121
  %v2142 = vunpack.c.l.b16 %v2122
  %v2143 = vpack.c.b16 %v2142, %v2141
  %v2145 = vsel %vm263, %v2143, 0
  %2147 = vmatprep.subr.bf16.mxu0 0
  %2148 = vmatpush1.bf16.msra.mxu0 0
  %2149 = vmatprep.subr.bf16.mxu0 0
  %2150 = vmatpush1.bf16.msra.mxu0 0
  %2151 = vmatprep.subr.bf16.mxu0 0
  %2152 = vmatpush1.bf16.msra.mxu0 0
  %2153 = vmatprep.subr.bf16.mxu0 0
  %2154 = vmatpush1.bf16.msra.mxu0 0
  %2155 = vmatprep.subr.bf16.mxu0 0
  %2156 = vmatpush1.bf16.msra.mxu0 0
  %2157 = vmatprep.subr.bf16.mxu0 0
  %2158 = vmatpush1.bf16.msra.mxu0 0
  %2159 = vmatprep.subr.bf16.mxu0 0
  %2160 = vmatpush1.bf16.msra.mxu0 0
  %2161 = vmatprep.subr.bf16.mxu0 %v2124
  %2162 = vmatpush1.bf16.msra.mxu0 %v2123
  %2163 = vmatprep.subr.bf16.mxu0 0
  %2164 = vmatpush2.bf16.msra.mxu0 0
  %2165 = vmatprep.subr.bf16.mxu0 0
  %2166 = vmatpush2.bf16.msra.mxu0 0
  %2167 = vmatprep.subr.bf16.mxu0 0
  %2168 = vmatpush2.bf16.msra.mxu0 0
  %2169 = vmatprep.subr.bf16.mxu0 0
  %2170 = vmatpush2.bf16.msra.mxu0 0
  %2171 = vmatprep.subr.bf16.mxu0 0
  %2172 = vmatpush2.bf16.msra.mxu0 0
  %2173 = vmatprep.subr.bf16.mxu0 0
  %2174 = vmatpush2.bf16.msra.mxu0 0
  %2175 = vmatprep.subr.bf16.mxu0 0
  %2176 = vmatpush2.bf16.msra.mxu0 0
  %2177 = vmatprep.subr.bf16.mxu0 0
  %2178 = vmatpush2.bf16.msra.mxu0 0
  %2179 = vmatprep.mubr.bf16.mxu0 0
  %2180 = vmatmul.mubr.bf16.gmra.mxu0 %v2145
  %v2181 = vpop.f32.mrf.mxu0
  %v2182 = vadd.f32 %v2132, %v2181
  %v2183 = vpop.f32.mrf.mxu0
  %v2184 = vadd.f32 %v2132, %v2183
  %v2185 = vpop.f32.mrf.mxu0
  %v2186 = vadd.f32 %v2137, %v2185
  %v2187 = vpop.f32.mrf.mxu0
  %v2188 = vadd.f32 %v2137, %v2187
  %2189 = vdwg.mxu0
  %2190 = vmatprep.subr.bf16.mxu0 0
  %2191 = vmatpush1.bf16.msra.mxu0 0
  %2192 = vmatprep.subr.bf16.mxu0 0
  %2193 = vmatpush1.bf16.msra.mxu0 0
  %2194 = vmatprep.subr.bf16.mxu0 0
  %2195 = vmatpush1.bf16.msra.mxu0 0
  %2196 = vmatprep.subr.bf16.mxu0 0
  %2197 = vmatpush1.bf16.msra.mxu0 0
  %2198 = vmatprep.subr.bf16.mxu0 0
  %2199 = vmatpush1.bf16.msra.mxu0 0
  %2200 = vmatprep.subr.bf16.mxu0 0
  %2201 = vmatpush1.bf16.msra.mxu0 0
  %2202 = vmatprep.subr.bf16.mxu0 0
  %2203 = vmatpush1.bf16.msra.mxu0 0
  %2204 = vmatprep.subr.bf16.mxu0 %v2126
  %2205 = vmatpush1.bf16.msra.mxu0 %v2125
  %2206 = vmatprep.subr.bf16.mxu0 0
  %2207 = vmatpush2.bf16.msra.mxu0 0
  %2208 = vmatprep.subr.bf16.mxu0 0
  %2209 = vmatpush2.bf16.msra.mxu0 0
  %2210 = vmatprep.subr.bf16.mxu0 0
  %2211 = vmatpush2.bf16.msra.mxu0 0
  %2212 = vmatprep.subr.bf16.mxu0 0
  %2213 = vmatpush2.bf16.msra.mxu0 0
  %2214 = vmatprep.subr.bf16.mxu0 0
  %2215 = vmatpush2.bf16.msra.mxu0 0
  %2216 = vmatprep.subr.bf16.mxu0 0
  %2217 = vmatpush2.bf16.msra.mxu0 0
  %2218 = vmatprep.subr.bf16.mxu0 0
  %2219 = vmatpush2.bf16.msra.mxu0 0
  %2220 = vmatprep.subr.bf16.mxu0 0
  %2221 = vmatpush2.bf16.msra.mxu0 0
  %2222 = vmatprep.mubr.bf16.mxu0 0
  %2223 = vmatmul.mubr.bf16.gmra.mxu0 %v2145
  %v2224 = vpop.f32.mrf.mxu0
  %v2225 = vadd.f32 %v2132, %v2224
  %v2226 = vpop.f32.mrf.mxu0
  %v2227 = vadd.f32 %v2132, %v2226
  %v2228 = vpop.f32.mrf.mxu0
  %v2229 = vadd.f32 %v2137, %v2228
  %v2230 = vpop.f32.mrf.mxu0
  %v2231 = vadd.f32 %v2137, %v2230
  %2232 = vdwg.mxu0
  %v2233 = vadd.f32 %v2182, %v302
  %v2234 = vadd.f32 %v2184, %v304
  %v2235 = vadd.f32 %v2225, %v345
  %v2236 = vadd.f32 %v2227, %v347
  %v2237 = vadd.f32 %v2186, %v306
  %v2238 = vadd.f32 %v2188, %v308
  %v2239 = vadd.f32 %v2229, %v349
  %v2240 = vadd.f32 %v2231, %v351
  %2241 = vst [vmem:[%s6] sm:$0xff] %v2233
  %2242 = vst [vmem:[%s6 + $0x8] sm:$0xff] %v2234
  %2243 = vst [vmem:[%s6 + $0x10] sm:$0xff] %v2235
  %2244 = vst [vmem:[%s6 + $0x18] sm:$0xff] %v2236
  %2245 = vst [vmem:[%s6 + $0x20] sm:$0xff] %v2237
  %2246 = vst [vmem:[%s6 + $0x28] sm:$0xff] %v2238
  %2247 = vst [vmem:[%s6 + $0x30] sm:$0xff] %v2239
  %2248 = vst [vmem:[%s6 + $0x38] sm:$0xff] %v2240
  // Predicated region
  $region26: #{ssamc_forward.13} parent=0 // pred_check
    _
  $region27: #{ssamc_forward.13} parent=0 // pred_check_branch
    %2250 = sbr.rel (0) target = $region29
  $region28: #{ssamc_forward.13} parent=0 // pred_region
    _
  $region29: #{ssamc_forward.13} parent=0 // pred_fallthru
    _
  // Predicated region
  $region30: #{ssamc_forward.13} parent=0 // pred_check
    _
  $region31: #{ssamc_forward.13} parent=0 // pred_check_branch
    %2252 = sbr.rel (0) target = $region33
  $region32: #{ssamc_forward.13} parent=0 // pred_region
    _
  $region33: #{ssamc_forward.13} parent=0 // pred_fallthru
    _

// kernel: ssamc_forward.15
$region0: #{ssamc_forward.15}
  #allocation0 [shape = 'u32[]', space=smem, size = 0x4, offset = 0x4, fixed_abs, tag = 'smem constant byte address 0x4 - core index']
  #allocation1 [shape = 'u32[144,128]{1,0:T(1,128)}', space=vmem, size = 0x12000, scoped, tag = 'internal scratch']
  %s0 = inlined_call_operand.vmem [shape: bf16[4,36], index: 0, kind: input, shape index: {}]
  %s1 = inlined_call_operand.vmem [shape: bf16[36,128], index: 1, kind: input, shape index: {}]
  %s2 = inlined_call_operand.vmem [shape: f32[4,1], index: 2, kind: input, shape index: {}]
  %s3 = inlined_call_operand.vmem [shape: f32[4,128], index: 3, kind: output, shape index: {}]
  %s4 = sld [smem:[#allocation0]]
  $region22: #{ssamc_forward.15} parent=0
    _
  %s6 = ssub.s32 1, %s4
  %s7 = scalar_select 0, %s6, %s4
  // Predicated region
  $region2: #{ssamc_forward.15} parent=0 // pred_check
    _
  $region3: #{ssamc_forward.15} parent=0 // pred_check_branch
    %9 = sbr.rel (0) target = $region5
  $region4: #{ssamc_forward.15} parent=0 // pred_region
    _
  $region5: #{ssamc_forward.15} parent=0 // pred_fallthru
    _
  // Predicated region
  $region6: #{ssamc_forward.15} parent=0 // pred_check
    _
  $region7: #{ssamc_forward.15} parent=0 // pred_check_branch
    %11 = sbr.rel (0) target = $region9
  $region8: #{ssamc_forward.15} parent=0 // pred_region
    _
  $region9: #{ssamc_forward.15} parent=0 // pred_fallthru
    _
  // Predicated region
  $region10: #{ssamc_forward.15} parent=0 // pred_check
    _
  $region11: #{ssamc_forward.15} parent=0 // pred_check_branch
    %13 = sbr.rel (0) target = $region13
  $region12: #{ssamc_forward.15} parent=0 // pred_region
    _
  $region13: #{ssamc_forward.15} parent=0 // pred_fallthru
    _
  %v15 = vld [vmem:[%s1] sm:$0xf]
  %v16 = vld [vmem:[%s1 + $0x4] sm:$0xf]
  %v17 = vld [vmem:[%s1 + $0x8] sm:$0xf]
  %v18 = vld [vmem:[%s1 + $0xc] sm:$0xf]
  %v19 = vld [vmem:[%s1 + $0x10] sm:$0x3]
  %v20 = vld [vmem:[%s0] sm:$0x3]
  %v21 = vld [vmem:[%s2] sm:$0xf]
  %23 = vset.pattern.permute.xlu0 0
  %24 = vperm.xlu0 %23, %v21
  %v25 = vpop.permute.xlu0 %24
  %v32 = vunpack.c.l.b16 %v15
  %v33 = vunpack.c.l.b16 %v16
  %v34 = vunpack.c.l.b16 %v17
  %v35 = vunpack.c.l.b16 %v18
  %v36 = vunpack.c.l.b16 %v19
  %v37 = vpack.c.b16 %v33, %v32
  %v38 = vpack.c.b16 %v35, %v34
  %v39 = vpack.c.b16 %v36, %v36
  %vm42 = vcmask 293888
  %v44 = vsel %vm42, %v20, 0
  %vm46 = vcmask 1041408
  %v48 = vsel %vm46, %v39, 0
  %50 = vmatprep.subr.bf16.mxu0 0
  %51 = vmatpush1.bf16.msra.mxu0 0
  %52 = vmatprep.subr.bf16.mxu0 0
  %53 = vmatpush1.bf16.msra.mxu0 0
  %54 = vmatprep.subr.bf16.mxu0 0
  %55 = vmatpush1.bf16.msra.mxu0 0
  %56 = vmatprep.subr.bf16.mxu0 0
  %57 = vmatpush1.bf16.msra.mxu0 0
  %58 = vmatprep.subr.bf16.mxu0 0
  %59 = vmatpush1.bf16.msra.mxu0 0
  %60 = vmatprep.subr.bf16.mxu0 0
  %61 = vmatpush1.bf16.msra.mxu0 %v48
  %62 = vmatprep.subr.bf16.mxu0 0
  %63 = vmatpush1.bf16.msra.mxu0 %v38
  %64 = vmatprep.subr.bf16.mxu0 0
  %65 = vmatpush1.bf16.msra.mxu0 %v37
  %66 = vmatprep.subr.bf16.mxu0 0
  %67 = vmatpush2.bf16.msra.mxu0 0
  %68 = vmatprep.subr.bf16.mxu0 0
  %69 = vmatpush2.bf16.msra.mxu0 0
  %70 = vmatprep.subr.bf16.mxu0 0
  %71 = vmatpush2.bf16.msra.mxu0 0
  %72 = vmatprep.subr.bf16.mxu0 0
  %73 = vmatpush2.bf16.msra.mxu0 0
  %74 = vmatprep.subr.bf16.mxu0 0
  %75 = vmatpush2.bf16.msra.mxu0 0
  %76 = vmatprep.subr.bf16.mxu0 0
  %77 = vmatpush2.bf16.msra.mxu0 0
  %78 = vmatprep.subr.bf16.mxu0 0
  %79 = vmatpush2.bf16.msra.mxu0 0
  %80 = vmatprep.subr.bf16.mxu0 0
  %81 = vmatpush2.bf16.msra.mxu0 0
  %82 = vmatprep.mubr.bf16.mxu0 0
  %83 = vmatmul.mubr.bf16.gmra.mxu0 %v44
  %v84 = vpop.f32.mrf.mxu0
  %v85 = vadd.f32 %v25, %v84
  %v86 = vpop.f32.mrf.mxu0
  %v87 = vpop.f32.mrf.mxu0
  %v88 = vpop.f32.mrf.mxu0
  %89 = vdwg.mxu0
  %90 = vst [vmem:[%s3] sm:$0xf] %v85
  // Predicated region
  $region14: #{ssamc_forward.15} parent=0 // pred_check
    _
  $region15: #{ssamc_forward.15} parent=0 // pred_check_branch
    %92 = sbr.rel (0) target = $region17
  $region16: #{ssamc_forward.15} parent=0 // pred_region
    _
  $region17: #{ssamc_forward.15} parent=0 // pred_fallthru
    _
  // Predicated region
  $region18: #{ssamc_forward.15} parent=0 // pred_check
    _
  $region19: #{ssamc_forward.15} parent=0 // pred_check_branch
    %94 = sbr.rel (0) target = $region21
  $region20: #{ssamc_forward.15} parent=0 // pred_region
    _
  $region21: #{ssamc_forward.15} parent=0 // pred_fallthru
    _

// kernel: ssamc_forward.16
$region0: #{ssamc_forward.16}
  #allocation0 [shape = 'u32[]', space=smem, size = 0x4, offset = 0x4, fixed_abs, tag = 'smem constant byte address 0x4 - core index']
  #allocation1 [shape = 'u32[144,128]{1,0:T(1,128)}', space=vmem, size = 0x12000, scoped, tag = 'internal scratch']
  %s0 = inlined_call_operand.vmem [shape: f32[49,128], index: 0, kind: input, shape index: {}]
  %s1 = inlined_call_operand.vmem [shape: f32[1,128], index: 1, kind: output, shape index: {}]
  %s2 = sld [smem:[#allocation0]]
  $region14: #{ssamc_forward.16} parent=0
    _
  %s4 = ssub.s32 1, %s2
  %s5 = scalar_select 0, %s4, %s2
  // Predicated region
  $region2: #{ssamc_forward.16} parent=0 // pred_check
    _
  $region3: #{ssamc_forward.16} parent=0 // pred_check_branch
    %7 = sbr.rel (0) target = $region5
  $region4: #{ssamc_forward.16} parent=0 // pred_region
    _
  $region5: #{ssamc_forward.16} parent=0 // pred_fallthru
    _
  %v8 = vld [vmem:[%s0] sm:$0xff]
  %v9 = vld [vmem:[%s0 + $0x8] sm:$0xff]
  %v10 = vld [vmem:[%s0 + $0x10] sm:$0xff]
  %v11 = vld [vmem:[%s0 + $0x18] sm:$0xff]
  %v12 = vld [vmem:[%s0 + $0x20] sm:$0xff]
  %v13 = vld [vmem:[%s0 + $0x28] sm:$0xff]
  %v14 = vld [vmem:[%s0 + $0x30] sm:$0x1]
  %v15 = vmax.f32 %v8, %v12
  %v16 = vmax.f32 %v9, %v13
  %vm17 = vcmask 1040384
  %v18 = vsel %vm17, %v14, -inf
  %v19 = vmax.f32 %v10, %v18
  %v20 = vmax.f32 %v15, %v16
  %v21 = vmax.f32 %v19, %v11
  %v22 = vmax.f32 %v20, %v21
  %v23 = vrot.slane %v22, 4
  %v24 = vmax.f32 %v22, %v23
  %v25 = vrot.slane %v24, 2
  %v26 = vmax.f32 %v24, %v25
  %v27 = vrot.slane %v26, 1
  %v28 = vmax.f32 %v26, %v27
  %29 = vst [vmem:[%s1] sm:$0x1] %v28
  // Predicated region
  $region6: #{ssamc_forward.16} parent=0 // pred_check
    _
  $region7: #{ssamc_forward.16} parent=0 // pred_check_branch
    %31 = sbr.rel (0) target = $region9
  $region8: #{ssamc_forward.16} parent=0 // pred_region
    _
  $region9: #{ssamc_forward.16} parent=0 // pred_fallthru
    _
  // Predicated region
  $region10: #{ssamc_forward.16} parent=0 // pred_check
    _
  $region11: #{ssamc_forward.16} parent=0 // pred_check_branch
    %33 = sbr.rel (0) target = $region13
  $region12: #{ssamc_forward.16} parent=0 // pred_region
    _
  $region13: #{ssamc_forward.16} parent=0 // pred_fallthru
    _

// kernel: ssamc_forward.17
$region0: #{ssamc_forward.17}
  #allocation0 [shape = 'u32[]', space=smem, size = 0x4, offset = 0x4, fixed_abs, tag = 'smem constant byte address 0x4 - core index']
  #allocation1 [shape = 'u32[144,128]{1,0:T(1,128)}', space=vmem, size = 0x12000, scoped, tag = 'internal scratch']
  %s0 = inlined_call_operand.vmem [shape: bf16[4,36], index: 0, kind: input, shape index: {}]
  %s1 = inlined_call_operand.vmem [shape: bf16[36,128], index: 1, kind: input, shape index: {}]
  %s2 = inlined_call_operand.vmem [shape: f32[4,1], index: 2, kind: input, shape index: {}]
  %s3 = inlined_call_operand.vmem [shape: f32[4,128], index: 3, kind: output, shape index: {}]
  %s4 = sld [smem:[#allocation0]]
  $region22: #{ssamc_forward.17} parent=0
    _
  %s6 = ssub.s32 1, %s4
  %s7 = scalar_select 0, %s6, %s4
  // Predicated region
  $region2: #{ssamc_forward.17} parent=0 // pred_check
    _
  $region3: #{ssamc_forward.17} parent=0 // pred_check_branch
    %9 = sbr.rel (0) target = $region5
  $region4: #{ssamc_forward.17} parent=0 // pred_region
    _
  $region5: #{ssamc_forward.17} parent=0 // pred_fallthru
    _
  // Predicated region
  $region6: #{ssamc_forward.17} parent=0 // pred_check
    _
  $region7: #{ssamc_forward.17} parent=0 // pred_check_branch
    %11 = sbr.rel (0) target = $region9
  $region8: #{ssamc_forward.17} parent=0 // pred_region
    _
  $region9: #{ssamc_forward.17} parent=0 // pred_fallthru
    _
  // Predicated region
  $region10: #{ssamc_forward.17} parent=0 // pred_check
    _
  $region11: #{ssamc_forward.17} parent=0 // pred_check_branch
    %13 = sbr.rel (0) target = $region13
  $region12: #{ssamc_forward.17} parent=0 // pred_region
    _
  $region13: #{ssamc_forward.17} parent=0 // pred_fallthru
    _
  %v15 = vld [vmem:[%s1] sm:$0xf]
  %v16 = vld [vmem:[%s1 + $0x4] sm:$0xf]
  %v17 = vld [vmem:[%s1 + $0x8] sm:$0xf]
  %v18 = vld [vmem:[%s1 + $0xc] sm:$0xf]
  %v19 = vld [vmem:[%s1 + $0x10] sm:$0x3]
  %v20 = vld [vmem:[%s0] sm:$0x3]
  %v21 = vld [vmem:[%s2] sm:$0xf]
  %23 = vset.pattern.permute.xlu0 0
  %24 = vperm.xlu0 %23, %v21
  %v25 = vpop.permute.xlu0 %24
  %v32 = vunpack.c.l.b16 %v15
  %v33 = vunpack.c.l.b16 %v16
  %v34 = vunpack.c.l.b16 %v17
  %v35 = vunpack.c.l.b16 %v18
  %v36 = vunpack.c.l.b16 %v19
  %v37 = vpack.c.b16 %v33, %v32
  %v38 = vpack.c.b16 %v35, %v34
  %v39 = vpack.c.b16 %v36, %v36
  %vm42 = vcmask 293888
  %v44 = vsel %vm42, %v20, 0
  %vm46 = vcmask 1041408
  %v48 = vsel %vm46, %v39, 0
  %50 = vmatprep.subr.bf16.mxu0 0
  %51 = vmatpush1.bf16.msra.mxu0 0
  %52 = vmatprep.subr.bf16.mxu0 0
  %53 = vmatpush1.bf16.msra.mxu0 0
  %54 = vmatprep.subr.bf16.mxu0 0
  %55 = vmatpush1.bf16.msra.mxu0 0
  %56 = vmatprep.subr.bf16.mxu0 0
  %57 = vmatpush1.bf16.msra.mxu0 0
  %58 = vmatprep.subr.bf16.mxu0 0
  %59 = vmatpush1.bf16.msra.mxu0 0
  %60 = vmatprep.subr.bf16.mxu0 0
  %61 = vmatpush1.bf16.msra.mxu0 %v48
  %62 = vmatprep.subr.bf16.mxu0 0
  %63 = vmatpush1.bf16.msra.mxu0 %v38
  %64 = vmatprep.subr.bf16.mxu0 0
  %65 = vmatpush1.bf16.msra.mxu0 %v37
  %66 = vmatprep.subr.bf16.mxu0 0
  %67 = vmatpush2.bf16.msra.mxu0 0
  %68 = vmatprep.subr.bf16.mxu0 0
  %69 = vmatpush2.bf16.msra.mxu0 0
  %70 = vmatprep.subr.bf16.mxu0 0
  %71 = vmatpush2.bf16.msra.mxu0 0
  %72 = vmatprep.subr.bf16.mxu0 0
  %73 = vmatpush2.bf16.msra.mxu0 0
  %74 = vmatprep.subr.bf16.mxu0 0
  %75 = vmatpush2.bf16.msra.mxu0 0
  %76 = vmatprep.subr.bf16.mxu0 0
  %77 = vmatpush2.bf16.msra.mxu0 0
  %78 = vmatprep.subr.bf16.mxu0 0
  %79 = vmatpush2.bf16.msra.mxu0 0
  %80 = vmatprep.subr.bf16.mxu0 0
  %81 = vmatpush2.bf16.msra.mxu0 0
  %82 = vmatprep.mubr.bf16.mxu0 0
  %83 = vmatmul.mubr.bf16.gmra.mxu0 %v44
  %v84 = vpop.f32.mrf.mxu0
  %v85 = vadd.f32 %v25, %v84
  %v86 = vpop.f32.mrf.mxu0
  %v87 = vpop.f32.mrf.mxu0
  %v88 = vpop.f32.mrf.mxu0
  %89 = vdwg.mxu0
  %v90 = vmax.f32 %v85, 0.0
  %91 = vst [vmem:[%s3] sm:$0xf] %v90
  // Predicated region
  $region14: #{ssamc_forward.17} parent=0 // pred_check
    _
  $region15: #{ssamc_forward.17} parent=0 // pred_check_branch
    %93 = sbr.rel (0) target = $region17
  $region16: #{ssamc_forward.17} parent=0 // pred_region
    _
  $region17: #{ssamc_forward.17} parent=0 // pred_fallthru
    _
  // Predicated region
  $region18: #{ssamc_forward.17} parent=0 // pred_check
    _
  $region19: #{ssamc_forward.17} parent=0 // pred_check_branch
    %95 = sbr.rel (0) target = $region21
  $region20: #{ssamc_forward.17} parent=0 // pred_region
    _
  $region21: #{ssamc_forward.17} parent=0 // pred_fallthru
    _

// kernel: ssamc_forward.21
$region0: #{ssamc_forward.21}
  #allocation0 [shape = 'u32[]', space=smem, size = 0x4, offset = 0x4, fixed_abs, tag = 'smem constant byte address 0x4 - core index']
  #allocation1 [shape = 'u32[144,128]{1,0:T(1,128)}', space=vmem, size = 0x12000, scoped, tag = 'internal scratch']
  %s0 = inlined_call_operand.vmem [shape: bf16[16,16], index: 0, kind: input, shape index: {}]
  %s1 = inlined_call_operand.vmem [shape: bf16[16,512], index: 1, kind: input, shape index: {}]
  %s2 = inlined_call_operand.vmem [shape: bf16[16,16], index: 2, kind: input, shape index: {}]
  %s3 = inlined_call_operand.vmem [shape: bf16[16,512], index: 3, kind: input, shape index: {}]
  %s4 = inlined_call_operand.vmem [shape: f32[16,1], index: 4, kind: input, shape index: {}]
  %s5 = inlined_call_operand.vmem [shape: f32[16,512], index: 5, kind: input, shape index: {}]
  %s6 = inlined_call_operand.vmem [shape: f32[16,512], index: 6, kind: output, shape index: {}]
  %s7 = sld [smem:[#allocation0]]
  $region34: #{ssamc_forward.21} parent=0
    _
  %s9 = ssub.s32 1, %s7
  %s10 = scalar_select 0, %s9, %s7
  // Predicated region
  $region2: #{ssamc_forward.21} parent=0 // pred_check
    _
  $region3: #{ssamc_forward.21} parent=0 // pred_check_branch
    %12 = sbr.rel (0) target = $region5
  $region4: #{ssamc_forward.21} parent=0 // pred_region
    _
  $region5: #{ssamc_forward.21} parent=0 // pred_fallthru
    _
  // Predicated region
  $region6: #{ssamc_forward.21} parent=0 // pred_check
    _
  $region7: #{ssamc_forward.21} parent=0 // pred_check_branch
    %14 = sbr.rel (0) target = $region9
  $region8: #{ssamc_forward.21} parent=0 // pred_region
    _
  $region9: #{ssamc_forward.21} parent=0 // pred_fallthru
    _
  // Predicated region
  $region10: #{ssamc_forward.21} parent=0 // pred_check
    _
  $region11: #{ssamc_forward.21} parent=0 // pred_check_branch
    %16 = sbr.rel (0) target = $region13
  $region12: #{ssamc_forward.21} parent=0 // pred_region
    _
  $region13: #{ssamc_forward.21} parent=0 // pred_fallthru
    _
  // Predicated region
  $region14: #{ssamc_forward.21} parent=0 // pred_check
    _
  $region15: #{ssamc_forward.21} parent=0 // pred_check_branch
    %18 = sbr.rel (0) target = $region17
  $region16: #{ssamc_forward.21} parent=0 // pred_region
    _
  $region17: #{ssamc_forward.21} parent=0 // pred_fallthru
    _
  // Predicated region
  $region18: #{ssamc_forward.21} parent=0 // pred_check
    _
  $region19: #{ssamc_forward.21} parent=0 // pred_check_branch
    %20 = sbr.rel (0) target = $region21
  $region20: #{ssamc_forward.21} parent=0 // pred_region
    _
  $region21: #{ssamc_forward.21} parent=0 // pred_fallthru
    _
  // Predicated region
  $region22: #{ssamc_forward.21} parent=0 // pred_check
    _
  $region23: #{ssamc_forward.21} parent=0 // pred_check_branch
    %22 = sbr.rel (0) target = $region25
  $region24: #{ssamc_forward.21} parent=0 // pred_region
    _
  $region25: #{ssamc_forward.21} parent=0 // pred_fallthru
    _
  %v24 = vld [vmem:[%s0] sm:$0xf]
  %v25 = vld [vmem:[%s0 + $0x4] sm:$0xf]
  %v26 = vld [vmem:[%s1] sm:$0xff]
  %v27 = vld [vmem:[%s1 + $0x8] sm:$0xff]
  %v28 = vld [vmem:[%s1 + $0x10] sm:$0xff]
  %v29 = vld [vmem:[%s1 + $0x18] sm:$0xff]
  %v30 = vld [vmem:[%s2] sm:$0xf]
  %v31 = vld [vmem:[%s2 + $0x4] sm:$0xf]
  %v32 = vld [vmem:[%s3] sm:$0xff]
  %v33 = vld [vmem:[%s3 + $0x8] sm:$0xff]
  %v34 = vld [vmem:[%s3 + $0x10] sm:$0xff]
  %v35 = vld [vmem:[%s3 + $0x18] sm:$0xff]
  %v38 = vunpack.c.l.b16 %v30
  %v39 = vunpack.c.l.b16 %v31
  %v40 = vpack.c.b16 %v39, %v38
  %v45 = vunpack.c.l.b16 %v32
  %v46 = vunpack.c.h.b16 %v32
  %v47 = vunpack.c.l.b16 %v33
  %v48 = vunpack.c.h.b16 %v33
  %v49 = vunpack.c.l.b16 %v34
  %v50 = vunpack.c.h.b16 %v34
  %v51 = vunpack.c.l.b16 %v35
  %v52 = vunpack.c.h.b16 %v35
  %v53 = vpack.c.b16 %v49, %v45
  %v54 = vpack.c.b16 %v50, %v46
  %v55 = vpack.c.b16 %v51, %v47
  %v56 = vpack.c.b16 %v52, %v48
  %vm61 = vcmask 130048
  %v63 = vsel %vm61, %v40, 0
  %65 = vmatprep.subr.bf16.mxu0 0
  %66 = vmatpush1.bf16.msra.mxu0 0
  %67 = vmatprep.subr.bf16.mxu0 0
  %68 = vmatpush1.bf16.msra.mxu0 0
  %69 = vmatprep.subr.bf16.mxu0 0
  %70 = vmatpush1.bf16.msra.mxu0 0
  %71 = vmatprep.subr.bf16.mxu0 0
  %72 = vmatpush1.bf16.msra.mxu0 0
  %73 = vmatprep.subr.bf16.mxu0 0
  %74 = vmatpush1.bf16.msra.mxu0 0
  %75 = vmatprep.subr.bf16.mxu0 0
  %76 = vmatpush1.bf16.msra.mxu0 0
  %77 = vmatprep.subr.bf16.mxu0 0
  %78 = vmatpush1.bf16.msra.mxu0 0
  %79 = vmatprep.subr.bf16.mxu0 %v54
  %80 = vmatpush1.bf16.msra.mxu0 %v53
  %81 = vmatprep.subr.bf16.mxu0 0
  %82 = vmatpush2.bf16.msra.mxu0 0
  %83 = vmatprep.subr.bf16.mxu0 0
  %84 = vmatpush2.bf16.msra.mxu0 0
  %85 = vmatprep.subr.bf16.mxu0 0
  %86 = vmatpush2.bf16.msra.mxu0 0
  %87 = vmatprep.subr.bf16.mxu0 0
  %88 = vmatpush2.bf16.msra.mxu0 0
  %89 = vmatprep.subr.bf16.mxu0 0
  %90 = vmatpush2.bf16.msra.mxu0 0
  %91 = vmatprep.subr.bf16.mxu0 0
  %92 = vmatpush2.bf16.msra.mxu0 0
  %93 = vmatprep.subr.bf16.mxu0 0
  %94 = vmatpush2.bf16.msra.mxu0 0
  %95 = vmatprep.subr.bf16.mxu0 0
  %96 = vmatpush2.bf16.msra.mxu0 0
  %97 = vmatprep.mubr.bf16.mxu0 0
  %98 = vmatmul.mubr.bf16.gmra.mxu0 %v63
  %v99 = vpop.f32.mrf.mxu0
  %v100 = vadd.f32 0.0, %v99
  %v101 = vpop.f32.mrf.mxu0
  %v102 = vadd.f32 0.0, %v101
  %v103 = vpop.f32.mrf.mxu0
  %v104 = vadd.f32 0.0, %v103
  %v105 = vpop.f32.mrf.mxu0
  %v106 = vadd.f32 0.0, %v105
  %107 = vdwg.mxu0
  %108 = vmatprep.subr.bf16.mxu0 0
  %109 = vmatpush1.bf16.msra.mxu0 0
  %110 = vmatprep.subr.bf16.mxu0 0
  %111 = vmatpush1.bf16.msra.mxu0 0
  %112 = vmatprep.subr.bf16.mxu0 0
  %113 = vmatpush1.bf16.msra.mxu0 0
  %114 = vmatprep.subr.bf16.mxu0 0
  %115 = vmatpush1.bf16.msra.mxu0 0
  %116 = vmatprep.subr.bf16.mxu0 0
  %117 = vmatpush1.bf16.msra.mxu0 0
  %118 = vmatprep.subr.bf16.mxu0 0
  %119 = vmatpush1.bf16.msra.mxu0 0
  %120 = vmatprep.subr.bf16.mxu0 0
  %121 = vmatpush1.bf16.msra.mxu0 0
  %122 = vmatprep.subr.bf16.mxu0 %v56
  %123 = vmatpush1.bf16.msra.mxu0 %v55
  %124 = vmatprep.subr.bf16.mxu0 0
  %125 = vmatpush2.bf16.msra.mxu0 0
  %126 = vmatprep.subr.bf16.mxu0 0
  %127 = vmatpush2.bf16.msra.mxu0 0
  %128 = vmatprep.subr.bf16.mxu0 0
  %129 = vmatpush2.bf16.msra.mxu0 0
  %130 = vmatprep.subr.bf16.mxu0 0
  %131 = vmatpush2.bf16.msra.mxu0 0
  %132 = vmatprep.subr.bf16.mxu0 0
  %133 = vmatpush2.bf16.msra.mxu0 0
  %134 = vmatprep.subr.bf16.mxu0 0
  %135 = vmatpush2.bf16.msra.mxu0 0
  %136 = vmatprep.subr.bf16.mxu0 0
  %137 = vmatpush2.bf16.msra.mxu0 0
  %138 = vmatprep.subr.bf16.mxu0 0
  %139 = vmatpush2.bf16.msra.mxu0 0
  %140 = vmatprep.mubr.bf16.mxu0 0
  %141 = vmatmul.mubr.bf16.gmra.mxu0 %v63
  %v142 = vpop.f32.mrf.mxu0
  %v143 = vadd.f32 0.0, %v142
  %v144 = vpop.f32.mrf.mxu0
  %v145 = vadd.f32 0.0, %v144
  %v146 = vpop.f32.mrf.mxu0
  %v147 = vadd.f32 0.0, %v146
  %v148 = vpop.f32.mrf.mxu0
  %v149 = vadd.f32 0.0, %v148
  %150 = vdwg.mxu0
  %v153 = vunpack.c.l.b16 %v24
  %v154 = vunpack.c.l.b16 %v25
  %v155 = vpack.c.b16 %v154, %v153
  %v160 = vunpack.c.l.b16 %v26
  %v161 = vunpack.c.h.b16 %v26
  %v162 = vunpack.c.l.b16 %v27
  %v163 = vunpack.c.h.b16 %v27
  %v164 = vunpack.c.l.b16 %v28
  %v165 = vunpack.c.h.b16 %v28
  %v166 = vunpack.c.l.b16 %v29
  %v167 = vunpack.c.h.b16 %v29
  %v168 = vpack.c.b16 %v164, %v160
  %v169 = vpack.c.b16 %v165, %v161
  %v170 = vpack.c.b16 %v166, %v162
  %v171 = vpack.c.b16 %v167, %v163
  %v177 = vsel %vm61, %v155, 0
  %179 = vmatprep.subr.bf16.mxu0 0
  %180 = vmatpush1.bf16.msra.mxu0 0
  %181 = vmatprep.subr.bf16.mxu0 0
  %182 = vmatpush1.bf16.msra.mxu0 0
  %183 = vmatprep.subr.bf16.mxu0 0
  %184 = vmatpush1.bf16.msra.mxu0 0
  %185 = vmatprep.subr.bf16.mxu0 0
  %186 = vmatpush1.bf16.msra.mxu0 0
  %187 = vmatprep.subr.bf16.mxu0 0
  %188 = vmatpush1.bf16.msra.mxu0 0
  %189 = vmatprep.subr.bf16.mxu0 0
  %190 = vmatpush1.bf16.msra.mxu0 0
  %191 = vmatprep.subr.bf16.mxu0 0
  %192 = vmatpush1.bf16.msra.mxu0 0
  %193 = vmatprep.subr.bf16.mxu0 %v169
  %194 = vmatpush1.bf16.msra.mxu0 %v168
  %195 = vmatprep.subr.bf16.mxu0 0
  %196 = vmatpush2.bf16.msra.mxu0 0
  %197 = vmatprep.subr.bf16.mxu0 0
  %198 = vmatpush2.bf16.msra.mxu0 0
  %199 = vmatprep.subr.bf16.mxu0 0
  %200 = vmatpush2.bf16.msra.mxu0 0
  %201 = vmatprep.subr.bf16.mxu0 0
  %202 = vmatpush2.bf16.msra.mxu0 0
  %203 = vmatprep.subr.bf16.mxu0 0
  %204 = vmatpush2.bf16.msra.mxu0 0
  %205 = vmatprep.subr.bf16.mxu0 0
  %206 = vmatpush2.bf16.msra.mxu0 0
  %207 = vmatprep.subr.bf16.mxu0 0
  %208 = vmatpush2.bf16.msra.mxu0 0
  %209 = vmatprep.subr.bf16.mxu0 0
  %210 = vmatpush2.bf16.msra.mxu0 0
  %211 = vmatprep.mubr.bf16.mxu0 0
  %212 = vmatmul.mubr.bf16.gmra.mxu0 %v177
  %v213 = vpop.f32.mrf.mxu0
  %v214 = vadd.f32 %v100, %v213
  %v215 = vpop.f32.mrf.mxu0
  %v216 = vadd.f32 %v102, %v215
  %v217 = vpop.f32.mrf.mxu0
  %v218 = vadd.f32 %v104, %v217
  %v219 = vpop.f32.mrf.mxu0
  %v220 = vadd.f32 %v106, %v219
  %221 = vdwg.mxu0
  %222 = vmatprep.subr.bf16.mxu0 0
  %223 = vmatpush1.bf16.msra.mxu0 0
  %224 = vmatprep.subr.bf16.mxu0 0
  %225 = vmatpush1.bf16.msra.mxu0 0
  %226 = vmatprep.subr.bf16.mxu0 0
  %227 = vmatpush1.bf16.msra.mxu0 0
  %228 = vmatprep.subr.bf16.mxu0 0
  %229 = vmatpush1.bf16.msra.mxu0 0
  %230 = vmatprep.subr.bf16.mxu0 0
  %231 = vmatpush1.bf16.msra.mxu0 0
  %232 = vmatprep.subr.bf16.mxu0 0
  %233 = vmatpush1.bf16.msra.mxu0 0
  %234 = vmatprep.subr.bf16.mxu0 0
  %235 = vmatpush1.bf16.msra.mxu0 0
  %236 = vmatprep.subr.bf16.mxu0 %v171
  %237 = vmatpush1.bf16.msra.mxu0 %v170
  %238 = vmatprep.subr.bf16.mxu0 0
  %239 = vmatpush2.bf16.msra.mxu0 0
  %240 = vmatprep.subr.bf16.mxu0 0
  %241 = vmatpush2.bf16.msra.mxu0 0
  %242 = vmatprep.subr.bf16.mxu0 0
  %243 = vmatpush2.bf16.msra.mxu0 0
  %244 = vmatprep.subr.bf16.mxu0 0
  %245 = vmatpush2.bf16.msra.mxu0 0
  %246 = vmatprep.subr.bf16.mxu0 0
  %247 = vmatpush2.bf16.msra.mxu0 0
  %248 = vmatprep.subr.bf16.mxu0 0
  %249 = vmatpush2.bf16.msra.mxu0 0
  %250 = vmatprep.subr.bf16.mxu0 0
  %251 = vmatpush2.bf16.msra.mxu0 0
  %252 = vmatprep.subr.bf16.mxu0 0
  %253 = vmatpush2.bf16.msra.mxu0 0
  %254 = vmatprep.mubr.bf16.mxu0 0
  %255 = vmatmul.mubr.bf16.gmra.mxu0 %v177
  %v256 = vpop.f32.mrf.mxu0
  %v257 = vadd.f32 %v143, %v256
  %v258 = vpop.f32.mrf.mxu0
  %v259 = vadd.f32 %v145, %v258
  %v260 = vpop.f32.mrf.mxu0
  %v261 = vadd.f32 %v147, %v260
  %v262 = vpop.f32.mrf.mxu0
  %v263 = vadd.f32 %v149, %v262
  %264 = vdwg.mxu0
  %v265 = vld [vmem:[%s4] sm:$0xff]
  %v266 = vld [vmem:[%s4 + $0x8] sm:$0xff]
  %268 = vset.pattern.permute.xlu0 0
  %269 = vperm.xlu0 %268, %v265
  %v270 = vpop.permute.xlu0 %269
  %273 = vset.pattern.permute.xlu0 0
  %274 = vperm.xlu0 %273, %v266
  %v275 = vpop.permute.xlu0 %274
  %v277 = vadd.f32 %v214, %v270
  %v278 = vadd.f32 %v216, %v270
  %v279 = vadd.f32 %v257, %v270
  %v280 = vadd.f32 %v259, %v270
  %v281 = vadd.f32 %v218, %v275
  %v282 = vadd.f32 %v220, %v275
  %v283 = vadd.f32 %v261, %v275
  %v284 = vadd.f32 %v263, %v275
  %v285 = vld [vmem:[%s5] sm:$0xff]
  %v286 = vld [vmem:[%s5 + $0x8] sm:$0xff]
  %v287 = vld [vmem:[%s5 + $0x10] sm:$0xff]
  %v288 = vld [vmem:[%s5 + $0x18] sm:$0xff]
  %v289 = vld [vmem:[%s5 + $0x20] sm:$0xff]
  %v290 = vld [vmem:[%s5 + $0x28] sm:$0xff]
  %v291 = vld [vmem:[%s5 + $0x30] sm:$0xff]
  %v292 = vld [vmem:[%s5 + $0x38] sm:$0xff]
  %v293 = vadd.f32 %v277, %v285
  %v294 = vadd.f32 %v278, %v286
  %v295 = vadd.f32 %v279, %v287
  %v296 = vadd.f32 %v280, %v288
  %v297 = vadd.f32 %v281, %v289
  %v298 = vadd.f32 %v282, %v290
  %v299 = vadd.f32 %v283, %v291
  %v300 = vadd.f32 %v284, %v292
  %301 = vst [vmem:[%s6] sm:$0xff] %v293
  %302 = vst [vmem:[%s6 + $0x8] sm:$0xff] %v294
  %303 = vst [vmem:[%s6 + $0x10] sm:$0xff] %v295
  %304 = vst [vmem:[%s6 + $0x18] sm:$0xff] %v296
  %305 = vst [vmem:[%s6 + $0x20] sm:$0xff] %v297
  %306 = vst [vmem:[%s6 + $0x28] sm:$0xff] %v298
  %307 = vst [vmem:[%s6 + $0x30] sm:$0xff] %v299
  %308 = vst [vmem:[%s6 + $0x38] sm:$0xff] %v300
  // Predicated region
  $region26: #{ssamc_forward.21} parent=0 // pred_check
    _
  $region27: #{ssamc_forward.21} parent=0 // pred_check_branch
    %310 = sbr.rel (0) target = $region29
  $region28: #{ssamc_forward.21} parent=0 // pred_region
    _
  $region29: #{ssamc_forward.21} parent=0 // pred_fallthru
    _
  // Predicated region
  $region30: #{ssamc_forward.21} parent=0 // pred_check
    _
  $region31: #{ssamc_forward.21} parent=0 // pred_check_branch
    %312 = sbr.rel (0) target = $region33
  $region32: #{ssamc_forward.21} parent=0 // pred_region
    _
  $region33: #{ssamc_forward.21} parent=0 // pred_fallthru
    _

// kernel: ssamc_forward.20
$region0: #{ssamc_forward.20}
  #allocation0 [shape = 'u32[]', space=smem, size = 0x4, offset = 0x4, fixed_abs, tag = 'smem constant byte address 0x4 - core index']
  #allocation1 [shape = 'u32[144,128]{1,0:T(1,128)}', space=vmem, size = 0x12000, scoped, tag = 'internal scratch']
  %s0 = inlined_call_operand.vmem [shape: bf16[16,4], index: 0, kind: input, shape index: {}]
  %s1 = inlined_call_operand.vmem [shape: bf16[4,512], index: 1, kind: input, shape index: {}]
  %s2 = inlined_call_operand.vmem [shape: f32[16,1], index: 2, kind: input, shape index: {}]
  %s3 = inlined_call_operand.vmem [shape: bf16[4,512], index: 3, kind: input, shape index: {}]
  %s4 = inlined_call_operand.vmem [shape: f32[16,512], index: 4, kind: input, shape index: {}]
  %s5 = inlined_call_operand.vmem [shape: f32[16,512], index: 5, kind: output, shape index: {}]
  %s6 = sld [smem:[#allocation0]]
  $region30: #{ssamc_forward.20} parent=0
    _
  %s8 = ssub.s32 1, %s6
  %s9 = scalar_select 0, %s8, %s6
  // Predicated region
  $region2: #{ssamc_forward.20} parent=0 // pred_check
    _
  $region3: #{ssamc_forward.20} parent=0 // pred_check_branch
    %11 = sbr.rel (0) target = $region5
  $region4: #{ssamc_forward.20} parent=0 // pred_region
    _
  $region5: #{ssamc_forward.20} parent=0 // pred_fallthru
    _
  // Predicated region
  $region6: #{ssamc_forward.20} parent=0 // pred_check
    _
  $region7: #{ssamc_forward.20} parent=0 // pred_check_branch
    %13 = sbr.rel (0) target = $region9
  $region8: #{ssamc_forward.20} parent=0 // pred_region
    _
  $region9: #{ssamc_forward.20} parent=0 // pred_fallthru
    _
  // Predicated region
  $region10: #{ssamc_forward.20} parent=0 // pred_check
    _
  $region11: #{ssamc_forward.20} parent=0 // pred_check_branch
    %15 = sbr.rel (0) target = $region13
  $region12: #{ssamc_forward.20} parent=0 // pred_region
    _
  $region13: #{ssamc_forward.20} parent=0 // pred_fallthru
    _
  // Predicated region
  $region14: #{ssamc_forward.20} parent=0 // pred_check
    _
  $region15: #{ssamc_forward.20} parent=0 // pred_check_branch
    %17 = sbr.rel (0) target = $region17
  $region16: #{ssamc_forward.20} parent=0 // pred_region
    _
  $region17: #{ssamc_forward.20} parent=0 // pred_fallthru
    _
  // Predicated region
  $region18: #{ssamc_forward.20} parent=0 // pred_check
    _
  $region19: #{ssamc_forward.20} parent=0 // pred_check_branch
    %19 = sbr.rel (0) target = $region21
  $region20: #{ssamc_forward.20} parent=0 // pred_region
    _
  $region21: #{ssamc_forward.20} parent=0 // pred_fallthru
    _
  %v21 = vld [vmem:[%s1] sm:$0xff]
  %v22 = vld [vmem:[%s3] sm:$0xff]
  %v23 = vadd.bf16 %v21, %v22
  %v24 = vld [vmem:[%s0] sm:$0xf]
  %v25 = vld [vmem:[%s0 + $0x4] sm:$0xf]
  %v26 = vld [vmem:[%s2] sm:$0xff]
  %v27 = vld [vmem:[%s2 + $0x8] sm:$0xff]
  %29 = vset.pattern.permute.xlu0 0
  %30 = vperm.xlu0 %29, %v26
  %v31 = vpop.permute.xlu0 %30
  %34 = vset.pattern.permute.xlu0 0
  %35 = vperm.xlu0 %34, %v27
  %v36 = vpop.permute.xlu0 %35
  %v40 = vunpack.c.l.b16 %v24
  %v41 = vunpack.c.l.b16 %v25
  %v42 = vpack.c.b16 %v41, %v40
  %v44 = vcombine.high %v23, %v23
  %v46 = vunpack.c.l.s4 1983009808
  %v47 = vunpack.c.0.s8 %v46
  %v48 = vlaneseq
  %v49 = vshrl.u32 %v48, 7
  %v50 = vsub.s32 %v47, %v49
  %v51 = vrot.slane %v23, %v50
  %v53 = vunpack.c.l.s4 1983009808
  %v54 = vunpack.c.0.s8 %v53
  %v55 = vlaneseq
  %v56 = vshrl.u32 %v55, 7
  %v57 = vsub.s32 %v54, %v56
  %v58 = vrot.slane %v44, %v57
  %v59 = vcombine.high %v51, %v51
  %v60 = vcombine.high %v58, %v58
  %vm61 = vcmask 31744
  %v63 = vsel %vm61, %v42, 0
  %vm65 = vcmask 1041408
  %v67 = vsel %vm65, %v51, 0
  %v70 = vsel %vm65, %v59, 0
  %v73 = vsel %vm65, %v58, 0
  %v76 = vsel %vm65, %v60, 0
  %78 = vmatprep.subr.bf16.mxu0 0
  %79 = vmatpush1.bf16.msra.mxu0 0
  %80 = vmatprep.subr.bf16.mxu0 0
  %81 = vmatpush1.bf16.msra.mxu0 0
  %82 = vmatprep.subr.bf16.mxu0 0
  %83 = vmatpush1.bf16.msra.mxu0 0
  %84 = vmatprep.subr.bf16.mxu0 0
  %85 = vmatpush1.bf16.msra.mxu0 0
  %86 = vmatprep.subr.bf16.mxu0 0
  %87 = vmatpush1.bf16.msra.mxu0 0
  %88 = vmatprep.subr.bf16.mxu0 0
  %89 = vmatpush1.bf16.msra.mxu0 0
  %90 = vmatprep.subr.bf16.mxu0 0
  %91 = vmatpush1.bf16.msra.mxu0 0
  %92 = vmatprep.subr.bf16.mxu0 %v70
  %93 = vmatpush1.bf16.msra.mxu0 %v67
  %94 = vmatprep.subr.bf16.mxu0 0
  %95 = vmatpush2.bf16.msra.mxu0 0
  %96 = vmatprep.subr.bf16.mxu0 0
  %97 = vmatpush2.bf16.msra.mxu0 0
  %98 = vmatprep.subr.bf16.mxu0 0
  %99 = vmatpush2.bf16.msra.mxu0 0
  %100 = vmatprep.subr.bf16.mxu0 0
  %101 = vmatpush2.bf16.msra.mxu0 0
  %102 = vmatprep.subr.bf16.mxu0 0
  %103 = vmatpush2.bf16.msra.mxu0 0
  %104 = vmatprep.subr.bf16.mxu0 0
  %105 = vmatpush2.bf16.msra.mxu0 0
  %106 = vmatprep.subr.bf16.mxu0 0
  %107 = vmatpush2.bf16.msra.mxu0 0
  %108 = vmatprep.subr.bf16.mxu0 0
  %109 = vmatpush2.bf16.msra.mxu0 0
  %110 = vmatprep.mubr.bf16.mxu0 0
  %111 = vmatmul.mubr.bf16.gmra.mxu0 %v63
  %v112 = vpop.f32.mrf.mxu0
  %v113 = vadd.f32 %v31, %v112
  %v114 = vpop.f32.mrf.mxu0
  %v115 = vadd.f32 %v31, %v114
  %v116 = vpop.f32.mrf.mxu0
  %v117 = vadd.f32 %v36, %v116
  %v118 = vpop.f32.mrf.mxu0
  %v119 = vadd.f32 %v36, %v118
  %120 = vdwg.mxu0
  %121 = vmatprep.subr.bf16.mxu0 0
  %122 = vmatpush1.bf16.msra.mxu0 0
  %123 = vmatprep.subr.bf16.mxu0 0
  %124 = vmatpush1.bf16.msra.mxu0 0
  %125 = vmatprep.subr.bf16.mxu0 0
  %126 = vmatpush1.bf16.msra.mxu0 0
  %127 = vmatprep.subr.bf16.mxu0 0
  %128 = vmatpush1.bf16.msra.mxu0 0
  %129 = vmatprep.subr.bf16.mxu0 0
  %130 = vmatpush1.bf16.msra.mxu0 0
  %131 = vmatprep.subr.bf16.mxu0 0
  %132 = vmatpush1.bf16.msra.mxu0 0
  %133 = vmatprep.subr.bf16.mxu0 0
  %134 = vmatpush1.bf16.msra.mxu0 0
  %135 = vmatprep.subr.bf16.mxu0 %v76
  %136 = vmatpush1.bf16.msra.mxu0 %v73
  %137 = vmatprep.subr.bf16.mxu0 0
  %138 = vmatpush2.bf16.msra.mxu0 0
  %139 = vmatprep.subr.bf16.mxu0 0
  %140 = vmatpush2.bf16.msra.mxu0 0
  %141 = vmatprep.subr.bf16.mxu0 0
  %142 = vmatpush2.bf16.msra.mxu0 0
  %143 = vmatprep.subr.bf16.mxu0 0
  %144 = vmatpush2.bf16.msra.mxu0 0
  %145 = vmatprep.subr.bf16.mxu0 0
  %146 = vmatpush2.bf16.msra.mxu0 0
  %147 = vmatprep.subr.bf16.mxu0 0
  %148 = vmatpush2.bf16.msra.mxu0 0
  %149 = vmatprep.subr.bf16.mxu0 0
  %150 = vmatpush2.bf16.msra.mxu0 0
  %151 = vmatprep.subr.bf16.mxu0 0
  %152 = vmatpush2.bf16.msra.mxu0 0
  %153 = vmatprep.mubr.bf16.mxu0 0
  %154 = vmatmul.mubr.bf16.gmra.mxu0 %v63
  %v155 = vpop.f32.mrf.mxu0
  %v156 = vadd.f32 %v31, %v155
  %v157 = vpop.f32.mrf.mxu0
  %v158 = vadd.f32 %v31, %v157
  %v159 = vpop.f32.mrf.mxu0
  %v160 = vadd.f32 %v36, %v159
  %v161 = vpop.f32.mrf.mxu0
  %v162 = vadd.f32 %v36, %v161
  %163 = vdwg.mxu0
  %v164 = vxor.u32 %v113, 2147483648
  %v165 = vxor.u32 %v115, 2147483648
  %v166 = vxor.u32 %v156, 2147483648
  %v167 = vxor.u32 %v158, 2147483648
  %v168 = vxor.u32 %v117, 2147483648
  %v169 = vxor.u32 %v119, 2147483648
  %v170 = vxor.u32 %v160, 2147483648
  %v171 = vxor.u32 %v162, 2147483648
  %v172 = vmul.f32 %v164, 1.442695
  %v173 = vpow.pop %v172
  %v174 = vmul.f32 %v165, 1.442695
  %v175 = vpow.pop %v174
  %v176 = vmul.f32 %v166, 1.442695
  %v177 = vpow.pop %v176
  %v178 = vmul.f32 %v167, 1.442695
  %v179 = vpow.pop %v178
  %v180 = vmul.f32 %v168, 1.442695
  %v181 = vpow.pop %v180
  %v182 = vmul.f32 %v169, 1.442695
  %v183 = vpow.pop %v182
  %v184 = vmul.f32 %v170, 1.442695
  %v185 = vpow.pop %v184
  %v186 = vmul.f32 %v171, 1.442695
  %v187 = vpow.pop %v186
  %v188 = vadd.f32 %v173, 1.0
  %v189 = vadd.f32 %v175, 1.0
  %v190 = vadd.f32 %v177, 1.0
  %v191 = vadd.f32 %v179, 1.0
  %v192 = vadd.f32 %v181, 1.0
  %v193 = vadd.f32 %v183, 1.0
  %v194 = vadd.f32 %v185, 1.0
  %v195 = vadd.f32 %v187, 1.0
  %v196 = vrcp.pop %v188
  %v197 = vmul.f32 1.0, %v196
  %v198 = vrcp.pop %v189
  %v199 = vmul.f32 1.0, %v198
  %v200 = vrcp.pop %v190
  %v201 = vmul.f32 1.0, %v200
  %v202 = vrcp.pop %v191
  %v203 = vmul.f32 1.0, %v202
  %v204 = vrcp.pop %v192
  %v205 = vmul.f32 1.0, %v204
  %v206 = vrcp.pop %v193
  %v207 = vmul.f32 1.0, %v206
  %v208 = vrcp.pop %v194
  %v209 = vmul.f32 1.0, %v208
  %v210 = vrcp.pop %v195
  %v211 = vmul.f32 1.0, %v210
  %v212 = vld [vmem:[%s4] sm:$0xff]
  %v213 = vld [vmem:[%s4 + $0x8] sm:$0xff]
  %v214 = vld [vmem:[%s4 + $0x10] sm:$0xff]
  %v215 = vld [vmem:[%s4 + $0x18] sm:$0xff]
  %v216 = vld [vmem:[%s4 + $0x20] sm:$0xff]
  %v217 = vld [vmem:[%s4 + $0x28] sm:$0xff]
  %v218 = vld [vmem:[%s4 + $0x30] sm:$0xff]
  %v219 = vld [vmem:[%s4 + $0x38] sm:$0xff]
  %v220 = vmul.f32 %v197, %v212
  %v221 = vmul.f32 %v199, %v213
  %v222 = vmul.f32 %v201, %v214
  %v223 = vmul.f32 %v203, %v215
  %v224 = vmul.f32 %v205, %v216
  %v225 = vmul.f32 %v207, %v217
  %v226 = vmul.f32 %v209, %v218
  %v227 = vmul.f32 %v211, %v219
  %228 = vst [vmem:[%s5] sm:$0xff] %v220
  %229 = vst [vmem:[%s5 + $0x8] sm:$0xff] %v221
  %230 = vst [vmem:[%s5 + $0x10] sm:$0xff] %v222
  %231 = vst [vmem:[%s5 + $0x18] sm:$0xff] %v223
  %232 = vst [vmem:[%s5 + $0x20] sm:$0xff] %v224
  %233 = vst [vmem:[%s5 + $0x28] sm:$0xff] %v225
  %234 = vst [vmem:[%s5 + $0x30] sm:$0xff] %v226
  %235 = vst [vmem:[%s5 + $0x38] sm:$0xff] %v227
  // Predicated region
  $region22: #{ssamc_forward.20} parent=0 // pred_check
    _
  $region23: #{ssamc_forward.20} parent=0 // pred_check_branch
    %237 = sbr.rel (0) target = $region25
  $region24: #{ssamc_forward.20} parent=0 // pred_region
    _
  $region25: #{ssamc_forward.20} parent=0 // pred_fallthru
    _
  // Predicated region
  $region26: #{ssamc_forward.20} parent=0 // pred_check
    _
  $region27: #{ssamc_forward.20} parent=0 // pred_check_branch
    %239 = sbr.rel (0) target = $region29
  $region28: #{ssamc_forward.20} parent=0 // pred_region
    _
  $region29: #{ssamc_forward.20} parent=0 // pred_fallthru
    _

</llo_original>
